<compile_context>
chip_gen: v7x
topology: tpu7x:2x2x1
jax: 0.10.0
libtpu: 0.0.40
codegen_flags: <defaults>
</compile_context>

<pallas_src>
import math

import jax
import jax.numpy as jnp
from jax.experimental import pallas as pl
from jax.experimental.pallas import tpu as pltpu


def _layernorm(x, gamma, beta, eps=1e-12):
    mu = jnp.mean(x, axis=-1, keepdims=True)
    var = jnp.mean((x - mu) ** 2, axis=-1, keepdims=True)
    return (x - mu) * jax.lax.rsqrt(var + eps) * gamma + beta


def bleurt_encoder_kernel(
    x_ref,                    # (TB, L, H)  f32   concat(ref, cand) embeddings
    wqkv_ref,                 # (H, 3H)     bf16  [wq*scale | wk | wv] fused
    wo_ref,                   # (H, H)      bf16
    ln1_g_ref, ln1_b_ref,     # (1, H)      f32
    w1_ref, b1_ref,           # (H, F) bf16, (1, F) f32
    w2_ref, b2_ref,           # (F, H) bf16, (1, H) f32
    ln2_g_ref, ln2_b_ref,     # (1, H)      f32
    cls_ref,                  # (TB, H)     f32   CLS hidden state (lane-dense)
):
    TB, L, H = x_ref.shape
    x = x_ref[...]                                   # f32
    x2d = x.reshape(TB * L, H)                       # flatten: M = TB*L

    # ---- fused QKV: one wide 2D MXU matmul, bf16 in / f32 accumulate ----
    qkv = jnp.dot(x2d.astype(jnp.bfloat16), wqkv_ref[...],
                  preferred_element_type=jnp.float32)      # (TB*L, 3H)
    q = qkv[:, 0 * H:1 * H].reshape(TB, L, H)   # 1/sqrt(H) folded into wq
    k = qkv[:, 1 * H:2 * H].reshape(TB, L, H)
    v = qkv[:, 2 * H:3 * H].reshape(TB, L, H)

    # ---- single-head self-attention (batched within the batch tile) ----
    s = jnp.einsum('bld,bmd->blm',
                   q.astype(jnp.bfloat16), k.astype(jnp.bfloat16),
                   preferred_element_type=jnp.float32)     # (TB, L, L)
    s = s - jnp.max(s, axis=-1, keepdims=True)             # softmax in f32
    p = jnp.exp(s)
    p = p * pl.reciprocal(jnp.sum(p, axis=-1, keepdims=True), approx=True)
    # TODO(synk): at real BLEURT scale (BERT-base, L up to 512) tile the key
    # axis with an online-softmax (flash) accumulator instead of materializing
    # the full (TB, L, L) score matrix.

    attn = jnp.einsum('blm,bmd->bld',
                      p.astype(jnp.bfloat16), v.astype(jnp.bfloat16),
                      preferred_element_type=jnp.float32)  # (TB, L, H)
    attn2d = jnp.dot(attn.reshape(TB * L, H).astype(jnp.bfloat16), wo_ref[...],
                     preferred_element_type=jnp.float32)   # (TB*L, H)

    # ---- add & norm ----
    h1 = _layernorm(x2d + attn2d, ln1_g_ref[...], ln1_b_ref[...])

    # ---- feed-forward MLP (2D matmuls) ----
    ff = jnp.dot(h1.astype(jnp.bfloat16), w1_ref[...],
                 preferred_element_type=jnp.float32) + b1_ref[...]
    # TODO(synk): real BERT/BLEURT uses exact erf GELU; tanh approx kept here.
    ff = jax.nn.gelu(ff, approximate=True)
    ff = jnp.dot(ff.astype(jnp.bfloat16), w2_ref[...],
                 preferred_element_type=jnp.float32) + b2_ref[...]

    h2 = _layernorm(h1 + ff, ln2_g_ref[...], ln2_b_ref[...])   # (TB*L, H)

    # ---- CLS pooling (token 0 of each example); lane-dense output ----
    cls_ref[...] = h2.reshape(TB, L, H)[:, 0, :]


def make_params(key, vocab, seq, hidden, ffn):
    ks = jax.random.split(key, 12)
    init = lambda k, shape, s: jax.random.normal(k, shape, jnp.float32) * s
    L = 2 * seq
    return {
        'emb':    init(ks[0], (vocab, hidden), 0.02),
        'pos':    init(ks[1], (L, hidden), 0.02),
        'wq':     init(ks[2], (hidden, hidden), 1.0 / math.sqrt(hidden)),
        'wk':     init(ks[3], (hidden, hidden), 1.0 / math.sqrt(hidden)),
        'wv':     init(ks[4], (hidden, hidden), 1.0 / math.sqrt(hidden)),
        'wo':     init(ks[5], (hidden, hidden), 1.0 / math.sqrt(hidden)),
        'ln1_g':  jnp.ones((1, hidden), jnp.float32),
        'ln1_b':  jnp.zeros((1, hidden), jnp.float32),
        'w1':     init(ks[6], (hidden, ffn), 1.0 / math.sqrt(hidden)),
        'b1':     jnp.zeros((1, ffn), jnp.float32),
        'w2':     init(ks[7], (ffn, hidden), 1.0 / math.sqrt(ffn)),
        'b2':     jnp.zeros((1, hidden), jnp.float32),
        'ln2_g':  jnp.ones((1, hidden), jnp.float32),
        'ln2_b':  jnp.zeros((1, hidden), jnp.float32),
        'head_w': init(ks[8], (hidden, 1), 1.0 / math.sqrt(hidden)),
        'head_b': jnp.zeros((1, 1), jnp.float32),
    }


def _resident_spec(arr):
    """Full-extent block that stays VMEM-resident across all grid steps."""
    zeros = (0,) * arr.ndim
    return pl.BlockSpec(arr.shape, lambda b, _z=zeros: _z)


def bleurt_discriminator_forward(target_ids, prediction_ids, params, *, batch_tile=8):
    """Synthetic BLEURT forward: scores (references=target, candidates=prediction).

    target_ids, prediction_ids: (B, S) int32 token ids.
    Returns: (B, 1) float32 scores (matches torch.Tensor(scores).reshape(-1, 1)).
    """
    B, S = target_ids.shape
    H = params['emb'].shape[1]
    L = 2 * S
    scale = 1.0 / math.sqrt(H)

    # Glue (XLA): embedding lookup + positional embedding, concat [ref ; cand].
    ref_emb = jnp.take(params['emb'], target_ids, axis=0)        # (B, S, H)
    cand_emb = jnp.take(params['emb'], prediction_ids, axis=0)   # (B, S, H)
    x = jnp.concatenate([ref_emb, cand_emb], axis=1) + params['pos'][None]  # (B, L, H) f32

    # Fused QKV weight with attention scale folded into the Q block; MXU
    # operands passed in bf16.
    wqkv = jnp.concatenate(
        [params['wq'] * scale, params['wk'], params['wv']], axis=1
    ).astype(jnp.bfloat16)                                       # (H, 3H)
    wo = params['wo'].astype(jnp.bfloat16)
    w1 = params['w1'].astype(jnp.bfloat16)
    w2 = params['w2'].astype(jnp.bfloat16)

    TB = batch_tile if (B % batch_tile == 0 and batch_tile % 8 == 0) else B
    grid = (B // TB,)

    kernel_inputs = (
        x, wqkv, wo,
        params['ln1_g'], params['ln1_b'],
        w1, params['b1'], w2, params['b2'],
        params['ln2_g'], params['ln2_b'],
    )
    in_specs = [
        pl.BlockSpec((TB, L, H), lambda b: (b, 0, 0)),   # batch-tiled activations
        _resident_spec(wqkv), _resident_spec(wo),
        _resident_spec(params['ln1_g']), _resident_spec(params['ln1_b']),
        _resident_spec(w1), _resident_spec(params['b1']),
        _resident_spec(w2), _resident_spec(params['b2']),
        _resident_spec(params['ln2_g']), _resident_spec(params['ln2_b']),
    ]

    cls = pl.pallas_call(
        bleurt_encoder_kernel,
        out_shape=jax.ShapeDtypeStruct((B, H), jnp.float32),
        grid=grid,
        in_specs=in_specs,
        out_specs=pl.BlockSpec((TB, H), lambda b: (b, 0)),
        compiler_params=pltpu.CompilerParams(
            dimension_semantics=("parallel",),
            vmem_limit_bytes=32 << 20,
        ),
    )(*kernel_inputs)

    # Tiny N=1 regression head kept in XLA so the kernel's output stays a
    # lane-dense (B, H) slab instead of a masked 1-lane store.
    scores = cls @ params['head_w'] + params['head_b']           # (B, 1)
    return scores.reshape(-1, 1)


if __name__ == "__main__":
    # Small but lane-aligned config: H, F multiples of 128; B a multiple of the
    # 8-row batch tile so the grid has 2 steps to exercise pipelining.
    B, S, H, F, VOCAB = 16, 8, 128, 512, 64
    key = jax.random.PRNGKey(0)
    k_par, k_tgt, k_pred = jax.random.split(key, 3)

    params = make_params(k_par, VOCAB, S, H, F)
    target = jax.random.randint(k_tgt, (B, S), 0, VOCAB, dtype=jnp.int32)
    prediction = jax.random.randint(k_pred, (B, S), 0, VOCAB, dtype=jnp.int32)

    out = bleurt_discriminator_forward(target, prediction, params)
    jax.block_until_ready(out)
    assert out.shape == (B, 1) and out.dtype == jnp.float32
    assert bool(jnp.all(jnp.isfinite(out)))
    print("KERNEL_OK")
</pallas_src>

<mosaic_0001>
module attributes {stable_mosaic.version = 11 : i64} {
  func.func @bleurt_encoder_kernel(%arg0: i32, %arg1: memref<8x16x128xf32, #tpu.memory_space<vmem>>, %arg2: memref<128x384xbf16, #tpu.memory_space<vmem>>, %arg3: memref<128x128xbf16, #tpu.memory_space<vmem>>, %arg4: memref<1x128xf32, #tpu.memory_space<vmem>>, %arg5: memref<1x128xf32, #tpu.memory_space<vmem>>, %arg6: memref<128x512xbf16, #tpu.memory_space<vmem>>, %arg7: memref<1x512xf32, #tpu.memory_space<vmem>>, %arg8: memref<512x128xbf16, #tpu.memory_space<vmem>>, %arg9: memref<1x128xf32, #tpu.memory_space<vmem>>, %arg10: memref<1x128xf32, #tpu.memory_space<vmem>>, %arg11: memref<1x128xf32, #tpu.memory_space<vmem>>, %arg12: memref<8x128xf32, #tpu.memory_space<vmem>>) attributes {dimension_semantics = [#tpu.dimension_semantics<parallel>], iteration_bounds = array<i64: 2>, scalar_prefetch = 0 : i64, scratch_operands = 0 : i64, tpu.core_type = #tpu.core_type<tc>, window_params = [{transform_indices = @transform_0, window_bounds = array<i64: 8, 16, 128>}, {pipeline_mode = #tpu.pipeline_mode<synchronous>, transform_indices = @transform_1, window_bounds = array<i64: 128, 384>}, {pipeline_mode = #tpu.pipeline_mode<synchronous>, transform_indices = @transform_2, window_bounds = array<i64: 128, 128>}, {pipeline_mode = #tpu.pipeline_mode<synchronous>, transform_indices = @transform_3, window_bounds = array<i64: 1, 128>}, {pipeline_mode = #tpu.pipeline_mode<synchronous>, transform_indices = @transform_4, window_bounds = array<i64: 1, 128>}, {pipeline_mode = #tpu.pipeline_mode<synchronous>, transform_indices = @transform_5, window_bounds = array<i64: 128, 512>}, {pipeline_mode = #tpu.pipeline_mode<synchronous>, transform_indices = @transform_6, window_bounds = array<i64: 1, 512>}, {pipeline_mode = #tpu.pipeline_mode<synchronous>, transform_indices = @transform_7, window_bounds = array<i64: 512, 128>}, {pipeline_mode = #tpu.pipeline_mode<synchronous>, transform_indices = @transform_8, window_bounds = array<i64: 1, 128>}, {pipeline_mode = #tpu.pipeline_mode<synchronous>, transform_indices = @transform_9, window_bounds = array<i64: 1, 128>}, {pipeline_mode = #tpu.pipeline_mode<synchronous>, transform_indices = @transform_10, window_bounds = array<i64: 1, 128>}, {transform_indices = @transform_11, window_bounds = array<i64: 8, 128>}]} {
    %c0 = arith.constant 0 : index
    %c0_0 = arith.constant 0 : index
    %c0_1 = arith.constant 0 : index
    %0 = vector.load %arg1[%c0, %c0_0, %c0_1] : memref<8x16x128xf32, #tpu.memory_space<vmem>>, vector<8x16x128xf32>
    %1 = vector.shape_cast %0 : vector<8x16x128xf32> to vector<128x128xf32>
    %2 = arith.truncf %1 : vector<128x128xf32> to vector<128x128xbf16>
    %c0_2 = arith.constant 0 : index
    %c0_3 = arith.constant 0 : index
    %3 = vector.load %arg2[%c0_2, %c0_3] : memref<128x384xbf16, #tpu.memory_space<vmem>>, vector<128x384xbf16>
    %cst = arith.constant dense<0.000000e+00> : vector<128x384xf32>
    %4 = tpu.matmul %2, %3, %cst {dimension_numbers = #tpu.dot_dimension_numbers<[1], [0], [0], [1], [0, 0, 1, 1], [], []>} : vector<128x128xbf16>, vector<128x384xbf16>, vector<128x384xf32> -> vector<128x384xf32>
    %5 = vector.extract_strided_slice %4 {offsets = [0, 0], sizes = [128, 128], strides = [1, 1]} : vector<128x384xf32> to vector<128x128xf32>
    %6 = vector.shape_cast %5 : vector<128x128xf32> to vector<8x16x128xf32>
    %7 = vector.extract_strided_slice %4 {offsets = [0, 128], sizes = [128, 128], strides = [1, 1]} : vector<128x384xf32> to vector<128x128xf32>
    %8 = vector.shape_cast %7 : vector<128x128xf32> to vector<8x16x128xf32>
    %9 = vector.extract_strided_slice %4 {offsets = [0, 256], sizes = [128, 128], strides = [1, 1]} : vector<128x384xf32> to vector<128x128xf32>
    %10 = vector.shape_cast %9 : vector<128x128xf32> to vector<8x16x128xf32>
    %11 = arith.truncf %6 : vector<8x16x128xf32> to vector<8x16x128xbf16>
    %12 = arith.truncf %8 : vector<8x16x128xf32> to vector<8x16x128xbf16>
    "tpu.trace_start"() <{level = 10 : i32, message = "bld,bmd->blm"}> : () -> ()
    %cst_4 = arith.constant dense<0.000000e+00> : vector<8x16x16xf32>
    %13 = tpu.matmul %11, %12, %cst_4 {dimension_numbers = #tpu.dot_dimension_numbers<[2], [2], [1], [1], [0, 0, 0, 1, 1, 1], [0], [0]>} : vector<8x16x128xbf16>, vector<8x16x128xbf16>, vector<8x16x16xf32> -> vector<8x16x16xf32>
    "tpu.trace_stop"() : () -> ()
    %cst_5 = arith.constant dense<0xFF800000> : vector<8x16xf32>
    %14 = vector.multi_reduction <maximumf>, %13, %cst_5 [2] : vector<8x16x16xf32> to vector<8x16xf32>
    %15 = vector.shape_cast %14 : vector<8x16xf32> to vector<8x16x1xf32>
    %16 = vector.broadcast %15 : vector<8x16x1xf32> to vector<8x16x16xf32>
    %17 = arith.subf %13, %16 : vector<8x16x16xf32>
    %18 = math.exp %17 : vector<8x16x16xf32>
    %cst_6 = arith.constant dense<0.000000e+00> : vector<8x16xf32>
    %19 = vector.multi_reduction <add>, %18, %cst_6 [2] : vector<8x16x16xf32> to vector<8x16xf32>
    %20 = vector.shape_cast %19 : vector<8x16xf32> to vector<8x16x1xf32>
    %21 = tpu.reciprocal %20 {approx = true} : vector<8x16x1xf32> -> vector<8x16x1xf32>
    %22 = vector.broadcast %21 : vector<8x16x1xf32> to vector<8x16x16xf32>
    %23 = arith.mulf %18, %22 : vector<8x16x16xf32>
    %24 = arith.truncf %23 : vector<8x16x16xf32> to vector<8x16x16xbf16>
    %25 = arith.truncf %10 : vector<8x16x128xf32> to vector<8x16x128xbf16>
    "tpu.trace_start"() <{level = 10 : i32, message = "blm,bmd->bld"}> : () -> ()
    %cst_7 = arith.constant dense<0.000000e+00> : vector<8x16x128xf32>
    %26 = tpu.matmul %24, %25, %cst_7 {dimension_numbers = #tpu.dot_dimension_numbers<[2], [1], [1], [2], [0, 0, 0, 1, 1, 2], [0], [0]>} : vector<8x16x16xbf16>, vector<8x16x128xbf16>, vector<8x16x128xf32> -> vector<8x16x128xf32>
    "tpu.trace_stop"() : () -> ()
    %27 = vector.shape_cast %26 : vector<8x16x128xf32> to vector<128x128xf32>
    %28 = arith.truncf %27 : vector<128x128xf32> to vector<128x128xbf16>
    %c0_8 = arith.constant 0 : index
    %c0_9 = arith.constant 0 : index
    %29 = vector.load %arg3[%c0_8, %c0_9] : memref<128x128xbf16, #tpu.memory_space<vmem>>, vector<128x128xbf16>
    %cst_10 = arith.constant dense<0.000000e+00> : vector<128x128xf32>
    %30 = tpu.matmul %28, %29, %cst_10 {dimension_numbers = #tpu.dot_dimension_numbers<[1], [0], [0], [1], [0, 0, 1, 1], [], []>} : vector<128x128xbf16>, vector<128x128xbf16>, vector<128x128xf32> -> vector<128x128xf32>
    %31 = arith.addf %1, %30 : vector<128x128xf32>
    %c0_11 = arith.constant 0 : index
    %c0_12 = arith.constant 0 : index
    %32 = vector.load %arg4[%c0_11, %c0_12] : memref<1x128xf32, #tpu.memory_space<vmem>>, vector<1x128xf32>
    %c0_13 = arith.constant 0 : index
    %c0_14 = arith.constant 0 : index
    %33 = vector.load %arg5[%c0_13, %c0_14] : memref<1x128xf32, #tpu.memory_space<vmem>>, vector<1x128xf32>
    %cst_15 = arith.constant dense<0.000000e+00> : vector<128xf32>
    %34 = vector.multi_reduction <add>, %31, %cst_15 [1] : vector<128x128xf32> to vector<128xf32>
    %35 = vector.shape_cast %34 : vector<128xf32> to vector<128x1xf32>
    %cst_16 = arith.constant 1.280000e+02 : f32
    %36 = vector.broadcast %cst_16 : f32 to vector<128x1xf32>
    %37 = arith.divf %35, %36 : vector<128x1xf32>
    %38 = vector.broadcast %37 : vector<128x1xf32> to vector<128x128xf32>
    %39 = arith.subf %31, %38 : vector<128x128xf32>
    %40 = arith.mulf %39, %39 : vector<128x128xf32>
    %cst_17 = arith.constant dense<0.000000e+00> : vector<128xf32>
    %41 = vector.multi_reduction <add>, %40, %cst_17 [1] : vector<128x128xf32> to vector<128xf32>
    %42 = vector.shape_cast %41 : vector<128xf32> to vector<128x1xf32>
    %cst_18 = arith.constant 1.280000e+02 : f32
    %43 = vector.broadcast %cst_18 : f32 to vector<128x1xf32>
    %44 = arith.divf %42, %43 : vector<128x1xf32>
    %45 = vector.broadcast %37 : vector<128x1xf32> to vector<128x128xf32>
    %46 = arith.subf %31, %45 : vector<128x128xf32>
    %cst_19 = arith.constant 9.99999996E-13 : f32
    %47 = vector.broadcast %cst_19 : f32 to vector<128x1xf32>
    %48 = arith.addf %44, %47 : vector<128x1xf32>
    %49 = math.rsqrt %48 : vector<128x1xf32>
    %50 = vector.broadcast %49 : vector<128x1xf32> to vector<128x128xf32>
    %51 = arith.mulf %46, %50 : vector<128x128xf32>
    %52 = vector.broadcast %32 : vector<1x128xf32> to vector<128x128xf32>
    %53 = arith.mulf %51, %52 : vector<128x128xf32>
    %54 = vector.broadcast %33 : vector<1x128xf32> to vector<128x128xf32>
    %55 = arith.addf %53, %54 : vector<128x128xf32>
    %56 = arith.truncf %55 : vector<128x128xf32> to vector<128x128xbf16>
    %c0_20 = arith.constant 0 : index
    %c0_21 = arith.constant 0 : index
    %57 = vector.load %arg6[%c0_20, %c0_21] : memref<128x512xbf16, #tpu.memory_space<vmem>>, vector<128x512xbf16>
    %cst_22 = arith.constant dense<0.000000e+00> : vector<128x512xf32>
    %58 = tpu.matmul %56, %57, %cst_22 {dimension_numbers = #tpu.dot_dimension_numbers<[1], [0], [0], [1], [0, 0, 1, 1], [], []>} : vector<128x128xbf16>, vector<128x512xbf16>, vector<128x512xf32> -> vector<128x512xf32>
    %c0_23 = arith.constant 0 : index
    %c0_24 = arith.constant 0 : index
    %59 = vector.load %arg7[%c0_23, %c0_24] : memref<1x512xf32, #tpu.memory_space<vmem>>, vector<1x512xf32>
    %60 = vector.broadcast %59 : vector<1x512xf32> to vector<128x512xf32>
    %61 = arith.addf %58, %60 : vector<128x512xf32>
    %62 = arith.mulf %61, %61 : vector<128x512xf32>
    %63 = arith.mulf %61, %62 : vector<128x512xf32>
    %cst_25 = arith.constant 4.471500e-02 : f32
    %64 = vector.broadcast %cst_25 : f32 to vector<128x512xf32>
    %65 = arith.mulf %64, %63 : vector<128x512xf32>
    %66 = arith.addf %61, %65 : vector<128x512xf32>
    %cst_26 = arith.constant 0.797884583 : f32
    %67 = vector.broadcast %cst_26 : f32 to vector<128x512xf32>
    %68 = arith.mulf %67, %66 : vector<128x512xf32>
    %69 = math.tanh %68 : vector<128x512xf32>
    %cst_27 = arith.constant 1.000000e+00 : f32
    %70 = vector.broadcast %cst_27 : f32 to vector<128x512xf32>
    %71 = arith.addf %70, %69 : vector<128x512xf32>
    %cst_28 = arith.constant 5.000000e-01 : f32
    %72 = vector.broadcast %cst_28 : f32 to vector<128x512xf32>
    %73 = arith.mulf %72, %71 : vector<128x512xf32>
    %74 = arith.mulf %61, %73 : vector<128x512xf32>
    %75 = arith.truncf %74 : vector<128x512xf32> to vector<128x512xbf16>
    %c0_29 = arith.constant 0 : index
    %c0_30 = arith.constant 0 : index
    %76 = vector.load %arg8[%c0_29, %c0_30] : memref<512x128xbf16, #tpu.memory_space<vmem>>, vector<512x128xbf16>
    %cst_31 = arith.constant dense<0.000000e+00> : vector<128x128xf32>
    %77 = tpu.matmul %75, %76, %cst_31 {dimension_numbers = #tpu.dot_dimension_numbers<[1], [0], [0], [1], [0, 0, 1, 1], [], []>} : vector<128x512xbf16>, vector<512x128xbf16>, vector<128x128xf32> -> vector<128x128xf32>
    %c0_32 = arith.constant 0 : index
    %c0_33 = arith.constant 0 : index
    %78 = vector.load %arg9[%c0_32, %c0_33] : memref<1x128xf32, #tpu.memory_space<vmem>>, vector<1x128xf32>
    %79 = vector.broadcast %78 : vector<1x128xf32> to vector<128x128xf32>
    %80 = arith.addf %77, %79 : vector<128x128xf32>
    %81 = arith.addf %55, %80 : vector<128x128xf32>
    %c0_34 = arith.constant 0 : index
    %c0_35 = arith.constant 0 : index
    %82 = vector.load %arg10[%c0_34, %c0_35] : memref<1x128xf32, #tpu.memory_space<vmem>>, vector<1x128xf32>
    %c0_36 = arith.constant 0 : index
    %c0_37 = arith.constant 0 : index
    %83 = vector.load %arg11[%c0_36, %c0_37] : memref<1x128xf32, #tpu.memory_space<vmem>>, vector<1x128xf32>
    %cst_38 = arith.constant dense<0.000000e+00> : vector<128xf32>
    %84 = vector.multi_reduction <add>, %81, %cst_38 [1] : vector<128x128xf32> to vector<128xf32>
    %85 = vector.shape_cast %84 : vector<128xf32> to vector<128x1xf32>
    %cst_39 = arith.constant 1.280000e+02 : f32
    %86 = vector.broadcast %cst_39 : f32 to vector<128x1xf32>
    %87 = arith.divf %85, %86 : vector<128x1xf32>
    %88 = vector.broadcast %87 : vector<128x1xf32> to vector<128x128xf32>
    %89 = arith.subf %81, %88 : vector<128x128xf32>
    %90 = arith.mulf %89, %89 : vector<128x128xf32>
    %cst_40 = arith.constant dense<0.000000e+00> : vector<128xf32>
    %91 = vector.multi_reduction <add>, %90, %cst_40 [1] : vector<128x128xf32> to vector<128xf32>
    %92 = vector.shape_cast %91 : vector<128xf32> to vector<128x1xf32>
    %cst_41 = arith.constant 1.280000e+02 : f32
    %93 = vector.broadcast %cst_41 : f32 to vector<128x1xf32>
    %94 = arith.divf %92, %93 : vector<128x1xf32>
    %95 = vector.broadcast %87 : vector<128x1xf32> to vector<128x128xf32>
    %96 = arith.subf %81, %95 : vector<128x128xf32>
    %cst_42 = arith.constant 9.99999996E-13 : f32
    %97 = vector.broadcast %cst_42 : f32 to vector<128x1xf32>
    %98 = arith.addf %94, %97 : vector<128x1xf32>
    %99 = math.rsqrt %98 : vector<128x1xf32>
    %100 = vector.broadcast %99 : vector<128x1xf32> to vector<128x128xf32>
    %101 = arith.mulf %96, %100 : vector<128x128xf32>
    %102 = vector.broadcast %82 : vector<1x128xf32> to vector<128x128xf32>
    %103 = arith.mulf %101, %102 : vector<128x128xf32>
    %104 = vector.broadcast %83 : vector<1x128xf32> to vector<128x128xf32>
    %105 = arith.addf %103, %104 : vector<128x128xf32>
    %106 = vector.shape_cast %105 : vector<128x128xf32> to vector<8x16x128xf32>
    %107 = vector.extract_strided_slice %106 {offsets = [0, 0, 0], sizes = [8, 1, 128], strides = [1, 1, 1]} : vector<8x16x128xf32> to vector<8x1x128xf32>
    %108 = vector.shape_cast %107 : vector<8x1x128xf32> to vector<8x128xf32>
    %c0_43 = arith.constant 0 : index
    %c0_44 = arith.constant 0 : index
    %109 = vector.load %arg12[%c0_43, %c0_44] : memref<8x128xf32, #tpu.memory_space<vmem>>, vector<8x128xf32>
    tpu.vector_store %arg12[%c0_43, %c0_44], %108 {strides = array<i32>} : memref<8x128xf32, #tpu.memory_space<vmem>>, vector<8x128xf32>,
    return
  }
  func.func @transform_0(%arg0: i32) -> (i32, i32, i32) {
    %c0_i32 = arith.constant 0 : i32
    %c0_i32_0 = arith.constant 0 : i32
    %c0_i32_1 = arith.constant 0 : i32
    return %arg0, %c0_i32, %c0_i32_0 : i32, i32, i32
  }
  func.func @transform_1(%arg0: i32) -> (i32, i32) {
    %c0_i32 = arith.constant 0 : i32
    %c0_i32_0 = arith.constant 0 : i32
    %c0_i32_1 = arith.constant 0 : i32
    return %c0_i32, %c0_i32_0 : i32, i32
  }
  func.func @transform_2(%arg0: i32) -> (i32, i32) {
    %c0_i32 = arith.constant 0 : i32
    %c0_i32_0 = arith.constant 0 : i32
    %c0_i32_1 = arith.constant 0 : i32
    return %c0_i32, %c0_i32_0 : i32, i32
  }
  func.func @transform_3(%arg0: i32) -> (i32, i32) {
    %c0_i32 = arith.constant 0 : i32
    %c0_i32_0 = arith.constant 0 : i32
    %c0_i32_1 = arith.constant 0 : i32
    return %c0_i32, %c0_i32_0 : i32, i32
  }
  func.func @transform_4(%arg0: i32) -> (i32, i32) {
    %c0_i32 = arith.constant 0 : i32
    %c0_i32_0 = arith.constant 0 : i32
    %c0_i32_1 = arith.constant 0 : i32
    return %c0_i32, %c0_i32_0 : i32, i32
  }
  func.func @transform_5(%arg0: i32) -> (i32, i32) {
    %c0_i32 = arith.constant 0 : i32
    %c0_i32_0 = arith.constant 0 : i32
    %c0_i32_1 = arith.constant 0 : i32
    return %c0_i32, %c0_i32_0 : i32, i32
  }
  func.func @transform_6(%arg0: i32) -> (i32, i32) {
    %c0_i32 = arith.constant 0 : i32
    %c0_i32_0 = arith.constant 0 : i32
    %c0_i32_1 = arith.constant 0 : i32
    return %c0_i32, %c0_i32_0 : i32, i32
  }
  func.func @transform_7(%arg0: i32) -> (i32, i32) {
    %c0_i32 = arith.constant 0 : i32
    %c0_i32_0 = arith.constant 0 : i32
    %c0_i32_1 = arith.constant 0 : i32
    return %c0_i32, %c0_i32_0 : i32, i32
  }
  func.func @transform_8(%arg0: i32) -> (i32, i32) {
    %c0_i32 = arith.constant 0 : i32
    %c0_i32_0 = arith.constant 0 : i32
    %c0_i32_1 = arith.constant 0 : i32
    return %c0_i32, %c0_i32_0 : i32, i32
  }
  func.func @transform_9(%arg0: i32) -> (i32, i32) {
    %c0_i32 = arith.constant 0 : i32
    %c0_i32_0 = arith.constant 0 : i32
    %c0_i32_1 = arith.constant 0 : i32
    return %c0_i32, %c0_i32_0 : i32, i32
  }
  func.func @transform_10(%arg0: i32) -> (i32, i32) {
    %c0_i32 = arith.constant 0 : i32
    %c0_i32_0 = arith.constant 0 : i32
    %c0_i32_1 = arith.constant 0 : i32
    return %c0_i32, %c0_i32_0 : i32, i32
  }
  func.func @transform_11(%arg0: i32) -> (i32, i32) {
    %c0_i32 = arith.constant 0 : i32
    %c0_i32_0 = arith.constant 0 : i32
    return %arg0, %c0_i32 : i32, i32
  }
}

</mosaic_0001>

<llo_original>
// kernel: tpu_custom_call.1
$region0: #{tpu_custom_call.1}
  #allocation0 [shape = 'u32[]', space=smem, size = 0x4, offset = 0x4, fixed_abs, tag = 'smem constant byte address 0x4 - core index']
  #allocation1 [shape = 'u32[144,128]{1,0:T(1,128)}', space=vmem, size = 0x12000, scoped, tag = 'internal scratch']
  %s0 = inlined_call_operand.hbm [shape: f32[16,16,128], index: 0, kind: input, shape index: {}]
  %s1 = inlined_call_operand.hbm [shape: bf16[128,384], index: 1, kind: input, shape index: {}]
  %s2 = inlined_call_operand.hbm [shape: bf16[128,128], index: 2, kind: input, shape index: {}]
  %s3 = inlined_call_operand.vmem [shape: f32[1,128], index: 3, kind: input, shape index: {}]
  %s4 = inlined_call_operand.vmem [shape: f32[1,128], index: 4, kind: input, shape index: {}]
  %s5 = inlined_call_operand.hbm [shape: bf16[128,512], index: 5, kind: input, shape index: {}]
  %s6 = inlined_call_operand.vmem [shape: f32[1,512], index: 6, kind: input, shape index: {}]
  %s7 = inlined_call_operand.hbm [shape: bf16[512,128], index: 7, kind: input, shape index: {}]
  %s8 = inlined_call_operand.vmem [shape: f32[1,128], index: 8, kind: input, shape index: {}]
  %s9 = inlined_call_operand.vmem [shape: f32[1,128], index: 9, kind: input, shape index: {}]
  %s10 = inlined_call_operand.vmem [shape: f32[1,128], index: 10, kind: input, shape index: {}]
  %s11 = inlined_call_operand.hbm [shape: f32[16,128], index: 11, kind: output, shape index: {}]
  %s12 = sld [smem:[#allocation0]]
  $region97: #{tpu_custom_call.1} parent=0
    _
  %s14 = ssub.s32 1, %s12
  %s15 = scalar_select 0, %s14, %s12
  $region1: #{tpu_custom_call.1} parent=0
    #allocation2 [shape = 'u8[131072]{0}', space=vmem, size = 0x20000, scoped, tag = 'input window, operand 0']
    #allocation3 [shape = 's32[2]{0}', space=sflag, size = 0x8, scoped, tag = 'scoped memory for tpu_custom_call.1']
    #allocation4 [shape = 's32[2]{0}', space=sflag, size = 0x8, scoped, tag = 'scoped memory for tpu_custom_call.1']
    #allocation5 [shape = 'u8[98304]{0}', space=vmem, size = 0x18000, scoped, tag = 'input window, operand 1, single buffered']
    #allocation6 [shape = 's32[1]{0}', space=sflag, size = 0x4, scoped, tag = 'scoped memory for tpu_custom_call.1']
    #allocation7 [shape = 'u8[32768]{0}', space=vmem, size = 0x8000, scoped, tag = 'input window, operand 2, single buffered']
    #allocation8 [shape = 'u8[131072]{0}', space=vmem, size = 0x20000, scoped, tag = 'input window, operand 5, single buffered']
    #allocation9 [shape = 's32[1]{0}', space=sflag, size = 0x4, scoped, tag = 'scoped memory for tpu_custom_call.1']
    #allocation10 [shape = 'u8[131072]{0}', space=vmem, size = 0x20000, scoped, tag = 'input window, operand 7, single buffered']
    #allocation11 [shape = 'u8[8192]{0}', space=vmem, size = 0x2000, scoped, tag = 'output window, operand 0']
    %16 = vsyncpa [#allocation3], 0
    %s17 = scalar_lea.sflag [#allocation3], 1
    %18 = vsyncpa %s17, 0
    %19 = vsyncpa [#allocation6], 0
    %20 = vsyncpa [#allocation9], 0
    %21 = vsyncpa [#allocation4], 0
    %s22 = scalar_lea.sflag [#allocation4], 1
    %23 = vsyncpa %s22, 0
    loop: start=0, step=1, limit=4
    $region2: #{tpu_custom_call.1} parent=1 // loop_pre_header
      _
    $region3: #{tpu_custom_call.1} parent=1 // loop_header
      %s25 = sphi 0, %s29
      %p26 = scmp.ge.s32.totalorder %s25, 4
      %s35 = sphi 0, %s37
      %s38 = sphi 0, %s35
      %s39 = sphi 0, %s38
      %s55 = sphi 0, %s39
      %s59 = sphi 0, %s59
      %s61 = sphi 0, %s59
      %s62 = sphi 0, %s61
      %s76 = sphi 0, %s62
      %s80 = sphi 0, %s80
      %s82 = sphi 0, %s80
      %s83 = sphi 0, %s82
      %s97 = sphi 0, %s83
      %s101 = sphi 0, %s101
      %s103 = sphi 0, %s101
      %s104 = sphi 0, %s103
      %s118 = sphi 0, %s104
      %s122 = sphi 0, %s122
      %s124 = sphi 0, %s122
      %s125 = sphi 0, %s124
      %s139 = sphi 0, %s125
      %s143 = sphi 0, %s143
      %s145 = sphi 0, %s143
      %s146 = sphi 0, %s145
      %s160 = sphi 0, %s146
      %s164 = sphi 0, %s164
      %s166 = sphi 0, %s164
      %s167 = sphi 0, %s166
      %s181 = sphi 0, %s167
      %s185 = sphi 0, %s185
      %s187 = sphi 0, %s185
      %s188 = sphi 0, %s187
      %s202 = sphi 0, %s188
      %s206 = sphi 0, %s206
      %s208 = sphi 0, %s206
      %s209 = sphi 0, %s208
      %s223 = sphi 0, %s209
      %s227 = sphi 0, %s227
      %s229 = sphi 0, %s227
      %s230 = sphi 0, %s229
      %s244 = sphi 0, %s230
      %s248 = sphi 0, %s248
      %s250 = sphi 0, %s248
      %s251 = sphi 0, %s250
      %s265 = sphi 0, %s251
      %s271 = sphi 0, %s273
      %s274 = sphi 0, %s271
      %s275 = sphi 0, %s274
      %s291 = sphi 0, %s275
    $region4: #{tpu_custom_call.1} parent=1 // loop_header_branch
      %28 = sbr.rel (%p26) target = $region8
    $region5: #{tpu_custom_call.1} parent=1 // loop_body
      %s30 = ssub.s32 %s25, 1
      %s31 = ssub.s32 %s25, 2
      %s32 = sadd.s32 %s25, 1
      %s33 = ssub.s32 %s25, %s32
      %p34 = scmp.eq.s32.totalorder %s33, 0
      %s36 = sadd.s32 %s35, 1
      %s37 = scalar_select %p34, %s35, %s36
      %p40 = pneg %p34
      %p41 = scmp.eq.s32.totalorder %s25, 1
      %p42 = por %p40, %p41
      %p43 = scmp.ne.s32.totalorder %s35, %s38
      %p44 = scmp.eq.s32.totalorder %s25, 0
      %p45 = por %p43, %p44
      %p46 = scmp.ne.s32.totalorder %s35, %s38
      %p47 = scmp.eq.s32.totalorder %s30, 1
      %p48 = por %p46, %p47
      %p49 = scmp.ne.s32.totalorder %s38, %s39
      %p50 = scmp.eq.s32.totalorder %s30, 0
      %p51 = por %p49, %p50
      %p52 = scmp.ne.s32.totalorder %s38, %s39
      %p53 = scmp.eq.s32.totalorder %s31, 1
      %p54 = por %p52, %p53
      %p56 = scmp.ne.s32.totalorder %s39, %s55
      %p57 = scmp.eq.s32.totalorder %s31, 0
      %p58 = por %p56, %p57
      %s60 = sadd.s32 %s59, 1
      %p63 = scmp.eq.s32.totalorder %s25, 1
      %p64 = scmp.ne.s32.totalorder %s59, %s61
      %p65 = scmp.eq.s32.totalorder %s25, 0
      %p66 = por %p64, %p65
      %p67 = scmp.ne.s32.totalorder %s59, %s61
      %p68 = scmp.eq.s32.totalorder %s30, 1
      %p69 = por %p67, %p68
      %p70 = scmp.ne.s32.totalorder %s61, %s62
      %p71 = scmp.eq.s32.totalorder %s30, 0
      %p72 = por %p70, %p71
      %p73 = scmp.ne.s32.totalorder %s61, %s62
      %p74 = scmp.eq.s32.totalorder %s31, 1
      %p75 = por %p73, %p74
      %p77 = scmp.ne.s32.totalorder %s62, %s76
      %p78 = scmp.eq.s32.totalorder %s31, 0
      %p79 = por %p77, %p78
      %s81 = sadd.s32 %s80, 1
      %p84 = scmp.eq.s32.totalorder %s25, 1
      %p85 = scmp.ne.s32.totalorder %s80, %s82
      %p86 = scmp.eq.s32.totalorder %s25, 0
      %p87 = por %p85, %p86
      %p88 = scmp.ne.s32.totalorder %s80, %s82
      %p89 = scmp.eq.s32.totalorder %s30, 1
      %p90 = por %p88, %p89
      %p91 = scmp.ne.s32.totalorder %s82, %s83
      %p92 = scmp.eq.s32.totalorder %s30, 0
      %p93 = por %p91, %p92
      %p94 = scmp.ne.s32.totalorder %s82, %s83
      %p95 = scmp.eq.s32.totalorder %s31, 1
      %p96 = por %p94, %p95
      %p98 = scmp.ne.s32.totalorder %s83, %s97
      %p99 = scmp.eq.s32.totalorder %s31, 0
      %p100 = por %p98, %p99
      %s102 = sadd.s32 %s101, 1
      %p105 = scmp.eq.s32.totalorder %s25, 1
      %p106 = scmp.ne.s32.totalorder %s101, %s103
      %p107 = scmp.eq.s32.totalorder %s25, 0
      %p108 = por %p106, %p107
      %p109 = scmp.ne.s32.totalorder %s101, %s103
      %p110 = scmp.eq.s32.totalorder %s30, 1
      %p111 = por %p109, %p110
      %p112 = scmp.ne.s32.totalorder %s103, %s104
      %p113 = scmp.eq.s32.totalorder %s30, 0
      %p114 = por %p112, %p113
      %p115 = scmp.ne.s32.totalorder %s103, %s104
      %p116 = scmp.eq.s32.totalorder %s31, 1
      %p117 = por %p115, %p116
      %p119 = scmp.ne.s32.totalorder %s104, %s118
      %p120 = scmp.eq.s32.totalorder %s31, 0
      %p121 = por %p119, %p120
      %s123 = sadd.s32 %s122, 1
      %p126 = scmp.eq.s32.totalorder %s25, 1
      %p127 = scmp.ne.s32.totalorder %s122, %s124
      %p128 = scmp.eq.s32.totalorder %s25, 0
      %p129 = por %p127, %p128
      %p130 = scmp.ne.s32.totalorder %s122, %s124
      %p131 = scmp.eq.s32.totalorder %s30, 1
      %p132 = por %p130, %p131
      %p133 = scmp.ne.s32.totalorder %s124, %s125
      %p134 = scmp.eq.s32.totalorder %s30, 0
      %p135 = por %p133, %p134
      %p136 = scmp.ne.s32.totalorder %s124, %s125
      %p137 = scmp.eq.s32.totalorder %s31, 1
      %p138 = por %p136, %p137
      %p140 = scmp.ne.s32.totalorder %s125, %s139
      %p141 = scmp.eq.s32.totalorder %s31, 0
      %p142 = por %p140, %p141
      %s144 = sadd.s32 %s143, 1
      %p147 = scmp.eq.s32.totalorder %s25, 1
      %p148 = scmp.ne.s32.totalorder %s143, %s145
      %p149 = scmp.eq.s32.totalorder %s25, 0
      %p150 = por %p148, %p149
      %p151 = scmp.ne.s32.totalorder %s143, %s145
      %p152 = scmp.eq.s32.totalorder %s30, 1
      %p153 = por %p151, %p152
      %p154 = scmp.ne.s32.totalorder %s145, %s146
      %p155 = scmp.eq.s32.totalorder %s30, 0
      %p156 = por %p154, %p155
      %p157 = scmp.ne.s32.totalorder %s145, %s146
      %p158 = scmp.eq.s32.totalorder %s31, 1
      %p159 = por %p157, %p158
      %p161 = scmp.ne.s32.totalorder %s146, %s160
      %p162 = scmp.eq.s32.totalorder %s31, 0
      %p163 = por %p161, %p162
      %s165 = sadd.s32 %s164, 1
      %p168 = scmp.eq.s32.totalorder %s25, 1
      %p169 = scmp.ne.s32.totalorder %s164, %s166
      %p170 = scmp.eq.s32.totalorder %s25, 0
      %p171 = por %p169, %p170
      %p172 = scmp.ne.s32.totalorder %s164, %s166
      %p173 = scmp.eq.s32.totalorder %s30, 1
      %p174 = por %p172, %p173
      %p175 = scmp.ne.s32.totalorder %s166, %s167
      %p176 = scmp.eq.s32.totalorder %s30, 0
      %p177 = por %p175, %p176
      %p178 = scmp.ne.s32.totalorder %s166, %s167
      %p179 = scmp.eq.s32.totalorder %s31, 1
      %p180 = por %p178, %p179
      %p182 = scmp.ne.s32.totalorder %s167, %s181
      %p183 = scmp.eq.s32.totalorder %s31, 0
      %p184 = por %p182, %p183
      %s186 = sadd.s32 %s185, 1
      %p189 = scmp.eq.s32.totalorder %s25, 1
      %p190 = scmp.ne.s32.totalorder %s185, %s187
      %p191 = scmp.eq.s32.totalorder %s25, 0
      %p192 = por %p190, %p191
      %p193 = scmp.ne.s32.totalorder %s185, %s187
      %p194 = scmp.eq.s32.totalorder %s30, 1
      %p195 = por %p193, %p194
      %p196 = scmp.ne.s32.totalorder %s187, %s188
      %p197 = scmp.eq.s32.totalorder %s30, 0
      %p198 = por %p196, %p197
      %p199 = scmp.ne.s32.totalorder %s187, %s188
      %p200 = scmp.eq.s32.totalorder %s31, 1
      %p201 = por %p199, %p200
      %p203 = scmp.ne.s32.totalorder %s188, %s202
      %p204 = scmp.eq.s32.totalorder %s31, 0
      %p205 = por %p203, %p204
      %s207 = sadd.s32 %s206, 1
      %p210 = scmp.eq.s32.totalorder %s25, 1
      %p211 = scmp.ne.s32.totalorder %s206, %s208
      %p212 = scmp.eq.s32.totalorder %s25, 0
      %p213 = por %p211, %p212
      %p214 = scmp.ne.s32.totalorder %s206, %s208
      %p215 = scmp.eq.s32.totalorder %s30, 1
      %p216 = por %p214, %p215
      %p217 = scmp.ne.s32.totalorder %s208, %s209
      %p218 = scmp.eq.s32.totalorder %s30, 0
      %p219 = por %p217, %p218
      %p220 = scmp.ne.s32.totalorder %s208, %s209
      %p221 = scmp.eq.s32.totalorder %s31, 1
      %p222 = por %p220, %p221
      %p224 = scmp.ne.s32.totalorder %s209, %s223
      %p225 = scmp.eq.s32.totalorder %s31, 0
      %p226 = por %p224, %p225
      %s228 = sadd.s32 %s227, 1
      %p231 = scmp.eq.s32.totalorder %s25, 1
      %p232 = scmp.ne.s32.totalorder %s227, %s229
      %p233 = scmp.eq.s32.totalorder %s25, 0
      %p234 = por %p232, %p233
      %p235 = scmp.ne.s32.totalorder %s227, %s229
      %p236 = scmp.eq.s32.totalorder %s30, 1
      %p237 = por %p235, %p236
      %p238 = scmp.ne.s32.totalorder %s229, %s230
      %p239 = scmp.eq.s32.totalorder %s30, 0
      %p240 = por %p238, %p239
      %p241 = scmp.ne.s32.totalorder %s229, %s230
      %p242 = scmp.eq.s32.totalorder %s31, 1
      %p243 = por %p241, %p242
      %p245 = scmp.ne.s32.totalorder %s230, %s244
      %p246 = scmp.eq.s32.totalorder %s31, 0
      %p247 = por %p245, %p246
      %s249 = sadd.s32 %s248, 1
      %p252 = scmp.eq.s32.totalorder %s25, 1
      %p253 = scmp.ne.s32.totalorder %s248, %s250
      %p254 = scmp.eq.s32.totalorder %s25, 0
      %p255 = por %p253, %p254
      %p256 = scmp.ne.s32.totalorder %s248, %s250
      %p257 = scmp.eq.s32.totalorder %s30, 1
      %p258 = por %p256, %p257
      %p259 = scmp.ne.s32.totalorder %s250, %s251
      %p260 = scmp.eq.s32.totalorder %s30, 0
      %p261 = por %p259, %p260
      %p262 = scmp.ne.s32.totalorder %s250, %s251
      %p263 = scmp.eq.s32.totalorder %s31, 1
      %p264 = por %p262, %p263
      %p266 = scmp.ne.s32.totalorder %s251, %s265
      %p267 = scmp.eq.s32.totalorder %s31, 0
      %p268 = por %p266, %p267
      %s269 = ssub.s32 %s25, %s32
      %p270 = scmp.eq.s32.totalorder %s269, 0
      %s272 = sadd.s32 %s271, 1
      %s273 = scalar_select %p270, %s271, %s272
      %p276 = pneg %p270
      %p277 = scmp.eq.s32.totalorder %s25, 1
      %p278 = por %p276, %p277
      %p279 = scmp.ne.s32.totalorder %s271, %s274
      %p280 = scmp.eq.s32.totalorder %s25, 0
      %p281 = por %p279, %p280
      %p282 = scmp.ne.s32.totalorder %s271, %s274
      %p283 = scmp.eq.s32.totalorder %s30, 1
      %p284 = por %p282, %p283
      %p285 = scmp.ne.s32.totalorder %s274, %s275
      %p286 = scmp.eq.s32.totalorder %s30, 0
      %p287 = por %p285, %p286
      %p288 = scmp.ne.s32.totalorder %s274, %s275
      %p289 = scmp.eq.s32.totalorder %s31, 1
      %p290 = por %p288, %p289
      %p292 = scmp.ne.s32.totalorder %s275, %s291
      %p293 = scmp.eq.s32.totalorder %s31, 0
      %p294 = por %p292, %p293
      %p295 = scmp.le.s32.totalorder 1, %s25
      %p296 = scmp.lt.s32.totalorder %s25, 3
      %p297 = pnand %p295, %p296
      %p298 = pneg %p297
      // Predicated region
      $region9: #{tpu_custom_call.1} parent=5 // pred_check
        _
      $region10: #{tpu_custom_call.1} parent=5 // pred_check_branch
        %300 = sbr.rel (%p297) target = $region12
      $region11: #{tpu_custom_call.1} parent=5 // pred_region
        %s301 = ssub.s32 %s25, 1
        // Predicated region
        $region13: #{tpu_custom_call.1} parent=11 // pred_check
          %p302 = pneg %p72
        $region14: #{tpu_custom_call.1} parent=11 // pred_check_branch
          %304 = sbr.rel (%p302) target = $region16
        $region15: #{tpu_custom_call.1} parent=11 // pred_region
          %s306 = ssub.s32 3072, 3072
          %307 = vsyncadd [#allocation6], %s306
          %s308 = sshll.u32 [#allocation5], 4
          %s309 = int_to_ptr.vmem [resolvable:$true] %s308
          %314 = dma.hbm_to_vmem [thread:$0]  %s1, 3072, %s309, [#allocation6], 192, 192, 12
        $region16: #{tpu_custom_call.1} parent=11 // pred_fallthru
          _
        // Predicated region
        $region17: #{tpu_custom_call.1} parent=11 // pred_check
          %p315 = pneg %p93
        $region18: #{tpu_custom_call.1} parent=11 // pred_check_branch
          %317 = sbr.rel (%p315) target = $region20
        $region19: #{tpu_custom_call.1} parent=11 // pred_region
          %s319 = ssub.s32 1024, 1024
          %320 = vsyncadd [#allocation6], %s319
          %s321 = sshll.u32 [#allocation7], 4
          %s322 = int_to_ptr.vmem [resolvable:$true] %s321
          %327 = dma.hbm_to_vmem [thread:$0]  %s2, 1024, %s322, [#allocation6], 64, 64, 4
        $region20: #{tpu_custom_call.1} parent=11 // pred_fallthru
          _
        // Predicated region
        $region21: #{tpu_custom_call.1} parent=11 // pred_check
          %p328 = pneg %p114
        $region22: #{tpu_custom_call.1} parent=11 // pred_check_branch
          %330 = sbr.rel (%p328) target = $region24
        $region23: #{tpu_custom_call.1} parent=11 // pred_region
          _
        $region24: #{tpu_custom_call.1} parent=11 // pred_fallthru
          _
        // Predicated region
        $region25: #{tpu_custom_call.1} parent=11 // pred_check
          %p331 = pneg %p135
        $region26: #{tpu_custom_call.1} parent=11 // pred_check_branch
          %333 = sbr.rel (%p331) target = $region28
        $region27: #{tpu_custom_call.1} parent=11 // pred_region
          _
        $region28: #{tpu_custom_call.1} parent=11 // pred_fallthru
          _
        // Predicated region
        $region29: #{tpu_custom_call.1} parent=11 // pred_check
          %p334 = pneg %p156
        $region30: #{tpu_custom_call.1} parent=11 // pred_check_branch
          %336 = sbr.rel (%p334) target = $region32
        $region31: #{tpu_custom_call.1} parent=11 // pred_region
          %s338 = ssub.s32 4096, 4096
          %339 = vsyncadd [#allocation9], %s338
          %s340 = sshll.u32 [#allocation8], 4
          %s341 = int_to_ptr.vmem [resolvable:$true] %s340
          %346 = dma.hbm_to_vmem [thread:$0]  %s5, 4096, %s341, [#allocation9], 256, 256, 16
        $region32: #{tpu_custom_call.1} parent=11 // pred_fallthru
          _
        // Predicated region
        $region33: #{tpu_custom_call.1} parent=11 // pred_check
          %p347 = pneg %p177
        $region34: #{tpu_custom_call.1} parent=11 // pred_check_branch
          %349 = sbr.rel (%p347) target = $region36
        $region35: #{tpu_custom_call.1} parent=11 // pred_region
          _
        $region36: #{tpu_custom_call.1} parent=11 // pred_fallthru
          _
        // Predicated region
        $region37: #{tpu_custom_call.1} parent=11 // pred_check
          %p350 = pneg %p198
        $region38: #{tpu_custom_call.1} parent=11 // pred_check_branch
          %352 = sbr.rel (%p350) target = $region40
        $region39: #{tpu_custom_call.1} parent=11 // pred_region
          %s354 = ssub.s32 4096, 4096
          %355 = vsyncadd [#allocation9], %s354
          %s356 = sshll.u32 [#allocation10], 4
          %s357 = int_to_ptr.vmem [resolvable:$true] %s356
          %362 = dma.hbm_to_vmem [thread:$0]  %s7, 4096, %s357, [#allocation9], 64, 64, 4
        $region40: #{tpu_custom_call.1} parent=11 // pred_fallthru
          _
        // Predicated region
        $region41: #{tpu_custom_call.1} parent=11 // pred_check
          %p363 = pneg %p219
        $region42: #{tpu_custom_call.1} parent=11 // pred_check_branch
          %365 = sbr.rel (%p363) target = $region44
        $region43: #{tpu_custom_call.1} parent=11 // pred_region
          _
        $region44: #{tpu_custom_call.1} parent=11 // pred_fallthru
          _
        // Predicated region
        $region45: #{tpu_custom_call.1} parent=11 // pred_check
          %p366 = pneg %p240
        $region46: #{tpu_custom_call.1} parent=11 // pred_check_branch
          %368 = sbr.rel (%p366) target = $region48
        $region47: #{tpu_custom_call.1} parent=11 // pred_region
          _
        $region48: #{tpu_custom_call.1} parent=11 // pred_fallthru
          _
        // Predicated region
        $region49: #{tpu_custom_call.1} parent=11 // pred_check
          %p369 = pneg %p261
        $region50: #{tpu_custom_call.1} parent=11 // pred_check_branch
          %371 = sbr.rel (%p369) target = $region52
        $region51: #{tpu_custom_call.1} parent=11 // pred_region
          _
        $region52: #{tpu_custom_call.1} parent=11 // pred_fallthru
          _
      $region12: #{tpu_custom_call.1} parent=5 // pred_fallthru
        _
      %p372 = scmp.lt.s32.totalorder %s25, 2
      // Predicated region
      $region53: #{tpu_custom_call.1} parent=5 // pred_check
        %p373 = pneg %p372
      $region54: #{tpu_custom_call.1} parent=5 // pred_check_branch
        %375 = sbr.rel (%p373) target = $region56
      $region55: #{tpu_custom_call.1} parent=5 // pred_region
        // Predicated region
        $region57: #{tpu_custom_call.1} parent=55 // pred_check
          %p376 = pneg %p45
        $region58: #{tpu_custom_call.1} parent=55 // pred_check_branch
          %378 = sbr.rel (%p376) target = $region60
        $region59: #{tpu_custom_call.1} parent=55 // pred_region
          %s379 = sand.u32 %s35, 1
          %s380 = scalar_lea.sflag [#allocation3], %s379
          %s381 = sand.u32 %s35, 1
          %s382 = smul.addr %s381, 128
          %s383 = scalar_lea.vmem [#allocation2], %s382
          %s384 = smul.u32 8, %s25
          %s386 = ssub.s32 2048, 2048
          %387 = vsyncadd %s380, %s386
          %s388 = smul.addr %s384, 2
          %s389 = smul.addr %s388, 128
          %s390 = scalar_lea.hbm %s0, %s389
          %s391 = sshll.u32 %s383, 4
          %s392 = int_to_ptr.vmem [resolvable:$true] %s391
          %397 = dma.hbm_to_vmem [thread:$0]  %s390, 2048, %s392, %s380, 128, 128, 8
        $region60: #{tpu_custom_call.1} parent=55 // pred_fallthru
          _
      $region56: #{tpu_custom_call.1} parent=5 // pred_fallthru
        _
      %p398 = scmp.le.s32.totalorder 1, %s25
      %p399 = scmp.lt.s32.totalorder %s25, 3
      %p400 = pnand %p398, %p399
      %p401 = pneg %p400
      // Predicated region
      $region61: #{tpu_custom_call.1} parent=5 // pred_check
        _
      $region62: #{tpu_custom_call.1} parent=5 // pred_check_branch
        %403 = sbr.rel (%p400) target = $region64
      $region63: #{tpu_custom_call.1} parent=5 // pred_region
        %s404 = ssub.s32 %s25, 1
        %s405 = sand.u32 %s38, 1
        %s406 = scalar_lea.sflag [#allocation3], %s405
        %s407 = sand.u32 %s38, 1
        %s408 = smul.addr %s407, 128
        %s409 = scalar_lea.vmem [#allocation2], %s408
        // Predicated region
        $region65: #{tpu_custom_call.1} parent=63 // pred_check
          %p410 = pneg %p51
        $region66: #{tpu_custom_call.1} parent=63 // pred_check_branch
          %412 = sbr.rel (%p410) target = $region68
        $region67: #{tpu_custom_call.1} parent=63 // pred_region
          %413 = dma.done %s406, 2048
        $region68: #{tpu_custom_call.1} parent=63 // pred_fallthru
          _
        // Predicated region
        $region69: #{tpu_custom_call.1} parent=63 // pred_check
          %p414 = pneg %p72
        $region70: #{tpu_custom_call.1} parent=63 // pred_check_branch
          %416 = sbr.rel (%p414) target = $region72
        $region71: #{tpu_custom_call.1} parent=63 // pred_region
          %417 = dma.done [#allocation6], 3072
        $region72: #{tpu_custom_call.1} parent=63 // pred_fallthru
          _
        // Predicated region
        $region73: #{tpu_custom_call.1} parent=63 // pred_check
          %p418 = pneg %p93
        $region74: #{tpu_custom_call.1} parent=63 // pred_check_branch
          %420 = sbr.rel (%p418) target = $region76
        $region75: #{tpu_custom_call.1} parent=63 // pred_region
          %421 = dma.done [#allocation6], 1024
        $region76: #{tpu_custom_call.1} parent=63 // pred_fallthru
          _
        // Predicated region
        $region77: #{tpu_custom_call.1} parent=63 // pred_check
          %p422 = pneg %p156
        $region78: #{tpu_custom_call.1} parent=63 // pred_check_branch
          %424 = sbr.rel (%p422) target = $region80
        $region79: #{tpu_custom_call.1} parent=63 // pred_region
          %425 = dma.done [#allocation9], 4096
        $region80: #{tpu_custom_call.1} parent=63 // pred_fallthru
          _
        // Predicated region
        $region81: #{tpu_custom_call.1} parent=63 // pred_check
          %p426 = pneg %p198
        $region82: #{tpu_custom_call.1} parent=63 // pred_check_branch
          %428 = sbr.rel (%p426) target = $region84
        $region83: #{tpu_custom_call.1} parent=63 // pred_region
          %429 = dma.done [#allocation9], 4096
        $region84: #{tpu_custom_call.1} parent=63 // pred_fallthru
          _
        %s430 = sand.u32 %s38, 1
        %s431 = scalar_lea.sflag [#allocation3], %s430
        %s432 = sand.u32 %s38, 1
        %s433 = smul.addr %s432, 128
        %s434 = scalar_lea.vmem [#allocation2], %s433
        %p435 = pneg %p51
        %p436 = pneg %p48
        %p437 = pneg %p72
        %p438 = pneg %p69
        %p439 = pneg %p93
        %p440 = pneg %p90
        %p441 = pneg %p114
        %p442 = pneg %p111
        %p443 = pneg %p135
        %p444 = pneg %p132
        %p445 = pneg %p156
        %p446 = pneg %p153
        %p447 = pneg %p177
        %p448 = pneg %p174
        %p449 = pneg %p198
        %p450 = pneg %p195
        %p451 = pneg %p219
        %p452 = pneg %p216
        %p453 = pneg %p240
        %p454 = pneg %p237
        %p455 = pneg %p261
        %p456 = pneg %p258
        %p457 = pneg %p287
        %p458 = pneg %p284
        %s459 = sand.u32 %s274, 1
        %s460 = scalar_lea.sflag [#allocation4], %s459
        %s461 = sand.u32 %s274, 1
        %s462 = smul.addr %s461, 8
        %s463 = scalar_lea.vmem [#allocation11], %s462
        %s464 = smul.u32 8, %s30
        %v466 = vld [vmem:[%s409] sm:$0xff]
        %v467 = vld [vmem:[%s409 + $0x8] sm:$0xff]
        %v468 = vld [vmem:[%s409 + $0x10] sm:$0xff]
        %v469 = vld [vmem:[%s409 + $0x18] sm:$0xff]
        %v470 = vld [vmem:[%s409 + $0x20] sm:$0xff]
        %v471 = vld [vmem:[%s409 + $0x28] sm:$0xff]
        %v472 = vld [vmem:[%s409 + $0x30] sm:$0xff]
        %v473 = vld [vmem:[%s409 + $0x38] sm:$0xff]
        %v474 = vld [vmem:[%s409 + $0x40] sm:$0xff]
        %v475 = vld [vmem:[%s409 + $0x48] sm:$0xff]
        %v476 = vld [vmem:[%s409 + $0x50] sm:$0xff]
        %v477 = vld [vmem:[%s409 + $0x58] sm:$0xff]
        %v478 = vld [vmem:[%s409 + $0x60] sm:$0xff]
        %v479 = vld [vmem:[%s409 + $0x68] sm:$0xff]
        %v480 = vld [vmem:[%s409 + $0x70] sm:$0xff]
        %v481 = vld [vmem:[%s409 + $0x78] sm:$0xff]
        %v482 = vpack.c.bf16 %v467, %v466
        %v483 = vpack.c.bf16 %v469, %v468
        %v484 = vpack.c.bf16 %v471, %v470
        %v485 = vpack.c.bf16 %v473, %v472
        %v486 = vpack.c.bf16 %v475, %v474
        %v487 = vpack.c.bf16 %v477, %v476
        %v488 = vpack.c.bf16 %v479, %v478
        %v489 = vpack.c.bf16 %v481, %v480
        %v490 = vld [vmem:[#allocation5] sm:$0xff]
        %v491 = vld [vmem:[#allocation5 + $0x8] sm:$0xf]
        %v492 = vld [vmem:[#allocation5 + $0xc] sm:$0xff]
        %v493 = vld [vmem:[#allocation5 + $0x14] sm:$0xf]
        %v494 = vld [vmem:[#allocation5 + $0x18] sm:$0xff]
        %v495 = vld [vmem:[#allocation5 + $0x20] sm:$0xf]
        %v496 = vld [vmem:[#allocation5 + $0x24] sm:$0xff]
        %v497 = vld [vmem:[#allocation5 + $0x2c] sm:$0xf]
        %v498 = vld [vmem:[#allocation5 + $0x30] sm:$0xff]
        %v499 = vld [vmem:[#allocation5 + $0x38] sm:$0xf]
        %v500 = vld [vmem:[#allocation5 + $0x3c] sm:$0xff]
        %v501 = vld [vmem:[#allocation5 + $0x44] sm:$0xf]
        %v502 = vld [vmem:[#allocation5 + $0x48] sm:$0xff]
        %v503 = vld [vmem:[#allocation5 + $0x50] sm:$0xf]
        %v504 = vld [vmem:[#allocation5 + $0x54] sm:$0xff]
        %v505 = vld [vmem:[#allocation5 + $0x5c] sm:$0xf]
        %v506 = vld [vmem:[#allocation5 + $0x60] sm:$0xff]
        %v507 = vld [vmem:[#allocation5 + $0x68] sm:$0xf]
        %v508 = vld [vmem:[#allocation5 + $0x6c] sm:$0xff]
        %v509 = vld [vmem:[#allocation5 + $0x74] sm:$0xf]
        %v510 = vld [vmem:[#allocation5 + $0x78] sm:$0xff]
        %v511 = vld [vmem:[#allocation5 + $0x80] sm:$0xf]
        %v512 = vld [vmem:[#allocation5 + $0x84] sm:$0xff]
        %v513 = vld [vmem:[#allocation5 + $0x8c] sm:$0xf]
        %v514 = vld [vmem:[#allocation5 + $0x90] sm:$0xff]
        %v515 = vld [vmem:[#allocation5 + $0x98] sm:$0xf]
        %v516 = vld [vmem:[#allocation5 + $0x9c] sm:$0xff]
        %v517 = vld [vmem:[#allocation5 + $0xa4] sm:$0xf]
        %v518 = vld [vmem:[#allocation5 + $0xa8] sm:$0xff]
        %v519 = vld [vmem:[#allocation5 + $0xb0] sm:$0xf]
        %v520 = vld [vmem:[#allocation5 + $0xb4] sm:$0xff]
        %v521 = vld [vmem:[#allocation5 + $0xbc] sm:$0xf]
        %v554 = vunpack.c.l.b16 %v490
        %v555 = vunpack.c.h.b16 %v490
        %v556 = vunpack.c.l.b16 %v491
        %v557 = vunpack.c.l.b16 %v492
        %v558 = vunpack.c.h.b16 %v492
        %v559 = vunpack.c.l.b16 %v493
        %v560 = vunpack.c.l.b16 %v494
        %v561 = vunpack.c.h.b16 %v494
        %v562 = vunpack.c.l.b16 %v495
        %v563 = vunpack.c.l.b16 %v496
        %v564 = vunpack.c.h.b16 %v496
        %v565 = vunpack.c.l.b16 %v497
        %v566 = vunpack.c.l.b16 %v498
        %v567 = vunpack.c.h.b16 %v498
        %v568 = vunpack.c.l.b16 %v499
        %v569 = vunpack.c.l.b16 %v500
        %v570 = vunpack.c.h.b16 %v500
        %v571 = vunpack.c.l.b16 %v501
        %v572 = vunpack.c.l.b16 %v502
        %v573 = vunpack.c.h.b16 %v502
        %v574 = vunpack.c.l.b16 %v503
        %v575 = vunpack.c.l.b16 %v504
        %v576 = vunpack.c.h.b16 %v504
        %v577 = vunpack.c.l.b16 %v505
        %v578 = vunpack.c.l.b16 %v506
        %v579 = vunpack.c.h.b16 %v506
        %v580 = vunpack.c.l.b16 %v507
        %v581 = vunpack.c.l.b16 %v508
        %v582 = vunpack.c.h.b16 %v508
        %v583 = vunpack.c.l.b16 %v509
        %v584 = vunpack.c.l.b16 %v510
        %v585 = vunpack.c.h.b16 %v510
        %v586 = vunpack.c.l.b16 %v511
        %v587 = vunpack.c.l.b16 %v512
        %v588 = vunpack.c.h.b16 %v512
        %v589 = vunpack.c.l.b16 %v513
        %v590 = vunpack.c.l.b16 %v514
        %v591 = vunpack.c.h.b16 %v514
        %v592 = vunpack.c.l.b16 %v515
        %v593 = vunpack.c.l.b16 %v516
        %v594 = vunpack.c.h.b16 %v516
        %v595 = vunpack.c.l.b16 %v517
        %v596 = vunpack.c.l.b16 %v518
        %v597 = vunpack.c.h.b16 %v518
        %v598 = vunpack.c.l.b16 %v519
        %v599 = vunpack.c.l.b16 %v520
        %v600 = vunpack.c.h.b16 %v520
        %v601 = vunpack.c.l.b16 %v521
        %v602 = vpack.c.b16 %v557, %v554
        %v603 = vpack.c.b16 %v558, %v555
        %v604 = vpack.c.b16 %v559, %v556
        %v605 = vpack.c.b16 %v563, %v560
        %v606 = vpack.c.b16 %v564, %v561
        %v607 = vpack.c.b16 %v565, %v562
        %v608 = vpack.c.b16 %v569, %v566
        %v609 = vpack.c.b16 %v570, %v567
        %v610 = vpack.c.b16 %v571, %v568
        %v611 = vpack.c.b16 %v575, %v572
        %v612 = vpack.c.b16 %v576, %v573
        %v613 = vpack.c.b16 %v577, %v574
        %v614 = vpack.c.b16 %v581, %v578
        %v615 = vpack.c.b16 %v582, %v579
        %v616 = vpack.c.b16 %v583, %v580
        %v617 = vpack.c.b16 %v587, %v584
        %v618 = vpack.c.b16 %v588, %v585
        %v619 = vpack.c.b16 %v589, %v586
        %v620 = vpack.c.b16 %v593, %v590
        %v621 = vpack.c.b16 %v594, %v591
        %v622 = vpack.c.b16 %v595, %v592
        %v623 = vpack.c.b16 %v599, %v596
        %v624 = vpack.c.b16 %v600, %v597
        %v625 = vpack.c.b16 %v601, %v598
        %650 = vmatprep.subr.bf16.mxu0 %v603
        %651 = vmatpush1.bf16.msra.mxu0 %v602
        %652 = vmatprep.subr.bf16.mxu0 %v606
        %653 = vmatpush1.bf16.msra.mxu0 %v605
        %654 = vmatprep.subr.bf16.mxu0 %v609
        %655 = vmatpush1.bf16.msra.mxu0 %v608
        %656 = vmatprep.subr.bf16.mxu0 %v612
        %657 = vmatpush1.bf16.msra.mxu0 %v611
        %658 = vmatprep.subr.bf16.mxu0 %v615
        %659 = vmatpush1.bf16.msra.mxu0 %v614
        %660 = vmatprep.subr.bf16.mxu0 %v618
        %661 = vmatpush1.bf16.msra.mxu0 %v617
        %662 = vmatprep.subr.bf16.mxu0 %v621
        %663 = vmatpush1.bf16.msra.mxu0 %v620
        %664 = vmatprep.subr.bf16.mxu0 %v624
        %665 = vmatpush1.bf16.msra.mxu0 %v623
        %666 = vmatprep.subr.bf16.mxu0 0
        %667 = vmatpush1.bf16.msra.mxu0 0
        %668 = vmatprep.subr.bf16.mxu0 0
        %669 = vmatpush1.bf16.msra.mxu0 0
        %670 = vmatprep.subr.bf16.mxu0 0
        %671 = vmatpush1.bf16.msra.mxu0 0
        %672 = vmatprep.subr.bf16.mxu0 0
        %673 = vmatpush1.bf16.msra.mxu0 0
        %674 = vmatprep.subr.bf16.mxu0 0
        %675 = vmatpush1.bf16.msra.mxu0 0
        %676 = vmatprep.subr.bf16.mxu0 0
        %677 = vmatpush1.bf16.msra.mxu0 0
        %678 = vmatprep.subr.bf16.mxu0 0
        %679 = vmatpush1.bf16.msra.mxu0 0
        %680 = vmatprep.subr.bf16.mxu0 0
        %681 = vmatpush1.bf16.msra.mxu0 0
        %682 = vmatprep.mubr.bf16.mxu0 0
        %683 = vmatmul.mubr.bf16.gmra.mrb[0].mxu0 %v482
        %v684 = vpop.f32.mrb[0].mxu0
        %v685 = vadd.f32 0.0, %v684
        %v686 = vpop.f32.mrb[0].mxu0
        %v687 = vadd.f32 0.0, %v686
        %v688 = vpop.f32.mrb[0].mxu0
        %v689 = vadd.f32 0.0, %v688
        %v690 = vpop.f32.mrb[0].mxu0
        %v691 = vadd.f32 0.0, %v690
        %692 = vmatprep.mubr.bf16.mxu0 0
        %693 = vmatmul.mubr.bf16.gmra.mrb[0].mxu0 %v483
        %v694 = vpop.f32.mrb[0].mxu0
        %v695 = vadd.f32 0.0, %v694
        %v696 = vpop.f32.mrb[0].mxu0
        %v697 = vadd.f32 0.0, %v696
        %v698 = vpop.f32.mrb[0].mxu0
        %v699 = vadd.f32 0.0, %v698
        %v700 = vpop.f32.mrb[0].mxu0
        %v701 = vadd.f32 0.0, %v700
        %702 = vmatprep.mubr.bf16.mxu0 0
        %703 = vmatmul.mubr.bf16.gmra.mrb[0].mxu0 %v484
        %v704 = vpop.f32.mrb[0].mxu0
        %v705 = vadd.f32 0.0, %v704
        %v706 = vpop.f32.mrb[0].mxu0
        %v707 = vadd.f32 0.0, %v706
        %v708 = vpop.f32.mrb[0].mxu0
        %v709 = vadd.f32 0.0, %v708
        %v710 = vpop.f32.mrb[0].mxu0
        %v711 = vadd.f32 0.0, %v710
        %712 = vmatprep.mubr.bf16.mxu0 0
        %713 = vmatmul.mubr.bf16.gmra.mrb[0].mxu0 %v485
        %v714 = vpop.f32.mrb[0].mxu0
        %v715 = vadd.f32 0.0, %v714
        %v716 = vpop.f32.mrb[0].mxu0
        %v717 = vadd.f32 0.0, %v716
        %v718 = vpop.f32.mrb[0].mxu0
        %v719 = vadd.f32 0.0, %v718
        %v720 = vpop.f32.mrb[0].mxu0
        %v721 = vadd.f32 0.0, %v720
        %722 = vmatprep.mubr.bf16.mxu0 0
        %723 = vmatmul.mubr.bf16.gmra.mrb[0].mxu0 %v486
        %v724 = vpop.f32.mrb[0].mxu0
        %v725 = vadd.f32 0.0, %v724
        %v726 = vpop.f32.mrb[0].mxu0
        %v727 = vadd.f32 0.0, %v726
        %v728 = vpop.f32.mrb[0].mxu0
        %v729 = vadd.f32 0.0, %v728
        %v730 = vpop.f32.mrb[0].mxu0
        %v731 = vadd.f32 0.0, %v730
        %732 = vmatprep.mubr.bf16.mxu0 0
        %733 = vmatmul.mubr.bf16.gmra.mrb[0].mxu0 %v487
        %v734 = vpop.f32.mrb[0].mxu0
        %v735 = vadd.f32 0.0, %v734
        %v736 = vpop.f32.mrb[0].mxu0
        %v737 = vadd.f32 0.0, %v736
        %v738 = vpop.f32.mrb[0].mxu0
        %v739 = vadd.f32 0.0, %v738
        %v740 = vpop.f32.mrb[0].mxu0
        %v741 = vadd.f32 0.0, %v740
        %742 = vmatprep.mubr.bf16.mxu0 0
        %743 = vmatmul.mubr.bf16.gmra.mrb[0].mxu0 %v488
        %v744 = vpop.f32.mrb[0].mxu0
        %v745 = vadd.f32 0.0, %v744
        %v746 = vpop.f32.mrb[0].mxu0
        %v747 = vadd.f32 0.0, %v746
        %v748 = vpop.f32.mrb[0].mxu0
        %v749 = vadd.f32 0.0, %v748
        %v750 = vpop.f32.mrb[0].mxu0
        %v751 = vadd.f32 0.0, %v750
        %752 = vmatprep.mubr.bf16.mxu0 0
        %753 = vmatmul.mubr.bf16.gmra.mrb[0].mxu0 %v489
        %v754 = vpop.f32.mrb[0].mxu0
        %v755 = vadd.f32 0.0, %v754
        %v756 = vpop.f32.mrb[0].mxu0
        %v757 = vadd.f32 0.0, %v756
        %v758 = vpop.f32.mrb[0].mxu0
        %v759 = vadd.f32 0.0, %v758
        %v760 = vpop.f32.mrb[0].mxu0
        %v761 = vadd.f32 0.0, %v760
        %762 = vdwg.mxu0
        %763 = vmatprep.subr.bf16.mxu0 0
        %764 = vmatpush1.bf16.msra.mxu0 %v604
        %765 = vmatprep.subr.bf16.mxu0 0
        %766 = vmatpush1.bf16.msra.mxu0 %v607
        %767 = vmatprep.subr.bf16.mxu0 0
        %768 = vmatpush1.bf16.msra.mxu0 %v610
        %769 = vmatprep.subr.bf16.mxu0 0
        %770 = vmatpush1.bf16.msra.mxu0 %v613
        %771 = vmatprep.subr.bf16.mxu0 0
        %772 = vmatpush1.bf16.msra.mxu0 %v616
        %773 = vmatprep.subr.bf16.mxu0 0
        %774 = vmatpush1.bf16.msra.mxu0 %v619
        %775 = vmatprep.subr.bf16.mxu0 0
        %776 = vmatpush1.bf16.msra.mxu0 %v622
        %777 = vmatprep.subr.bf16.mxu0 0
        %778 = vmatpush1.bf16.msra.mxu0 %v625
        %779 = vmatprep.subr.bf16.mxu0 0
        %780 = vmatpush1.bf16.msra.mxu0 0
        %781 = vmatprep.subr.bf16.mxu0 0
        %782 = vmatpush1.bf16.msra.mxu0 0
        %783 = vmatprep.subr.bf16.mxu0 0
        %784 = vmatpush1.bf16.msra.mxu0 0
        %785 = vmatprep.subr.bf16.mxu0 0
        %786 = vmatpush1.bf16.msra.mxu0 0
        %787 = vmatprep.subr.bf16.mxu0 0
        %788 = vmatpush1.bf16.msra.mxu0 0
        %789 = vmatprep.subr.bf16.mxu0 0
        %790 = vmatpush1.bf16.msra.mxu0 0
        %791 = vmatprep.subr.bf16.mxu0 0
        %792 = vmatpush1.bf16.msra.mxu0 0
        %793 = vmatprep.subr.bf16.mxu0 0
        %794 = vmatpush1.bf16.msra.mxu0 0
        %795 = vmatprep.mubr.bf16.mxu0 0
        %796 = vmatmul.mubr.bf16.gmra.mrb[0].mxu0 %v482
        %v797 = vpop.f32.mrb[0].mxu0
        %v798 = vadd.f32 0.0, %v797
        %v799 = vpop.f32.mrb[0].mxu0
        %v800 = vpop.f32.mrb[0].mxu0
        %v801 = vadd.f32 0.0, %v800
        %v802 = vpop.f32.mrb[0].mxu0
        %803 = vmatprep.mubr.bf16.mxu0 0
        %804 = vmatmul.mubr.bf16.gmra.mrb[0].mxu0 %v483
        %v805 = vpop.f32.mrb[0].mxu0
        %v806 = vadd.f32 0.0, %v805
        %v807 = vpop.f32.mrb[0].mxu0
        %v808 = vpop.f32.mrb[0].mxu0
        %v809 = vadd.f32 0.0, %v808
        %v810 = vpop.f32.mrb[0].mxu0
        %811 = vmatprep.mubr.bf16.mxu0 0
        %812 = vmatmul.mubr.bf16.gmra.mrb[0].mxu0 %v484
        %v813 = vpop.f32.mrb[0].mxu0
        %v814 = vadd.f32 0.0, %v813
        %v815 = vpop.f32.mrb[0].mxu0
        %v816 = vpop.f32.mrb[0].mxu0
        %v817 = vadd.f32 0.0, %v816
        %v818 = vpop.f32.mrb[0].mxu0
        %819 = vmatprep.mubr.bf16.mxu0 0
        %820 = vmatmul.mubr.bf16.gmra.mrb[0].mxu0 %v485
        %v821 = vpop.f32.mrb[0].mxu0
        %v822 = vadd.f32 0.0, %v821
        %v823 = vpop.f32.mrb[0].mxu0
        %v824 = vpop.f32.mrb[0].mxu0
        %v825 = vadd.f32 0.0, %v824
        %v826 = vpop.f32.mrb[0].mxu0
        %827 = vmatprep.mubr.bf16.mxu0 0
        %828 = vmatmul.mubr.bf16.gmra.mrb[0].mxu0 %v486
        %v829 = vpop.f32.mrb[0].mxu0
        %v830 = vadd.f32 0.0, %v829
        %v831 = vpop.f32.mrb[0].mxu0
        %v832 = vpop.f32.mrb[0].mxu0
        %v833 = vadd.f32 0.0, %v832
        %v834 = vpop.f32.mrb[0].mxu0
        %835 = vmatprep.mubr.bf16.mxu0 0
        %836 = vmatmul.mubr.bf16.gmra.mrb[0].mxu0 %v487
        %v837 = vpop.f32.mrb[0].mxu0
        %v838 = vadd.f32 0.0, %v837
        %v839 = vpop.f32.mrb[0].mxu0
        %v840 = vpop.f32.mrb[0].mxu0
        %v841 = vadd.f32 0.0, %v840
        %v842 = vpop.f32.mrb[0].mxu0
        %843 = vmatprep.mubr.bf16.mxu0 0
        %844 = vmatmul.mubr.bf16.gmra.mrb[0].mxu0 %v488
        %v845 = vpop.f32.mrb[0].mxu0
        %v846 = vadd.f32 0.0, %v845
        %v847 = vpop.f32.mrb[0].mxu0
        %v848 = vpop.f32.mrb[0].mxu0
        %v849 = vadd.f32 0.0, %v848
        %v850 = vpop.f32.mrb[0].mxu0
        %851 = vmatprep.mubr.bf16.mxu0 0
        %852 = vmatmul.mubr.bf16.gmra.mrb[0].mxu0 %v489
        %v853 = vpop.f32.mrb[0].mxu0
        %v854 = vadd.f32 0.0, %v853
        %v855 = vpop.f32.mrb[0].mxu0
        %v856 = vpop.f32.mrb[0].mxu0
        %v857 = vadd.f32 0.0, %v856
        %v858 = vpop.f32.mrb[0].mxu0
        %859 = vdwg.mxu0
        %v860 = vpack.c.bf16 %v689, %v685
        %v861 = vpack.c.bf16 %v699, %v695
        %v862 = vpack.c.bf16 %v709, %v705
        %v863 = vpack.c.bf16 %v719, %v715
        %v864 = vpack.c.bf16 %v729, %v725
        %v865 = vpack.c.bf16 %v739, %v735
        %v866 = vpack.c.bf16 %v749, %v745
        %v867 = vpack.c.bf16 %v759, %v755
        %v868 = vpack.c.bf16 %v691, %v687
        %v869 = vpack.c.bf16 %v701, %v697
        %v870 = vpack.c.bf16 %v711, %v707
        %v871 = vpack.c.bf16 %v721, %v717
        %v872 = vpack.c.bf16 %v731, %v727
        %v873 = vpack.c.bf16 %v741, %v737
        %v874 = vpack.c.bf16 %v751, %v747
        %v875 = vpack.c.bf16 %v761, %v757
        %876 = vmatprep.subr.bf16.mxu0 0
        %877 = vmatpush1.bf16.xpose.msra.mxu0 %v868
        %878 = vmatprep.subr.bf16.mxu0 0
        %879 = vmatpush1.bf16.xpose.msra.mxu0 0
        %880 = vmatprep.subr.bf16.mxu0 0
        %881 = vmatpush1.bf16.xpose.msra.mxu0 0
        %882 = vmatprep.subr.bf16.mxu0 0
        %883 = vmatpush1.bf16.xpose.msra.mxu0 0
        %884 = vmatprep.subr.bf16.mxu0 0
        %885 = vmatpush1.bf16.xpose.msra.mxu0 0
        %886 = vmatprep.subr.bf16.mxu0 0
        %887 = vmatpush1.bf16.xpose.msra.mxu0 0
        %888 = vmatprep.subr.bf16.mxu0 0
        %889 = vmatpush1.bf16.xpose.msra.mxu0 0
        %890 = vmatprep.subr.bf16.mxu0 0
        %891 = vmatpush1.bf16.xpose.msra.mxu0 0
        %892 = vmatprep.subr.bf16.mxu0 0
        %893 = vmatpush1.bf16.xpose.msra.mxu0 0
        %894 = vmatprep.subr.bf16.mxu0 0
        %895 = vmatpush1.bf16.xpose.msra.mxu0 0
        %896 = vmatprep.subr.bf16.mxu0 0
        %897 = vmatpush1.bf16.xpose.msra.mxu0 0
        %898 = vmatprep.subr.bf16.mxu0 0
        %899 = vmatpush1.bf16.xpose.msra.mxu0 0
        %900 = vmatprep.subr.bf16.mxu0 0
        %901 = vmatpush1.bf16.xpose.msra.mxu0 0
        %902 = vmatprep.subr.bf16.mxu0 0
        %903 = vmatpush1.bf16.xpose.msra.mxu0 0
        %904 = vmatprep.subr.bf16.mxu0 0
        %905 = vmatpush1.bf16.xpose.msra.mxu0 0
        %906 = vmatprep.subr.bf16.mxu0 0
        %907 = vmatpush1.bf16.xpose.msra.mxu0 0
        %908 = vmatprep.mubr.bf16.mxu0 0
        %909 = vmatmul.mubr.bf16.gmra.mrb[0].mxu0 %v860
        %v910 = vpop.f32.mrb[0].mxu0
        %v911 = vadd.f32 0.0, %v910
        %v912 = vpop.f32.mrb[0].mxu0
        %v913 = vpop.f32.mrb[0].mxu0
        %v914 = vadd.f32 0.0, %v913
        %v915 = vpop.f32.mrb[0].mxu0
        %916 = vdwg.mxu0
        %917 = vmatprep.subr.bf16.mxu0 0
        %918 = vmatpush1.bf16.xpose.msra.mxu0 %v869
        %919 = vmatprep.subr.bf16.mxu0 0
        %920 = vmatpush1.bf16.xpose.msra.mxu0 0
        %921 = vmatprep.subr.bf16.mxu0 0
        %922 = vmatpush1.bf16.xpose.msra.mxu0 0
        %923 = vmatprep.subr.bf16.mxu0 0
        %924 = vmatpush1.bf16.xpose.msra.mxu0 0
        %925 = vmatprep.subr.bf16.mxu0 0
        %926 = vmatpush1.bf16.xpose.msra.mxu0 0
        %927 = vmatprep.subr.bf16.mxu0 0
        %928 = vmatpush1.bf16.xpose.msra.mxu0 0
        %929 = vmatprep.subr.bf16.mxu0 0
        %930 = vmatpush1.bf16.xpose.msra.mxu0 0
        %931 = vmatprep.subr.bf16.mxu0 0
        %932 = vmatpush1.bf16.xpose.msra.mxu0 0
        %933 = vmatprep.subr.bf16.mxu0 0
        %934 = vmatpush1.bf16.xpose.msra.mxu0 0
        %935 = vmatprep.subr.bf16.mxu0 0
        %936 = vmatpush1.bf16.xpose.msra.mxu0 0
        %937 = vmatprep.subr.bf16.mxu0 0
        %938 = vmatpush1.bf16.xpose.msra.mxu0 0
        %939 = vmatprep.subr.bf16.mxu0 0
        %940 = vmatpush1.bf16.xpose.msra.mxu0 0
        %941 = vmatprep.subr.bf16.mxu0 0
        %942 = vmatpush1.bf16.xpose.msra.mxu0 0
        %943 = vmatprep.subr.bf16.mxu0 0
        %944 = vmatpush1.bf16.xpose.msra.mxu0 0
        %945 = vmatprep.subr.bf16.mxu0 0
        %946 = vmatpush1.bf16.xpose.msra.mxu0 0
        %947 = vmatprep.subr.bf16.mxu0 0
        %948 = vmatpush1.bf16.xpose.msra.mxu0 0
        %949 = vmatprep.mubr.bf16.mxu0 0
        %950 = vmatmul.mubr.bf16.gmra.mrb[0].mxu0 %v861
        %v951 = vpop.f32.mrb[0].mxu0
        %v952 = vadd.f32 0.0, %v951
        %v953 = vpop.f32.mrb[0].mxu0
        %v954 = vpop.f32.mrb[0].mxu0
        %v955 = vadd.f32 0.0, %v954
        %v956 = vpop.f32.mrb[0].mxu0
        %957 = vdwg.mxu0
        %958 = vmatprep.subr.bf16.mxu0 0
        %959 = vmatpush1.bf16.xpose.msra.mxu0 %v870
        %960 = vmatprep.subr.bf16.mxu0 0
        %961 = vmatpush1.bf16.xpose.msra.mxu0 0
        %962 = vmatprep.subr.bf16.mxu0 0
        %963 = vmatpush1.bf16.xpose.msra.mxu0 0
        %964 = vmatprep.subr.bf16.mxu0 0
        %965 = vmatpush1.bf16.xpose.msra.mxu0 0
        %966 = vmatprep.subr.bf16.mxu0 0
        %967 = vmatpush1.bf16.xpose.msra.mxu0 0
        %968 = vmatprep.subr.bf16.mxu0 0
        %969 = vmatpush1.bf16.xpose.msra.mxu0 0
        %970 = vmatprep.subr.bf16.mxu0 0
        %971 = vmatpush1.bf16.xpose.msra.mxu0 0
        %972 = vmatprep.subr.bf16.mxu0 0
        %973 = vmatpush1.bf16.xpose.msra.mxu0 0
        %974 = vmatprep.subr.bf16.mxu0 0
        %975 = vmatpush1.bf16.xpose.msra.mxu0 0
        %976 = vmatprep.subr.bf16.mxu0 0
        %977 = vmatpush1.bf16.xpose.msra.mxu0 0
        %978 = vmatprep.subr.bf16.mxu0 0
        %979 = vmatpush1.bf16.xpose.msra.mxu0 0
        %980 = vmatprep.subr.bf16.mxu0 0
        %981 = vmatpush1.bf16.xpose.msra.mxu0 0
        %982 = vmatprep.subr.bf16.mxu0 0
        %983 = vmatpush1.bf16.xpose.msra.mxu0 0
        %984 = vmatprep.subr.bf16.mxu0 0
        %985 = vmatpush1.bf16.xpose.msra.mxu0 0
        %986 = vmatprep.subr.bf16.mxu0 0
        %987 = vmatpush1.bf16.xpose.msra.mxu0 0
        %988 = vmatprep.subr.bf16.mxu0 0
        %989 = vmatpush1.bf16.xpose.msra.mxu0 0
        %990 = vmatprep.mubr.bf16.mxu0 0
        %991 = vmatmul.mubr.bf16.gmra.mrb[0].mxu0 %v862
        %v992 = vpop.f32.mrb[0].mxu0
        %v993 = vadd.f32 0.0, %v992
        %v994 = vpop.f32.mrb[0].mxu0
        %v995 = vpop.f32.mrb[0].mxu0
        %v996 = vadd.f32 0.0, %v995
        %v997 = vpop.f32.mrb[0].mxu0
        %998 = vdwg.mxu0
        %999 = vmatprep.subr.bf16.mxu0 0
        %1000 = vmatpush1.bf16.xpose.msra.mxu0 %v871
        %1001 = vmatprep.subr.bf16.mxu0 0
        %1002 = vmatpush1.bf16.xpose.msra.mxu0 0
        %1003 = vmatprep.subr.bf16.mxu0 0
        %1004 = vmatpush1.bf16.xpose.msra.mxu0 0
        %1005 = vmatprep.subr.bf16.mxu0 0
        %1006 = vmatpush1.bf16.xpose.msra.mxu0 0
        %1007 = vmatprep.subr.bf16.mxu0 0
        %1008 = vmatpush1.bf16.xpose.msra.mxu0 0
        %1009 = vmatprep.subr.bf16.mxu0 0
        %1010 = vmatpush1.bf16.xpose.msra.mxu0 0
        %1011 = vmatprep.subr.bf16.mxu0 0
        %1012 = vmatpush1.bf16.xpose.msra.mxu0 0
        %1013 = vmatprep.subr.bf16.mxu0 0
        %1014 = vmatpush1.bf16.xpose.msra.mxu0 0
        %1015 = vmatprep.subr.bf16.mxu0 0
        %1016 = vmatpush1.bf16.xpose.msra.mxu0 0
        %1017 = vmatprep.subr.bf16.mxu0 0
        %1018 = vmatpush1.bf16.xpose.msra.mxu0 0
        %1019 = vmatprep.subr.bf16.mxu0 0
        %1020 = vmatpush1.bf16.xpose.msra.mxu0 0
        %1021 = vmatprep.subr.bf16.mxu0 0
        %1022 = vmatpush1.bf16.xpose.msra.mxu0 0
        %1023 = vmatprep.subr.bf16.mxu0 0
        %1024 = vmatpush1.bf16.xpose.msra.mxu0 0
        %1025 = vmatprep.subr.bf16.mxu0 0
        %1026 = vmatpush1.bf16.xpose.msra.mxu0 0
        %1027 = vmatprep.subr.bf16.mxu0 0
        %1028 = vmatpush1.bf16.xpose.msra.mxu0 0
        %1029 = vmatprep.subr.bf16.mxu0 0
        %1030 = vmatpush1.bf16.xpose.msra.mxu0 0
        %1031 = vmatprep.mubr.bf16.mxu0 0
        %1032 = vmatmul.mubr.bf16.gmra.mrb[0].mxu0 %v863
        %v1033 = vpop.f32.mrb[0].mxu0
        %v1034 = vadd.f32 0.0, %v1033
        %v1035 = vpop.f32.mrb[0].mxu0
        %v1036 = vpop.f32.mrb[0].mxu0
        %v1037 = vadd.f32 0.0, %v1036
        %v1038 = vpop.f32.mrb[0].mxu0
        %1039 = vdwg.mxu0
        %1040 = vmatprep.subr.bf16.mxu0 0
        %1041 = vmatpush1.bf16.xpose.msra.mxu0 %v872
        %1042 = vmatprep.subr.bf16.mxu0 0
        %1043 = vmatpush1.bf16.xpose.msra.mxu0 0
        %1044 = vmatprep.subr.bf16.mxu0 0
        %1045 = vmatpush1.bf16.xpose.msra.mxu0 0
        %1046 = vmatprep.subr.bf16.mxu0 0
        %1047 = vmatpush1.bf16.xpose.msra.mxu0 0
        %1048 = vmatprep.subr.bf16.mxu0 0
        %1049 = vmatpush1.bf16.xpose.msra.mxu0 0
        %1050 = vmatprep.subr.bf16.mxu0 0
        %1051 = vmatpush1.bf16.xpose.msra.mxu0 0
        %1052 = vmatprep.subr.bf16.mxu0 0
        %1053 = vmatpush1.bf16.xpose.msra.mxu0 0
        %1054 = vmatprep.subr.bf16.mxu0 0
        %1055 = vmatpush1.bf16.xpose.msra.mxu0 0
        %1056 = vmatprep.subr.bf16.mxu0 0
        %1057 = vmatpush1.bf16.xpose.msra.mxu0 0
        %1058 = vmatprep.subr.bf16.mxu0 0
        %1059 = vmatpush1.bf16.xpose.msra.mxu0 0
        %1060 = vmatprep.subr.bf16.mxu0 0
        %1061 = vmatpush1.bf16.xpose.msra.mxu0 0
        %1062 = vmatprep.subr.bf16.mxu0 0
        %1063 = vmatpush1.bf16.xpose.msra.mxu0 0
        %1064 = vmatprep.subr.bf16.mxu0 0
        %1065 = vmatpush1.bf16.xpose.msra.mxu0 0
        %1066 = vmatprep.subr.bf16.mxu0 0
        %1067 = vmatpush1.bf16.xpose.msra.mxu0 0
        %1068 = vmatprep.subr.bf16.mxu0 0
        %1069 = vmatpush1.bf16.xpose.msra.mxu0 0
        %1070 = vmatprep.subr.bf16.mxu0 0
        %1071 = vmatpush1.bf16.xpose.msra.mxu0 0
        %1072 = vmatprep.mubr.bf16.mxu0 0
        %1073 = vmatmul.mubr.bf16.gmra.mrb[0].mxu0 %v864
        %v1074 = vpop.f32.mrb[0].mxu0
        %v1075 = vadd.f32 0.0, %v1074
        %v1076 = vpop.f32.mrb[0].mxu0
        %v1077 = vpop.f32.mrb[0].mxu0
        %v1078 = vadd.f32 0.0, %v1077
        %v1079 = vpop.f32.mrb[0].mxu0
        %1080 = vdwg.mxu0
        %1081 = vmatprep.subr.bf16.mxu0 0
        %1082 = vmatpush1.bf16.xpose.msra.mxu0 %v873
        %1083 = vmatprep.subr.bf16.mxu0 0
        %1084 = vmatpush1.bf16.xpose.msra.mxu0 0
        %1085 = vmatprep.subr.bf16.mxu0 0
        %1086 = vmatpush1.bf16.xpose.msra.mxu0 0
        %1087 = vmatprep.subr.bf16.mxu0 0
        %1088 = vmatpush1.bf16.xpose.msra.mxu0 0
        %1089 = vmatprep.subr.bf16.mxu0 0
        %1090 = vmatpush1.bf16.xpose.msra.mxu0 0
        %1091 = vmatprep.subr.bf16.mxu0 0
        %1092 = vmatpush1.bf16.xpose.msra.mxu0 0
        %1093 = vmatprep.subr.bf16.mxu0 0
        %1094 = vmatpush1.bf16.xpose.msra.mxu0 0
        %1095 = vmatprep.subr.bf16.mxu0 0
        %1096 = vmatpush1.bf16.xpose.msra.mxu0 0
        %1097 = vmatprep.subr.bf16.mxu0 0
        %1098 = vmatpush1.bf16.xpose.msra.mxu0 0
        %1099 = vmatprep.subr.bf16.mxu0 0
        %1100 = vmatpush1.bf16.xpose.msra.mxu0 0
        %1101 = vmatprep.subr.bf16.mxu0 0
        %1102 = vmatpush1.bf16.xpose.msra.mxu0 0
        %1103 = vmatprep.subr.bf16.mxu0 0
        %1104 = vmatpush1.bf16.xpose.msra.mxu0 0
        %1105 = vmatprep.subr.bf16.mxu0 0
        %1106 = vmatpush1.bf16.xpose.msra.mxu0 0
        %1107 = vmatprep.subr.bf16.mxu0 0
        %1108 = vmatpush1.bf16.xpose.msra.mxu0 0
        %1109 = vmatprep.subr.bf16.mxu0 0
        %1110 = vmatpush1.bf16.xpose.msra.mxu0 0
        %1111 = vmatprep.subr.bf16.mxu0 0
        %1112 = vmatpush1.bf16.xpose.msra.mxu0 0
        %1113 = vmatprep.mubr.bf16.mxu0 0
        %1114 = vmatmul.mubr.bf16.gmra.mrb[0].mxu0 %v865
        %v1115 = vpop.f32.mrb[0].mxu0
        %v1116 = vadd.f32 0.0, %v1115
        %v1117 = vpop.f32.mrb[0].mxu0
        %v1118 = vpop.f32.mrb[0].mxu0
        %v1119 = vadd.f32 0.0, %v1118
        %v1120 = vpop.f32.mrb[0].mxu0
        %1121 = vdwg.mxu0
        %1122 = vmatprep.subr.bf16.mxu0 0
        %1123 = vmatpush1.bf16.xpose.msra.mxu0 %v874
        %1124 = vmatprep.subr.bf16.mxu0 0
        %1125 = vmatpush1.bf16.xpose.msra.mxu0 0
        %1126 = vmatprep.subr.bf16.mxu0 0
        %1127 = vmatpush1.bf16.xpose.msra.mxu0 0
        %1128 = vmatprep.subr.bf16.mxu0 0
        %1129 = vmatpush1.bf16.xpose.msra.mxu0 0
        %1130 = vmatprep.subr.bf16.mxu0 0
        %1131 = vmatpush1.bf16.xpose.msra.mxu0 0
        %1132 = vmatprep.subr.bf16.mxu0 0
        %1133 = vmatpush1.bf16.xpose.msra.mxu0 0
        %1134 = vmatprep.subr.bf16.mxu0 0
        %1135 = vmatpush1.bf16.xpose.msra.mxu0 0
        %1136 = vmatprep.subr.bf16.mxu0 0
        %1137 = vmatpush1.bf16.xpose.msra.mxu0 0
        %1138 = vmatprep.subr.bf16.mxu0 0
        %1139 = vmatpush1.bf16.xpose.msra.mxu0 0
        %1140 = vmatprep.subr.bf16.mxu0 0
        %1141 = vmatpush1.bf16.xpose.msra.mxu0 0
        %1142 = vmatprep.subr.bf16.mxu0 0
        %1143 = vmatpush1.bf16.xpose.msra.mxu0 0
        %1144 = vmatprep.subr.bf16.mxu0 0
        %1145 = vmatpush1.bf16.xpose.msra.mxu0 0
        %1146 = vmatprep.subr.bf16.mxu0 0
        %1147 = vmatpush1.bf16.xpose.msra.mxu0 0
        %1148 = vmatprep.subr.bf16.mxu0 0
        %1149 = vmatpush1.bf16.xpose.msra.mxu0 0
        %1150 = vmatprep.subr.bf16.mxu0 0
        %1151 = vmatpush1.bf16.xpose.msra.mxu0 0
        %1152 = vmatprep.subr.bf16.mxu0 0
        %1153 = vmatpush1.bf16.xpose.msra.mxu0 0
        %1154 = vmatprep.mubr.bf16.mxu0 0
        %1155 = vmatmul.mubr.bf16.gmra.mrb[0].mxu0 %v866
        %v1156 = vpop.f32.mrb[0].mxu0
        %v1157 = vadd.f32 0.0, %v1156
        %v1158 = vpop.f32.mrb[0].mxu0
        %v1159 = vpop.f32.mrb[0].mxu0
        %v1160 = vadd.f32 0.0, %v1159
        %v1161 = vpop.f32.mrb[0].mxu0
        %1162 = vdwg.mxu0
        %1163 = vmatprep.subr.bf16.mxu0 0
        %1164 = vmatpush1.bf16.xpose.msra.mxu0 %v875
        %1165 = vmatprep.subr.bf16.mxu0 0
        %1166 = vmatpush1.bf16.xpose.msra.mxu0 0
        %1167 = vmatprep.subr.bf16.mxu0 0
        %1168 = vmatpush1.bf16.xpose.msra.mxu0 0
        %1169 = vmatprep.subr.bf16.mxu0 0
        %1170 = vmatpush1.bf16.xpose.msra.mxu0 0
        %1171 = vmatprep.subr.bf16.mxu0 0
        %1172 = vmatpush1.bf16.xpose.msra.mxu0 0
        %1173 = vmatprep.subr.bf16.mxu0 0
        %1174 = vmatpush1.bf16.xpose.msra.mxu0 0
        %1175 = vmatprep.subr.bf16.mxu0 0
        %1176 = vmatpush1.bf16.xpose.msra.mxu0 0
        %1177 = vmatprep.subr.bf16.mxu0 0
        %1178 = vmatpush1.bf16.xpose.msra.mxu0 0
        %1179 = vmatprep.subr.bf16.mxu0 0
        %1180 = vmatpush1.bf16.xpose.msra.mxu0 0
        %1181 = vmatprep.subr.bf16.mxu0 0
        %1182 = vmatpush1.bf16.xpose.msra.mxu0 0
        %1183 = vmatprep.subr.bf16.mxu0 0
        %1184 = vmatpush1.bf16.xpose.msra.mxu0 0
        %1185 = vmatprep.subr.bf16.mxu0 0
        %1186 = vmatpush1.bf16.xpose.msra.mxu0 0
        %1187 = vmatprep.subr.bf16.mxu0 0
        %1188 = vmatpush1.bf16.xpose.msra.mxu0 0
        %1189 = vmatprep.subr.bf16.mxu0 0
        %1190 = vmatpush1.bf16.xpose.msra.mxu0 0
        %1191 = vmatprep.subr.bf16.mxu0 0
        %1192 = vmatpush1.bf16.xpose.msra.mxu0 0
        %1193 = vmatprep.subr.bf16.mxu0 0
        %1194 = vmatpush1.bf16.xpose.msra.mxu0 0
        %1195 = vmatprep.mubr.bf16.mxu0 0
        %1196 = vmatmul.mubr.bf16.gmra.mrb[0].mxu0 %v867
        %v1197 = vpop.f32.mrb[0].mxu0
        %v1198 = vadd.f32 0.0, %v1197
        %v1199 = vpop.f32.mrb[0].mxu0
        %v1200 = vpop.f32.mrb[0].mxu0
        %v1201 = vadd.f32 0.0, %v1200
        %v1202 = vpop.f32.mrb[0].mxu0
        %1203 = vdwg.mxu0
        %vm1204 = vcmask 130048
        %v1205 = vsel %vm1204, %v911, -inf
        %1206 = vmax.xlane.f32.xlu0 %v1205
        %v1207 = vpop.xlane.xlu0 %1206
        %v1208 = vsel %vm1204, %v914, -inf
        %1209 = vmax.xlane.f32.xlu0 %v1208
        %v1210 = vpop.xlane.xlu0 %1209
        %v1211 = vsel %vm1204, %v952, -inf
        %1212 = vmax.xlane.f32.xlu0 %v1211
        %v1213 = vpop.xlane.xlu0 %1212
        %v1214 = vsel %vm1204, %v955, -inf
        %1215 = vmax.xlane.f32.xlu0 %v1214
        %v1216 = vpop.xlane.xlu0 %1215
        %v1217 = vsel %vm1204, %v993, -inf
        %1218 = vmax.xlane.f32.xlu0 %v1217
        %v1219 = vpop.xlane.xlu0 %1218
        %v1220 = vsel %vm1204, %v996, -inf
        %1221 = vmax.xlane.f32.xlu0 %v1220
        %v1222 = vpop.xlane.xlu0 %1221
        %v1223 = vsel %vm1204, %v1034, -inf
        %1224 = vmax.xlane.f32.xlu0 %v1223
        %v1225 = vpop.xlane.xlu0 %1224
        %v1226 = vsel %vm1204, %v1037, -inf
        %1227 = vmax.xlane.f32.xlu0 %v1226
        %v1228 = vpop.xlane.xlu0 %1227
        %v1229 = vsel %vm1204, %v1075, -inf
        %1230 = vmax.xlane.f32.xlu0 %v1229
        %v1231 = vpop.xlane.xlu0 %1230
        %v1232 = vsel %vm1204, %v1078, -inf
        %1233 = vmax.xlane.f32.xlu0 %v1232
        %v1234 = vpop.xlane.xlu0 %1233
        %v1235 = vsel %vm1204, %v1116, -inf
        %1236 = vmax.xlane.f32.xlu0 %v1235
        %v1237 = vpop.xlane.xlu0 %1236
        %v1238 = vsel %vm1204, %v1119, -inf
        %1239 = vmax.xlane.f32.xlu0 %v1238
        %v1240 = vpop.xlane.xlu0 %1239
        %v1241 = vsel %vm1204, %v1157, -inf
        %1242 = vmax.xlane.f32.xlu0 %v1241
        %v1243 = vpop.xlane.xlu0 %1242
        %v1244 = vsel %vm1204, %v1160, -inf
        %1245 = vmax.xlane.f32.xlu0 %v1244
        %v1246 = vpop.xlane.xlu0 %1245
        %v1247 = vsel %vm1204, %v1198, -inf
        %1248 = vmax.xlane.f32.xlu0 %v1247
        %v1249 = vpop.xlane.xlu0 %1248
        %v1250 = vsel %vm1204, %v1201, -inf
        %1251 = vmax.xlane.f32.xlu0 %v1250
        %v1252 = vpop.xlane.xlu0 %1251
        %v1253 = vsub.f32 %v911, %v1207
        %v1254 = vsub.f32 %v914, %v1210
        %v1255 = vsub.f32 %v952, %v1213
        %v1256 = vsub.f32 %v955, %v1216
        %v1257 = vsub.f32 %v993, %v1219
        %v1258 = vsub.f32 %v996, %v1222
        %v1259 = vsub.f32 %v1034, %v1225
        %v1260 = vsub.f32 %v1037, %v1228
        %v1261 = vsub.f32 %v1075, %v1231
        %v1262 = vsub.f32 %v1078, %v1234
        %v1263 = vsub.f32 %v1116, %v1237
        %v1264 = vsub.f32 %v1119, %v1240
        %v1265 = vsub.f32 %v1157, %v1243
        %v1266 = vsub.f32 %v1160, %v1246
        %v1267 = vsub.f32 %v1198, %v1249
        %v1268 = vsub.f32 %v1201, %v1252
        %v1269 = vmul.f32 %v1253, 1.442695
        %v1270 = vpow.pop %v1269
        %v1271 = vmul.f32 %v1254, 1.442695
        %v1272 = vpow.pop %v1271
        %v1273 = vmul.f32 %v1255, 1.442695
        %v1274 = vpow.pop %v1273
        %v1275 = vmul.f32 %v1256, 1.442695
        %v1276 = vpow.pop %v1275
        %v1277 = vmul.f32 %v1257, 1.442695
        %v1278 = vpow.pop %v1277
        %v1279 = vmul.f32 %v1258, 1.442695
        %v1280 = vpow.pop %v1279
        %v1281 = vmul.f32 %v1259, 1.442695
        %v1282 = vpow.pop %v1281
        %v1283 = vmul.f32 %v1260, 1.442695
        %v1284 = vpow.pop %v1283
        %v1285 = vmul.f32 %v1261, 1.442695
        %v1286 = vpow.pop %v1285
        %v1287 = vmul.f32 %v1262, 1.442695
        %v1288 = vpow.pop %v1287
        %v1289 = vmul.f32 %v1263, 1.442695
        %v1290 = vpow.pop %v1289
        %v1291 = vmul.f32 %v1264, 1.442695
        %v1292 = vpow.pop %v1291
        %v1293 = vmul.f32 %v1265, 1.442695
        %v1294 = vpow.pop %v1293
        %v1295 = vmul.f32 %v1266, 1.442695
        %v1296 = vpow.pop %v1295
        %v1297 = vmul.f32 %v1267, 1.442695
        %v1298 = vpow.pop %v1297
        %v1299 = vmul.f32 %v1268, 1.442695
        %v1300 = vpow.pop %v1299
        %v1301 = vsel %vm1204, %v1270, 0.0
        %1302 = vadd.xlane.f32.xlu0 %v1301
        %v1303 = vpop.xlane.xlu0 %1302
        %v1304 = vsel %vm1204, %v1272, 0.0
        %1305 = vadd.xlane.f32.xlu0 %v1304
        %v1306 = vpop.xlane.xlu0 %1305
        %v1307 = vsel %vm1204, %v1274, 0.0
        %1308 = vadd.xlane.f32.xlu0 %v1307
        %v1309 = vpop.xlane.xlu0 %1308
        %v1310 = vsel %vm1204, %v1276, 0.0
        %1311 = vadd.xlane.f32.xlu0 %v1310
        %v1312 = vpop.xlane.xlu0 %1311
        %v1313 = vsel %vm1204, %v1278, 0.0
        %1314 = vadd.xlane.f32.xlu0 %v1313
        %v1315 = vpop.xlane.xlu0 %1314
        %v1316 = vsel %vm1204, %v1280, 0.0
        %1317 = vadd.xlane.f32.xlu0 %v1316
        %v1318 = vpop.xlane.xlu0 %1317
        %v1319 = vsel %vm1204, %v1282, 0.0
        %1320 = vadd.xlane.f32.xlu0 %v1319
        %v1321 = vpop.xlane.xlu0 %1320
        %v1322 = vsel %vm1204, %v1284, 0.0
        %1323 = vadd.xlane.f32.xlu0 %v1322
        %v1324 = vpop.xlane.xlu0 %1323
        %v1325 = vsel %vm1204, %v1286, 0.0
        %1326 = vadd.xlane.f32.xlu0 %v1325
        %v1327 = vpop.xlane.xlu0 %1326
        %v1328 = vsel %vm1204, %v1288, 0.0
        %1329 = vadd.xlane.f32.xlu0 %v1328
        %v1330 = vpop.xlane.xlu0 %1329
        %v1331 = vsel %vm1204, %v1290, 0.0
        %1332 = vadd.xlane.f32.xlu0 %v1331
        %v1333 = vpop.xlane.xlu0 %1332
        %v1334 = vsel %vm1204, %v1292, 0.0
        %1335 = vadd.xlane.f32.xlu0 %v1334
        %v1336 = vpop.xlane.xlu0 %1335
        %v1337 = vsel %vm1204, %v1294, 0.0
        %1338 = vadd.xlane.f32.xlu0 %v1337
        %v1339 = vpop.xlane.xlu0 %1338
        %v1340 = vsel %vm1204, %v1296, 0.0
        %1341 = vadd.xlane.f32.xlu0 %v1340
        %v1342 = vpop.xlane.xlu0 %1341
        %v1343 = vsel %vm1204, %v1298, 0.0
        %1344 = vadd.xlane.f32.xlu0 %v1343
        %v1345 = vpop.xlane.xlu0 %1344
        %v1346 = vsel %vm1204, %v1300, 0.0
        %1347 = vadd.xlane.f32.xlu0 %v1346
        %v1348 = vpop.xlane.xlu0 %1347
        %v1349 = vrcp.pop %v1303
        %v1350 = vrcp.pop %v1306
        %v1351 = vrcp.pop %v1309
        %v1352 = vrcp.pop %v1312
        %v1353 = vrcp.pop %v1315
        %v1354 = vrcp.pop %v1318
        %v1355 = vrcp.pop %v1321
        %v1356 = vrcp.pop %v1324
        %v1357 = vrcp.pop %v1327
        %v1358 = vrcp.pop %v1330
        %v1359 = vrcp.pop %v1333
        %v1360 = vrcp.pop %v1336
        %v1361 = vrcp.pop %v1339
        %v1362 = vrcp.pop %v1342
        %v1363 = vrcp.pop %v1345
        %v1364 = vrcp.pop %v1348
        %v1365 = vmul.f32 %v1270, %v1349
        %v1366 = vmul.f32 %v1272, %v1350
        %v1367 = vmul.f32 %v1274, %v1351
        %v1368 = vmul.f32 %v1276, %v1352
        %v1369 = vmul.f32 %v1278, %v1353
        %v1370 = vmul.f32 %v1280, %v1354
        %v1371 = vmul.f32 %v1282, %v1355
        %v1372 = vmul.f32 %v1284, %v1356
        %v1373 = vmul.f32 %v1286, %v1357
        %v1374 = vmul.f32 %v1288, %v1358
        %v1375 = vmul.f32 %v1290, %v1359
        %v1376 = vmul.f32 %v1292, %v1360
        %v1377 = vmul.f32 %v1294, %v1361
        %v1378 = vmul.f32 %v1296, %v1362
        %v1379 = vmul.f32 %v1298, %v1363
        %v1380 = vmul.f32 %v1300, %v1364
        %v1381 = vpack.c.bf16 %v1366, %v1365
        %v1382 = vpack.c.bf16 %v1368, %v1367
        %v1383 = vpack.c.bf16 %v1370, %v1369
        %v1384 = vpack.c.bf16 %v1372, %v1371
        %v1385 = vpack.c.bf16 %v1374, %v1373
        %v1386 = vpack.c.bf16 %v1376, %v1375
        %v1387 = vpack.c.bf16 %v1378, %v1377
        %v1388 = vpack.c.bf16 %v1380, %v1379
        %v1389 = vpack.c.bf16 %v801, %v798
        %v1390 = vpack.c.bf16 %v809, %v806
        %v1391 = vpack.c.bf16 %v817, %v814
        %v1392 = vpack.c.bf16 %v825, %v822
        %v1393 = vpack.c.bf16 %v833, %v830
        %v1394 = vpack.c.bf16 %v841, %v838
        %v1395 = vpack.c.bf16 %v849, %v846
        %v1396 = vpack.c.bf16 %v857, %v854
        %v1398 = vsel %vm1204, %v1381, 0
        %1400 = vmatprep.subr.bf16.mxu0 0
        %1401 = vmatpush1.bf16.msra.mxu0 %v1389
        %1402 = vmatprep.subr.bf16.mxu0 0
        %1403 = vmatpush1.bf16.msra.mxu0 0
        %1404 = vmatprep.subr.bf16.mxu0 0
        %1405 = vmatpush1.bf16.msra.mxu0 0
        %1406 = vmatprep.subr.bf16.mxu0 0
        %1407 = vmatpush1.bf16.msra.mxu0 0
        %1408 = vmatprep.subr.bf16.mxu0 0
        %1409 = vmatpush1.bf16.msra.mxu0 0
        %1410 = vmatprep.subr.bf16.mxu0 0
        %1411 = vmatpush1.bf16.msra.mxu0 0
        %1412 = vmatprep.subr.bf16.mxu0 0
        %1413 = vmatpush1.bf16.msra.mxu0 0
        %1414 = vmatprep.subr.bf16.mxu0 0
        %1415 = vmatpush1.bf16.msra.mxu0 0
        %1416 = vmatprep.subr.bf16.mxu0 0
        %1417 = vmatpush1.bf16.msra.mxu0 0
        %1418 = vmatprep.subr.bf16.mxu0 0
        %1419 = vmatpush1.bf16.msra.mxu0 0
        %1420 = vmatprep.subr.bf16.mxu0 0
        %1421 = vmatpush1.bf16.msra.mxu0 0
        %1422 = vmatprep.subr.bf16.mxu0 0
        %1423 = vmatpush1.bf16.msra.mxu0 0
        %1424 = vmatprep.subr.bf16.mxu0 0
        %1425 = vmatpush1.bf16.msra.mxu0 0
        %1426 = vmatprep.subr.bf16.mxu0 0
        %1427 = vmatpush1.bf16.msra.mxu0 0
        %1428 = vmatprep.subr.bf16.mxu0 0
        %1429 = vmatpush1.bf16.msra.mxu0 0
        %1430 = vmatprep.subr.bf16.mxu0 0
        %1431 = vmatpush1.bf16.msra.mxu0 0
        %1432 = vmatprep.mubr.bf16.mxu0 0
        %1433 = vmatmul.mubr.bf16.gmra.mrb[0].mxu0 %v1398
        %v1434 = vpop.f32.mrb[0].mxu0
        %v1435 = vadd.f32 0.0, %v1434
        %v1436 = vpop.f32.mrb[0].mxu0
        %v1437 = vpop.f32.mrb[0].mxu0
        %v1438 = vadd.f32 0.0, %v1437
        %v1439 = vpop.f32.mrb[0].mxu0
        %1440 = vdwg.mxu0
        %v1442 = vsel %vm1204, %v1382, 0
        %1444 = vmatprep.subr.bf16.mxu0 0
        %1445 = vmatpush1.bf16.msra.mxu0 %v1390
        %1446 = vmatprep.subr.bf16.mxu0 0
        %1447 = vmatpush1.bf16.msra.mxu0 0
        %1448 = vmatprep.subr.bf16.mxu0 0
        %1449 = vmatpush1.bf16.msra.mxu0 0
        %1450 = vmatprep.subr.bf16.mxu0 0
        %1451 = vmatpush1.bf16.msra.mxu0 0
        %1452 = vmatprep.subr.bf16.mxu0 0
        %1453 = vmatpush1.bf16.msra.mxu0 0
        %1454 = vmatprep.subr.bf16.mxu0 0
        %1455 = vmatpush1.bf16.msra.mxu0 0
        %1456 = vmatprep.subr.bf16.mxu0 0
        %1457 = vmatpush1.bf16.msra.mxu0 0
        %1458 = vmatprep.subr.bf16.mxu0 0
        %1459 = vmatpush1.bf16.msra.mxu0 0
        %1460 = vmatprep.subr.bf16.mxu0 0
        %1461 = vmatpush1.bf16.msra.mxu0 0
        %1462 = vmatprep.subr.bf16.mxu0 0
        %1463 = vmatpush1.bf16.msra.mxu0 0
        %1464 = vmatprep.subr.bf16.mxu0 0
        %1465 = vmatpush1.bf16.msra.mxu0 0
        %1466 = vmatprep.subr.bf16.mxu0 0
        %1467 = vmatpush1.bf16.msra.mxu0 0
        %1468 = vmatprep.subr.bf16.mxu0 0
        %1469 = vmatpush1.bf16.msra.mxu0 0
        %1470 = vmatprep.subr.bf16.mxu0 0
        %1471 = vmatpush1.bf16.msra.mxu0 0
        %1472 = vmatprep.subr.bf16.mxu0 0
        %1473 = vmatpush1.bf16.msra.mxu0 0
        %1474 = vmatprep.subr.bf16.mxu0 0
        %1475 = vmatpush1.bf16.msra.mxu0 0
        %1476 = vmatprep.mubr.bf16.mxu0 0
        %1477 = vmatmul.mubr.bf16.gmra.mrb[0].mxu0 %v1442
        %v1478 = vpop.f32.mrb[0].mxu0
        %v1479 = vadd.f32 0.0, %v1478
        %v1480 = vpop.f32.mrb[0].mxu0
        %v1481 = vpop.f32.mrb[0].mxu0
        %v1482 = vadd.f32 0.0, %v1481
        %v1483 = vpop.f32.mrb[0].mxu0
        %1484 = vdwg.mxu0
        %v1486 = vsel %vm1204, %v1383, 0
        %1488 = vmatprep.subr.bf16.mxu0 0
        %1489 = vmatpush1.bf16.msra.mxu0 %v1391
        %1490 = vmatprep.subr.bf16.mxu0 0
        %1491 = vmatpush1.bf16.msra.mxu0 0
        %1492 = vmatprep.subr.bf16.mxu0 0
        %1493 = vmatpush1.bf16.msra.mxu0 0
        %1494 = vmatprep.subr.bf16.mxu0 0
        %1495 = vmatpush1.bf16.msra.mxu0 0
        %1496 = vmatprep.subr.bf16.mxu0 0
        %1497 = vmatpush1.bf16.msra.mxu0 0
        %1498 = vmatprep.subr.bf16.mxu0 0
        %1499 = vmatpush1.bf16.msra.mxu0 0
        %1500 = vmatprep.subr.bf16.mxu0 0
        %1501 = vmatpush1.bf16.msra.mxu0 0
        %1502 = vmatprep.subr.bf16.mxu0 0
        %1503 = vmatpush1.bf16.msra.mxu0 0
        %1504 = vmatprep.subr.bf16.mxu0 0
        %1505 = vmatpush1.bf16.msra.mxu0 0
        %1506 = vmatprep.subr.bf16.mxu0 0
        %1507 = vmatpush1.bf16.msra.mxu0 0
        %1508 = vmatprep.subr.bf16.mxu0 0
        %1509 = vmatpush1.bf16.msra.mxu0 0
        %1510 = vmatprep.subr.bf16.mxu0 0
        %1511 = vmatpush1.bf16.msra.mxu0 0
        %1512 = vmatprep.subr.bf16.mxu0 0
        %1513 = vmatpush1.bf16.msra.mxu0 0
        %1514 = vmatprep.subr.bf16.mxu0 0
        %1515 = vmatpush1.bf16.msra.mxu0 0
        %1516 = vmatprep.subr.bf16.mxu0 0
        %1517 = vmatpush1.bf16.msra.mxu0 0
        %1518 = vmatprep.subr.bf16.mxu0 0
        %1519 = vmatpush1.bf16.msra.mxu0 0
        %1520 = vmatprep.mubr.bf16.mxu0 0
        %1521 = vmatmul.mubr.bf16.gmra.mrb[0].mxu0 %v1486
        %v1522 = vpop.f32.mrb[0].mxu0
        %v1523 = vadd.f32 0.0, %v1522
        %v1524 = vpop.f32.mrb[0].mxu0
        %v1525 = vpop.f32.mrb[0].mxu0
        %v1526 = vadd.f32 0.0, %v1525
        %v1527 = vpop.f32.mrb[0].mxu0
        %1528 = vdwg.mxu0
        %v1530 = vsel %vm1204, %v1384, 0
        %1532 = vmatprep.subr.bf16.mxu0 0
        %1533 = vmatpush1.bf16.msra.mxu0 %v1392
        %1534 = vmatprep.subr.bf16.mxu0 0
        %1535 = vmatpush1.bf16.msra.mxu0 0
        %1536 = vmatprep.subr.bf16.mxu0 0
        %1537 = vmatpush1.bf16.msra.mxu0 0
        %1538 = vmatprep.subr.bf16.mxu0 0
        %1539 = vmatpush1.bf16.msra.mxu0 0
        %1540 = vmatprep.subr.bf16.mxu0 0
        %1541 = vmatpush1.bf16.msra.mxu0 0
        %1542 = vmatprep.subr.bf16.mxu0 0
        %1543 = vmatpush1.bf16.msra.mxu0 0
        %1544 = vmatprep.subr.bf16.mxu0 0
        %1545 = vmatpush1.bf16.msra.mxu0 0
        %1546 = vmatprep.subr.bf16.mxu0 0
        %1547 = vmatpush1.bf16.msra.mxu0 0
        %1548 = vmatprep.subr.bf16.mxu0 0
        %1549 = vmatpush1.bf16.msra.mxu0 0
        %1550 = vmatprep.subr.bf16.mxu0 0
        %1551 = vmatpush1.bf16.msra.mxu0 0
        %1552 = vmatprep.subr.bf16.mxu0 0
        %1553 = vmatpush1.bf16.msra.mxu0 0
        %1554 = vmatprep.subr.bf16.mxu0 0
        %1555 = vmatpush1.bf16.msra.mxu0 0
        %1556 = vmatprep.subr.bf16.mxu0 0
        %1557 = vmatpush1.bf16.msra.mxu0 0
        %1558 = vmatprep.subr.bf16.mxu0 0
        %1559 = vmatpush1.bf16.msra.mxu0 0
        %1560 = vmatprep.subr.bf16.mxu0 0
        %1561 = vmatpush1.bf16.msra.mxu0 0
        %1562 = vmatprep.subr.bf16.mxu0 0
        %1563 = vmatpush1.bf16.msra.mxu0 0
        %1564 = vmatprep.mubr.bf16.mxu0 0
        %1565 = vmatmul.mubr.bf16.gmra.mrb[0].mxu0 %v1530
        %v1566 = vpop.f32.mrb[0].mxu0
        %v1567 = vadd.f32 0.0, %v1566
        %v1568 = vpop.f32.mrb[0].mxu0
        %v1569 = vpop.f32.mrb[0].mxu0
        %v1570 = vadd.f32 0.0, %v1569
        %v1571 = vpop.f32.mrb[0].mxu0
        %1572 = vdwg.mxu0
        %v1574 = vsel %vm1204, %v1385, 0
        %1576 = vmatprep.subr.bf16.mxu0 0
        %1577 = vmatpush1.bf16.msra.mxu0 %v1393
        %1578 = vmatprep.subr.bf16.mxu0 0
        %1579 = vmatpush1.bf16.msra.mxu0 0
        %1580 = vmatprep.subr.bf16.mxu0 0
        %1581 = vmatpush1.bf16.msra.mxu0 0
        %1582 = vmatprep.subr.bf16.mxu0 0
        %1583 = vmatpush1.bf16.msra.mxu0 0
        %1584 = vmatprep.subr.bf16.mxu0 0
        %1585 = vmatpush1.bf16.msra.mxu0 0
        %1586 = vmatprep.subr.bf16.mxu0 0
        %1587 = vmatpush1.bf16.msra.mxu0 0
        %1588 = vmatprep.subr.bf16.mxu0 0
        %1589 = vmatpush1.bf16.msra.mxu0 0
        %1590 = vmatprep.subr.bf16.mxu0 0
        %1591 = vmatpush1.bf16.msra.mxu0 0
        %1592 = vmatprep.subr.bf16.mxu0 0
        %1593 = vmatpush1.bf16.msra.mxu0 0
        %1594 = vmatprep.subr.bf16.mxu0 0
        %1595 = vmatpush1.bf16.msra.mxu0 0
        %1596 = vmatprep.subr.bf16.mxu0 0
        %1597 = vmatpush1.bf16.msra.mxu0 0
        %1598 = vmatprep.subr.bf16.mxu0 0
        %1599 = vmatpush1.bf16.msra.mxu0 0
        %1600 = vmatprep.subr.bf16.mxu0 0
        %1601 = vmatpush1.bf16.msra.mxu0 0
        %1602 = vmatprep.subr.bf16.mxu0 0
        %1603 = vmatpush1.bf16.msra.mxu0 0
        %1604 = vmatprep.subr.bf16.mxu0 0
        %1605 = vmatpush1.bf16.msra.mxu0 0
        %1606 = vmatprep.subr.bf16.mxu0 0
        %1607 = vmatpush1.bf16.msra.mxu0 0
        %1608 = vmatprep.mubr.bf16.mxu0 0
        %1609 = vmatmul.mubr.bf16.gmra.mrb[0].mxu0 %v1574
        %v1610 = vpop.f32.mrb[0].mxu0
        %v1611 = vadd.f32 0.0, %v1610
        %v1612 = vpop.f32.mrb[0].mxu0
        %v1613 = vpop.f32.mrb[0].mxu0
        %v1614 = vadd.f32 0.0, %v1613
        %v1615 = vpop.f32.mrb[0].mxu0
        %1616 = vdwg.mxu0
        %v1618 = vsel %vm1204, %v1386, 0
        %1620 = vmatprep.subr.bf16.mxu0 0
        %1621 = vmatpush1.bf16.msra.mxu0 %v1394
        %1622 = vmatprep.subr.bf16.mxu0 0
        %1623 = vmatpush1.bf16.msra.mxu0 0
        %1624 = vmatprep.subr.bf16.mxu0 0
        %1625 = vmatpush1.bf16.msra.mxu0 0
        %1626 = vmatprep.subr.bf16.mxu0 0
        %1627 = vmatpush1.bf16.msra.mxu0 0
        %1628 = vmatprep.subr.bf16.mxu0 0
        %1629 = vmatpush1.bf16.msra.mxu0 0
        %1630 = vmatprep.subr.bf16.mxu0 0
        %1631 = vmatpush1.bf16.msra.mxu0 0
        %1632 = vmatprep.subr.bf16.mxu0 0
        %1633 = vmatpush1.bf16.msra.mxu0 0
        %1634 = vmatprep.subr.bf16.mxu0 0
        %1635 = vmatpush1.bf16.msra.mxu0 0
        %1636 = vmatprep.subr.bf16.mxu0 0
        %1637 = vmatpush1.bf16.msra.mxu0 0
        %1638 = vmatprep.subr.bf16.mxu0 0
        %1639 = vmatpush1.bf16.msra.mxu0 0
        %1640 = vmatprep.subr.bf16.mxu0 0
        %1641 = vmatpush1.bf16.msra.mxu0 0
        %1642 = vmatprep.subr.bf16.mxu0 0
        %1643 = vmatpush1.bf16.msra.mxu0 0
        %1644 = vmatprep.subr.bf16.mxu0 0
        %1645 = vmatpush1.bf16.msra.mxu0 0
        %1646 = vmatprep.subr.bf16.mxu0 0
        %1647 = vmatpush1.bf16.msra.mxu0 0
        %1648 = vmatprep.subr.bf16.mxu0 0
        %1649 = vmatpush1.bf16.msra.mxu0 0
        %1650 = vmatprep.subr.bf16.mxu0 0
        %1651 = vmatpush1.bf16.msra.mxu0 0
        %1652 = vmatprep.mubr.bf16.mxu0 0
        %1653 = vmatmul.mubr.bf16.gmra.mrb[0].mxu0 %v1618
        %v1654 = vpop.f32.mrb[0].mxu0
        %v1655 = vadd.f32 0.0, %v1654
        %v1656 = vpop.f32.mrb[0].mxu0
        %v1657 = vpop.f32.mrb[0].mxu0
        %v1658 = vadd.f32 0.0, %v1657
        %v1659 = vpop.f32.mrb[0].mxu0
        %1660 = vdwg.mxu0
        %v1662 = vsel %vm1204, %v1387, 0
        %1664 = vmatprep.subr.bf16.mxu0 0
        %1665 = vmatpush1.bf16.msra.mxu0 %v1395
        %1666 = vmatprep.subr.bf16.mxu0 0
        %1667 = vmatpush1.bf16.msra.mxu0 0
        %1668 = vmatprep.subr.bf16.mxu0 0
        %1669 = vmatpush1.bf16.msra.mxu0 0
        %1670 = vmatprep.subr.bf16.mxu0 0
        %1671 = vmatpush1.bf16.msra.mxu0 0
        %1672 = vmatprep.subr.bf16.mxu0 0
        %1673 = vmatpush1.bf16.msra.mxu0 0
        %1674 = vmatprep.subr.bf16.mxu0 0
        %1675 = vmatpush1.bf16.msra.mxu0 0
        %1676 = vmatprep.subr.bf16.mxu0 0
        %1677 = vmatpush1.bf16.msra.mxu0 0
        %1678 = vmatprep.subr.bf16.mxu0 0
        %1679 = vmatpush1.bf16.msra.mxu0 0
        %1680 = vmatprep.subr.bf16.mxu0 0
        %1681 = vmatpush1.bf16.msra.mxu0 0
        %1682 = vmatprep.subr.bf16.mxu0 0
        %1683 = vmatpush1.bf16.msra.mxu0 0
        %1684 = vmatprep.subr.bf16.mxu0 0
        %1685 = vmatpush1.bf16.msra.mxu0 0
        %1686 = vmatprep.subr.bf16.mxu0 0
        %1687 = vmatpush1.bf16.msra.mxu0 0
        %1688 = vmatprep.subr.bf16.mxu0 0
        %1689 = vmatpush1.bf16.msra.mxu0 0
        %1690 = vmatprep.subr.bf16.mxu0 0
        %1691 = vmatpush1.bf16.msra.mxu0 0
        %1692 = vmatprep.subr.bf16.mxu0 0
        %1693 = vmatpush1.bf16.msra.mxu0 0
        %1694 = vmatprep.subr.bf16.mxu0 0
        %1695 = vmatpush1.bf16.msra.mxu0 0
        %1696 = vmatprep.mubr.bf16.mxu0 0
        %1697 = vmatmul.mubr.bf16.gmra.mrb[0].mxu0 %v1662
        %v1698 = vpop.f32.mrb[0].mxu0
        %v1699 = vadd.f32 0.0, %v1698
        %v1700 = vpop.f32.mrb[0].mxu0
        %v1701 = vpop.f32.mrb[0].mxu0
        %v1702 = vadd.f32 0.0, %v1701
        %v1703 = vpop.f32.mrb[0].mxu0
        %1704 = vdwg.mxu0
        %v1706 = vsel %vm1204, %v1388, 0
        %1708 = vmatprep.subr.bf16.mxu0 0
        %1709 = vmatpush1.bf16.msra.mxu0 %v1396
        %1710 = vmatprep.subr.bf16.mxu0 0
        %1711 = vmatpush1.bf16.msra.mxu0 0
        %1712 = vmatprep.subr.bf16.mxu0 0
        %1713 = vmatpush1.bf16.msra.mxu0 0
        %1714 = vmatprep.subr.bf16.mxu0 0
        %1715 = vmatpush1.bf16.msra.mxu0 0
        %1716 = vmatprep.subr.bf16.mxu0 0
        %1717 = vmatpush1.bf16.msra.mxu0 0
        %1718 = vmatprep.subr.bf16.mxu0 0
        %1719 = vmatpush1.bf16.msra.mxu0 0
        %1720 = vmatprep.subr.bf16.mxu0 0
        %1721 = vmatpush1.bf16.msra.mxu0 0
        %1722 = vmatprep.subr.bf16.mxu0 0
        %1723 = vmatpush1.bf16.msra.mxu0 0
        %1724 = vmatprep.subr.bf16.mxu0 0
        %1725 = vmatpush1.bf16.msra.mxu0 0
        %1726 = vmatprep.subr.bf16.mxu0 0
        %1727 = vmatpush1.bf16.msra.mxu0 0
        %1728 = vmatprep.subr.bf16.mxu0 0
        %1729 = vmatpush1.bf16.msra.mxu0 0
        %1730 = vmatprep.subr.bf16.mxu0 0
        %1731 = vmatpush1.bf16.msra.mxu0 0
        %1732 = vmatprep.subr.bf16.mxu0 0
        %1733 = vmatpush1.bf16.msra.mxu0 0
        %1734 = vmatprep.subr.bf16.mxu0 0
        %1735 = vmatpush1.bf16.msra.mxu0 0
        %1736 = vmatprep.subr.bf16.mxu0 0
        %1737 = vmatpush1.bf16.msra.mxu0 0
        %1738 = vmatprep.subr.bf16.mxu0 0
        %1739 = vmatpush1.bf16.msra.mxu0 0
        %1740 = vmatprep.mubr.bf16.mxu0 0
        %1741 = vmatmul.mubr.bf16.gmra.mrb[0].mxu0 %v1706
        %v1742 = vpop.f32.mrb[0].mxu0
        %v1743 = vadd.f32 0.0, %v1742
        %v1744 = vpop.f32.mrb[0].mxu0
        %v1745 = vpop.f32.mrb[0].mxu0
        %v1746 = vadd.f32 0.0, %v1745
        %v1747 = vpop.f32.mrb[0].mxu0
        %1748 = vdwg.mxu0
        %v1749 = vpack.c.bf16 %v1438, %v1435
        %v1750 = vpack.c.bf16 %v1482, %v1479
        %v1751 = vpack.c.bf16 %v1526, %v1523
        %v1752 = vpack.c.bf16 %v1570, %v1567
        %v1753 = vpack.c.bf16 %v1614, %v1611
        %v1754 = vpack.c.bf16 %v1658, %v1655
        %v1755 = vpack.c.bf16 %v1702, %v1699
        %v1756 = vpack.c.bf16 %v1746, %v1743
        %v1757 = vld [vmem:[#allocation7] sm:$0xf]
        %v1758 = vld [vmem:[#allocation7 + $0x4] sm:$0xf]
        %v1759 = vld [vmem:[#allocation7 + $0x8] sm:$0xf]
        %v1760 = vld [vmem:[#allocation7 + $0xc] sm:$0xf]
        %v1761 = vld [vmem:[#allocation7 + $0x10] sm:$0xf]
        %v1762 = vld [vmem:[#allocation7 + $0x14] sm:$0xf]
        %v1763 = vld [vmem:[#allocation7 + $0x18] sm:$0xf]
        %v1764 = vld [vmem:[#allocation7 + $0x1c] sm:$0xf]
        %v1765 = vld [vmem:[#allocation7 + $0x20] sm:$0xf]
        %v1766 = vld [vmem:[#allocation7 + $0x24] sm:$0xf]
        %v1767 = vld [vmem:[#allocation7 + $0x28] sm:$0xf]
        %v1768 = vld [vmem:[#allocation7 + $0x2c] sm:$0xf]
        %v1769 = vld [vmem:[#allocation7 + $0x30] sm:$0xf]
        %v1770 = vld [vmem:[#allocation7 + $0x34] sm:$0xf]
        %v1771 = vld [vmem:[#allocation7 + $0x38] sm:$0xf]
        %v1772 = vld [vmem:[#allocation7 + $0x3c] sm:$0xf]
        %v1789 = vunpack.c.l.b16 %v1757
        %v1790 = vunpack.c.l.b16 %v1758
        %v1791 = vunpack.c.l.b16 %v1759
        %v1792 = vunpack.c.l.b16 %v1760
        %v1793 = vunpack.c.l.b16 %v1761
        %v1794 = vunpack.c.l.b16 %v1762
        %v1795 = vunpack.c.l.b16 %v1763
        %v1796 = vunpack.c.l.b16 %v1764
        %v1797 = vunpack.c.l.b16 %v1765
        %v1798 = vunpack.c.l.b16 %v1766
        %v1799 = vunpack.c.l.b16 %v1767
        %v1800 = vunpack.c.l.b16 %v1768
        %v1801 = vunpack.c.l.b16 %v1769
        %v1802 = vunpack.c.l.b16 %v1770
        %v1803 = vunpack.c.l.b16 %v1771
        %v1804 = vunpack.c.l.b16 %v1772
        %v1805 = vpack.c.b16 %v1790, %v1789
        %v1806 = vpack.c.b16 %v1792, %v1791
        %v1807 = vpack.c.b16 %v1794, %v1793
        %v1808 = vpack.c.b16 %v1796, %v1795
        %v1809 = vpack.c.b16 %v1798, %v1797
        %v1810 = vpack.c.b16 %v1800, %v1799
        %v1811 = vpack.c.b16 %v1802, %v1801
        %v1812 = vpack.c.b16 %v1804, %v1803
        %1821 = vmatprep.subr.bf16.mxu0 0
        %1822 = vmatpush1.bf16.msra.mxu0 %v1805
        %1823 = vmatprep.subr.bf16.mxu0 0
        %1824 = vmatpush1.bf16.msra.mxu0 %v1806
        %1825 = vmatprep.subr.bf16.mxu0 0
        %1826 = vmatpush1.bf16.msra.mxu0 %v1807
        %1827 = vmatprep.subr.bf16.mxu0 0
        %1828 = vmatpush1.bf16.msra.mxu0 %v1808
        %1829 = vmatprep.subr.bf16.mxu0 0
        %1830 = vmatpush1.bf16.msra.mxu0 %v1809
        %1831 = vmatprep.subr.bf16.mxu0 0
        %1832 = vmatpush1.bf16.msra.mxu0 %v1810
        %1833 = vmatprep.subr.bf16.mxu0 0
        %1834 = vmatpush1.bf16.msra.mxu0 %v1811
        %1835 = vmatprep.subr.bf16.mxu0 0
        %1836 = vmatpush1.bf16.msra.mxu0 %v1812
        %1837 = vmatprep.subr.bf16.mxu0 0
        %1838 = vmatpush1.bf16.msra.mxu0 0
        %1839 = vmatprep.subr.bf16.mxu0 0
        %1840 = vmatpush1.bf16.msra.mxu0 0
        %1841 = vmatprep.subr.bf16.mxu0 0
        %1842 = vmatpush1.bf16.msra.mxu0 0
        %1843 = vmatprep.subr.bf16.mxu0 0
        %1844 = vmatpush1.bf16.msra.mxu0 0
        %1845 = vmatprep.subr.bf16.mxu0 0
        %1846 = vmatpush1.bf16.msra.mxu0 0
        %1847 = vmatprep.subr.bf16.mxu0 0
        %1848 = vmatpush1.bf16.msra.mxu0 0
        %1849 = vmatprep.subr.bf16.mxu0 0
        %1850 = vmatpush1.bf16.msra.mxu0 0
        %1851 = vmatprep.subr.bf16.mxu0 0
        %1852 = vmatpush1.bf16.msra.mxu0 0
        %1853 = vmatprep.mubr.bf16.mxu0 0
        %1854 = vmatmul.mubr.bf16.gmra.mrb[0].mxu0 %v1749
        %v1855 = vpop.f32.mrb[0].mxu0
        %v1856 = vadd.f32 0.0, %v1855
        %v1857 = vpop.f32.mrb[0].mxu0
        %v1858 = vpop.f32.mrb[0].mxu0
        %v1859 = vadd.f32 0.0, %v1858
        %v1860 = vpop.f32.mrb[0].mxu0
        %1861 = vmatprep.mubr.bf16.mxu0 0
        %1862 = vmatmul.mubr.bf16.gmra.mrb[0].mxu0 %v1750
        %v1863 = vpop.f32.mrb[0].mxu0
        %v1864 = vadd.f32 0.0, %v1863
        %v1865 = vpop.f32.mrb[0].mxu0
        %v1866 = vpop.f32.mrb[0].mxu0
        %v1867 = vadd.f32 0.0, %v1866
        %v1868 = vpop.f32.mrb[0].mxu0
        %1869 = vmatprep.mubr.bf16.mxu0 0
        %1870 = vmatmul.mubr.bf16.gmra.mrb[0].mxu0 %v1751
        %v1871 = vpop.f32.mrb[0].mxu0
        %v1872 = vadd.f32 0.0, %v1871
        %v1873 = vpop.f32.mrb[0].mxu0
        %v1874 = vpop.f32.mrb[0].mxu0
        %v1875 = vadd.f32 0.0, %v1874
        %v1876 = vpop.f32.mrb[0].mxu0
        %1877 = vmatprep.mubr.bf16.mxu0 0
        %1878 = vmatmul.mubr.bf16.gmra.mrb[0].mxu0 %v1752
        %v1879 = vpop.f32.mrb[0].mxu0
        %v1880 = vadd.f32 0.0, %v1879
        %v1881 = vpop.f32.mrb[0].mxu0
        %v1882 = vpop.f32.mrb[0].mxu0
        %v1883 = vadd.f32 0.0, %v1882
        %v1884 = vpop.f32.mrb[0].mxu0
        %1885 = vmatprep.mubr.bf16.mxu0 0
        %1886 = vmatmul.mubr.bf16.gmra.mrb[0].mxu0 %v1753
        %v1887 = vpop.f32.mrb[0].mxu0
        %v1888 = vadd.f32 0.0, %v1887
        %v1889 = vpop.f32.mrb[0].mxu0
        %v1890 = vpop.f32.mrb[0].mxu0
        %v1891 = vadd.f32 0.0, %v1890
        %v1892 = vpop.f32.mrb[0].mxu0
        %1893 = vmatprep.mubr.bf16.mxu0 0
        %1894 = vmatmul.mubr.bf16.gmra.mrb[0].mxu0 %v1754
        %v1895 = vpop.f32.mrb[0].mxu0
        %v1896 = vadd.f32 0.0, %v1895
        %v1897 = vpop.f32.mrb[0].mxu0
        %v1898 = vpop.f32.mrb[0].mxu0
        %v1899 = vadd.f32 0.0, %v1898
        %v1900 = vpop.f32.mrb[0].mxu0
        %1901 = vmatprep.mubr.bf16.mxu0 0
        %1902 = vmatmul.mubr.bf16.gmra.mrb[0].mxu0 %v1755
        %v1903 = vpop.f32.mrb[0].mxu0
        %v1904 = vadd.f32 0.0, %v1903
        %v1905 = vpop.f32.mrb[0].mxu0
        %v1906 = vpop.f32.mrb[0].mxu0
        %v1907 = vadd.f32 0.0, %v1906
        %v1908 = vpop.f32.mrb[0].mxu0
        %1909 = vmatprep.mubr.bf16.mxu0 0
        %1910 = vmatmul.mubr.bf16.gmra.mrb[0].mxu0 %v1756
        %v1911 = vpop.f32.mrb[0].mxu0
        %v1912 = vadd.f32 0.0, %v1911
        %v1913 = vpop.f32.mrb[0].mxu0
        %v1914 = vpop.f32.mrb[0].mxu0
        %v1915 = vadd.f32 0.0, %v1914
        %v1916 = vpop.f32.mrb[0].mxu0
        %1917 = vdwg.mxu0
        %v1918 = vadd.f32 %v466, %v1856
        %v1919 = vadd.f32 %v467, %v1859
        %v1920 = vadd.f32 %v468, %v1864
        %v1921 = vadd.f32 %v469, %v1867
        %v1922 = vadd.f32 %v470, %v1872
        %v1923 = vadd.f32 %v471, %v1875
        %v1924 = vadd.f32 %v472, %v1880
        %v1925 = vadd.f32 %v473, %v1883
        %v1926 = vadd.f32 %v474, %v1888
        %v1927 = vadd.f32 %v475, %v1891
        %v1928 = vadd.f32 %v476, %v1896
        %v1929 = vadd.f32 %v477, %v1899
        %v1930 = vadd.f32 %v478, %v1904
        %v1931 = vadd.f32 %v479, %v1907
        %v1932 = vadd.f32 %v480, %v1912
        %v1933 = vadd.f32 %v481, %v1915
        %v1934 = vld [vmem:[%s3] sm:$0x1]
        %v1935 = vld [vmem:[%s4] sm:$0x1]
        %1936 = vadd.xlane.f32.xlu0 %v1918
        %v1937 = vpop.xlane.xlu0 %1936
        %1938 = vadd.xlane.f32.xlu0 %v1919
        %v1939 = vpop.xlane.xlu0 %1938
        %1940 = vadd.xlane.f32.xlu0 %v1920
        %v1941 = vpop.xlane.xlu0 %1940
        %1942 = vadd.xlane.f32.xlu0 %v1921
        %v1943 = vpop.xlane.xlu0 %1942
        %1944 = vadd.xlane.f32.xlu0 %v1922
        %v1945 = vpop.xlane.xlu0 %1944
        %1946 = vadd.xlane.f32.xlu0 %v1923
        %v1947 = vpop.xlane.xlu0 %1946
        %1948 = vadd.xlane.f32.xlu0 %v1924
        %v1949 = vpop.xlane.xlu0 %1948
        %1950 = vadd.xlane.f32.xlu0 %v1925
        %v1951 = vpop.xlane.xlu0 %1950
        %1952 = vadd.xlane.f32.xlu0 %v1926
        %v1953 = vpop.xlane.xlu0 %1952
        %1954 = vadd.xlane.f32.xlu0 %v1927
        %v1955 = vpop.xlane.xlu0 %1954
        %1956 = vadd.xlane.f32.xlu0 %v1928
        %v1957 = vpop.xlane.xlu0 %1956
        %1958 = vadd.xlane.f32.xlu0 %v1929
        %v1959 = vpop.xlane.xlu0 %1958
        %1960 = vadd.xlane.f32.xlu0 %v1930
        %v1961 = vpop.xlane.xlu0 %1960
        %1962 = vadd.xlane.f32.xlu0 %v1931
        %v1963 = vpop.xlane.xlu0 %1962
        %1964 = vadd.xlane.f32.xlu0 %v1932
        %v1965 = vpop.xlane.xlu0 %1964
        %1966 = vadd.xlane.f32.xlu0 %v1933
        %v1967 = vpop.xlane.xlu0 %1966
        %v1968 = vrcp.pop 128.0
        %v1969 = vmul.f32 %v1937, %v1968
        %v1970 = vmul.f32 %v1939, %v1968
        %v1971 = vmul.f32 %v1941, %v1968
        %v1972 = vmul.f32 %v1943, %v1968
        %v1973 = vmul.f32 %v1945, %v1968
        %v1974 = vmul.f32 %v1947, %v1968
        %v1975 = vmul.f32 %v1949, %v1968
        %v1976 = vmul.f32 %v1951, %v1968
        %v1977 = vmul.f32 %v1953, %v1968
        %v1978 = vmul.f32 %v1955, %v1968
        %v1979 = vmul.f32 %v1957, %v1968
        %v1980 = vmul.f32 %v1959, %v1968
        %v1981 = vmul.f32 %v1961, %v1968
        %v1982 = vmul.f32 %v1963, %v1968
        %v1983 = vmul.f32 %v1965, %v1968
        %v1984 = vmul.f32 %v1967, %v1968
        %v1985 = vsub.f32 %v1918, %v1969
        %v1986 = vsub.f32 %v1919, %v1970
        %v1987 = vsub.f32 %v1920, %v1971
        %v1988 = vsub.f32 %v1921, %v1972
        %v1989 = vsub.f32 %v1922, %v1973
        %v1990 = vsub.f32 %v1923, %v1974
        %v1991 = vsub.f32 %v1924, %v1975
        %v1992 = vsub.f32 %v1925, %v1976
        %v1993 = vsub.f32 %v1926, %v1977
        %v1994 = vsub.f32 %v1927, %v1978
        %v1995 = vsub.f32 %v1928, %v1979
        %v1996 = vsub.f32 %v1929, %v1980
        %v1997 = vsub.f32 %v1930, %v1981
        %v1998 = vsub.f32 %v1931, %v1982
        %v1999 = vsub.f32 %v1932, %v1983
        %v2000 = vsub.f32 %v1933, %v1984
        %v2001 = vmul.f32 %v1985, %v1985
        %v2002 = vmul.f32 %v1986, %v1986
        %v2003 = vmul.f32 %v1987, %v1987
        %v2004 = vmul.f32 %v1988, %v1988
        %v2005 = vmul.f32 %v1989, %v1989
        %v2006 = vmul.f32 %v1990, %v1990
        %v2007 = vmul.f32 %v1991, %v1991
        %v2008 = vmul.f32 %v1992, %v1992
        %v2009 = vmul.f32 %v1993, %v1993
        %v2010 = vmul.f32 %v1994, %v1994
        %v2011 = vmul.f32 %v1995, %v1995
        %v2012 = vmul.f32 %v1996, %v1996
        %v2013 = vmul.f32 %v1997, %v1997
        %v2014 = vmul.f32 %v1998, %v1998
        %v2015 = vmul.f32 %v1999, %v1999
        %v2016 = vmul.f32 %v2000, %v2000
        %2017 = vadd.xlane.f32.xlu0 %v2001
        %v2018 = vpop.xlane.xlu0 %2017
        %2019 = vadd.xlane.f32.xlu0 %v2002
        %v2020 = vpop.xlane.xlu0 %2019
        %2021 = vadd.xlane.f32.xlu0 %v2003
        %v2022 = vpop.xlane.xlu0 %2021
        %2023 = vadd.xlane.f32.xlu0 %v2004
        %v2024 = vpop.xlane.xlu0 %2023
        %2025 = vadd.xlane.f32.xlu0 %v2005
        %v2026 = vpop.xlane.xlu0 %2025
        %2027 = vadd.xlane.f32.xlu0 %v2006
        %v2028 = vpop.xlane.xlu0 %2027
        %2029 = vadd.xlane.f32.xlu0 %v2007
        %v2030 = vpop.xlane.xlu0 %2029
        %2031 = vadd.xlane.f32.xlu0 %v2008
        %v2032 = vpop.xlane.xlu0 %2031
        %2033 = vadd.xlane.f32.xlu0 %v2009
        %v2034 = vpop.xlane.xlu0 %2033
        %2035 = vadd.xlane.f32.xlu0 %v2010
        %v2036 = vpop.xlane.xlu0 %2035
        %2037 = vadd.xlane.f32.xlu0 %v2011
        %v2038 = vpop.xlane.xlu0 %2037
        %2039 = vadd.xlane.f32.xlu0 %v2012
        %v2040 = vpop.xlane.xlu0 %2039
        %2041 = vadd.xlane.f32.xlu0 %v2013
        %v2042 = vpop.xlane.xlu0 %2041
        %2043 = vadd.xlane.f32.xlu0 %v2014
        %v2044 = vpop.xlane.xlu0 %2043
        %2045 = vadd.xlane.f32.xlu0 %v2015
        %v2046 = vpop.xlane.xlu0 %2045
        %2047 = vadd.xlane.f32.xlu0 %v2016
        %v2048 = vpop.xlane.xlu0 %2047
        %v2049 = vmul.f32 %v2018, %v1968
        %v2050 = vmul.f32 %v2020, %v1968
        %v2051 = vmul.f32 %v2022, %v1968
        %v2052 = vmul.f32 %v2024, %v1968
        %v2053 = vmul.f32 %v2026, %v1968
        %v2054 = vmul.f32 %v2028, %v1968
        %v2055 = vmul.f32 %v2030, %v1968
        %v2056 = vmul.f32 %v2032, %v1968
        %v2057 = vmul.f32 %v2034, %v1968
        %v2058 = vmul.f32 %v2036, %v1968
        %v2059 = vmul.f32 %v2038, %v1968
        %v2060 = vmul.f32 %v2040, %v1968
        %v2061 = vmul.f32 %v2042, %v1968
        %v2062 = vmul.f32 %v2044, %v1968
        %v2063 = vmul.f32 %v2046, %v1968
        %v2064 = vmul.f32 %v2048, %v1968
        %v2065 = vadd.f32 %v2049, 1e-12
        %v2066 = vadd.f32 %v2050, 1e-12
        %v2067 = vadd.f32 %v2051, 1e-12
        %v2068 = vadd.f32 %v2052, 1e-12
        %v2069 = vadd.f32 %v2053, 1e-12
        %v2070 = vadd.f32 %v2054, 1e-12
        %v2071 = vadd.f32 %v2055, 1e-12
        %v2072 = vadd.f32 %v2056, 1e-12
        %v2073 = vadd.f32 %v2057, 1e-12
        %v2074 = vadd.f32 %v2058, 1e-12
        %v2075 = vadd.f32 %v2059, 1e-12
        %v2076 = vadd.f32 %v2060, 1e-12
        %v2077 = vadd.f32 %v2061, 1e-12
        %v2078 = vadd.f32 %v2062, 1e-12
        %v2079 = vadd.f32 %v2063, 1e-12
        %v2080 = vadd.f32 %v2064, 1e-12
        %v2081 = vrsqrt.pop %v2065
        %v2082 = vrsqrt.pop %v2066
        %v2083 = vrsqrt.pop %v2067
        %v2084 = vrsqrt.pop %v2068
        %v2085 = vrsqrt.pop %v2069
        %v2086 = vrsqrt.pop %v2070
        %v2087 = vrsqrt.pop %v2071
        %v2088 = vrsqrt.pop %v2072
        %v2089 = vrsqrt.pop %v2073
        %v2090 = vrsqrt.pop %v2074
        %v2091 = vrsqrt.pop %v2075
        %v2092 = vrsqrt.pop %v2076
        %v2093 = vrsqrt.pop %v2077
        %v2094 = vrsqrt.pop %v2078
        %v2095 = vrsqrt.pop %v2079
        %v2096 = vrsqrt.pop %v2080
        %v2097 = vmul.f32 %v1985, %v2081
        %v2098 = vmul.f32 %v1986, %v2082
        %v2099 = vmul.f32 %v1987, %v2083
        %v2100 = vmul.f32 %v1988, %v2084
        %v2101 = vmul.f32 %v1989, %v2085
        %v2102 = vmul.f32 %v1990, %v2086
        %v2103 = vmul.f32 %v1991, %v2087
        %v2104 = vmul.f32 %v1992, %v2088
        %v2105 = vmul.f32 %v1993, %v2089
        %v2106 = vmul.f32 %v1994, %v2090
        %v2107 = vmul.f32 %v1995, %v2091
        %v2108 = vmul.f32 %v1996, %v2092
        %v2109 = vmul.f32 %v1997, %v2093
        %v2110 = vmul.f32 %v1998, %v2094
        %v2111 = vmul.f32 %v1999, %v2095
        %v2112 = vmul.f32 %v2000, %v2096
        %v2114 = vlaneseq
        %v2115 = vshrl.u32 %v2114, 7
        %v2116 = vsub.s32 0, %v2115
        %v2117 = vrot.slane %v1934, %v2116
        %v2119 = vmul.f32 %v2097, %v2117
        %v2120 = vmul.f32 %v2098, %v2117
        %v2121 = vmul.f32 %v2099, %v2117
        %v2122 = vmul.f32 %v2100, %v2117
        %v2123 = vmul.f32 %v2101, %v2117
        %v2124 = vmul.f32 %v2102, %v2117
        %v2125 = vmul.f32 %v2103, %v2117
        %v2126 = vmul.f32 %v2104, %v2117
        %v2127 = vmul.f32 %v2105, %v2117
        %v2128 = vmul.f32 %v2106, %v2117
        %v2129 = vmul.f32 %v2107, %v2117
        %v2130 = vmul.f32 %v2108, %v2117
        %v2131 = vmul.f32 %v2109, %v2117
        %v2132 = vmul.f32 %v2110, %v2117
        %v2133 = vmul.f32 %v2111, %v2117
        %v2134 = vmul.f32 %v2112, %v2117
        %v2136 = vlaneseq
        %v2137 = vshrl.u32 %v2136, 7
        %v2138 = vsub.s32 0, %v2137
        %v2139 = vrot.slane %v1935, %v2138
        %v2141 = vadd.f32 %v2119, %v2139
        %v2142 = vadd.f32 %v2120, %v2139
        %v2143 = vadd.f32 %v2121, %v2139
        %v2144 = vadd.f32 %v2122, %v2139
        %v2145 = vadd.f32 %v2123, %v2139
        %v2146 = vadd.f32 %v2124, %v2139
        %v2147 = vadd.f32 %v2125, %v2139
        %v2148 = vadd.f32 %v2126, %v2139
        %v2149 = vadd.f32 %v2127, %v2139
        %v2150 = vadd.f32 %v2128, %v2139
        %v2151 = vadd.f32 %v2129, %v2139
        %v2152 = vadd.f32 %v2130, %v2139
        %v2153 = vadd.f32 %v2131, %v2139
        %v2154 = vadd.f32 %v2132, %v2139
        %v2155 = vadd.f32 %v2133, %v2139
        %v2156 = vadd.f32 %v2134, %v2139
        %v2157 = vpack.c.bf16 %v2142, %v2141
        %v2158 = vpack.c.bf16 %v2144, %v2143
        %v2159 = vpack.c.bf16 %v2146, %v2145
        %v2160 = vpack.c.bf16 %v2148, %v2147
        %v2161 = vpack.c.bf16 %v2150, %v2149
        %v2162 = vpack.c.bf16 %v2152, %v2151
        %v2163 = vpack.c.bf16 %v2154, %v2153
        %v2164 = vpack.c.bf16 %v2156, %v2155
        %v2165 = vld [vmem:[#allocation8] sm:$0xff]
        %v2166 = vld [vmem:[#allocation8 + $0x8] sm:$0xff]
        %v2167 = vld [vmem:[#allocation8 + $0x10] sm:$0xff]
        %v2168 = vld [vmem:[#allocation8 + $0x18] sm:$0xff]
        %v2169 = vld [vmem:[#allocation8 + $0x20] sm:$0xff]
        %v2170 = vld [vmem:[#allocation8 + $0x28] sm:$0xff]
        %v2171 = vld [vmem:[#allocation8 + $0x30] sm:$0xff]
        %v2172 = vld [vmem:[#allocation8 + $0x38] sm:$0xff]
        %v2173 = vld [vmem:[#allocation8 + $0x40] sm:$0xff]
        %v2174 = vld [vmem:[#allocation8 + $0x48] sm:$0xff]
        %v2175 = vld [vmem:[#allocation8 + $0x50] sm:$0xff]
        %v2176 = vld [vmem:[#allocation8 + $0x58] sm:$0xff]
        %v2177 = vld [vmem:[#allocation8 + $0x60] sm:$0xff]
        %v2178 = vld [vmem:[#allocation8 + $0x68] sm:$0xff]
        %v2179 = vld [vmem:[#allocation8 + $0x70] sm:$0xff]
        %v2180 = vld [vmem:[#allocation8 + $0x78] sm:$0xff]
        %v2181 = vld [vmem:[#allocation8 + $0x80] sm:$0xff]
        %v2182 = vld [vmem:[#allocation8 + $0x88] sm:$0xff]
        %v2183 = vld [vmem:[#allocation8 + $0x90] sm:$0xff]
        %v2184 = vld [vmem:[#allocation8 + $0x98] sm:$0xff]
        %v2185 = vld [vmem:[#allocation8 + $0xa0] sm:$0xff]
        %v2186 = vld [vmem:[#allocation8 + $0xa8] sm:$0xff]
        %v2187 = vld [vmem:[#allocation8 + $0xb0] sm:$0xff]
        %v2188 = vld [vmem:[#allocation8 + $0xb8] sm:$0xff]
        %v2189 = vld [vmem:[#allocation8 + $0xc0] sm:$0xff]
        %v2190 = vld [vmem:[#allocation8 + $0xc8] sm:$0xff]
        %v2191 = vld [vmem:[#allocation8 + $0xd0] sm:$0xff]
        %v2192 = vld [vmem:[#allocation8 + $0xd8] sm:$0xff]
        %v2193 = vld [vmem:[#allocation8 + $0xe0] sm:$0xff]
        %v2194 = vld [vmem:[#allocation8 + $0xe8] sm:$0xff]
        %v2195 = vld [vmem:[#allocation8 + $0xf0] sm:$0xff]
        %v2196 = vld [vmem:[#allocation8 + $0xf8] sm:$0xff]
        %v2197 = vld [vmem:[%s6] sm:$0xf]
        %v2199 = vlaneseq
        %v2200 = vshrl.u32 %v2199, 7
        %v2201 = vsub.s32 0, %v2200
        %v2202 = vrot.slane %v2197, %v2201
        %v2203 = vlaneseq
        %v2204 = vshrl.u32 %v2203, 7
        %v2205 = vsub.s32 1, %v2204
        %v2206 = vrot.slane %v2197, %v2205
        %v2207 = vlaneseq
        %v2208 = vshrl.u32 %v2207, 7
        %v2209 = vsub.s32 2, %v2208
        %v2210 = vrot.slane %v2197, %v2209
        %v2211 = vlaneseq
        %v2212 = vshrl.u32 %v2211, 7
        %v2213 = vsub.s32 3, %v2212
        %v2214 = vrot.slane %v2197, %v2213
        %v2251 = vunpack.c.l.b16 %v2165
        %v2252 = vunpack.c.h.b16 %v2165
        %v2253 = vunpack.c.l.b16 %v2166
        %v2254 = vunpack.c.h.b16 %v2166
        %v2255 = vunpack.c.l.b16 %v2167
        %v2256 = vunpack.c.h.b16 %v2167
        %v2257 = vunpack.c.l.b16 %v2168
        %v2258 = vunpack.c.h.b16 %v2168
        %v2259 = vunpack.c.l.b16 %v2169
        %v2260 = vunpack.c.h.b16 %v2169
        %v2261 = vunpack.c.l.b16 %v2170
        %v2262 = vunpack.c.h.b16 %v2170
        %v2263 = vunpack.c.l.b16 %v2171
        %v2264 = vunpack.c.h.b16 %v2171
        %v2265 = vunpack.c.l.b16 %v2172
        %v2266 = vunpack.c.h.b16 %v2172
        %v2267 = vunpack.c.l.b16 %v2173
        %v2268 = vunpack.c.h.b16 %v2173
        %v2269 = vunpack.c.l.b16 %v2174
        %v2270 = vunpack.c.h.b16 %v2174
        %v2271 = vunpack.c.l.b16 %v2175
        %v2272 = vunpack.c.h.b16 %v2175
        %v2273 = vunpack.c.l.b16 %v2176
        %v2274 = vunpack.c.h.b16 %v2176
        %v2275 = vunpack.c.l.b16 %v2177
        %v2276 = vunpack.c.h.b16 %v2177
        %v2277 = vunpack.c.l.b16 %v2178
        %v2278 = vunpack.c.h.b16 %v2178
        %v2279 = vunpack.c.l.b16 %v2179
        %v2280 = vunpack.c.h.b16 %v2179
        %v2281 = vunpack.c.l.b16 %v2180
        %v2282 = vunpack.c.h.b16 %v2180
        %v2283 = vunpack.c.l.b16 %v2181
        %v2284 = vunpack.c.h.b16 %v2181
        %v2285 = vunpack.c.l.b16 %v2182
        %v2286 = vunpack.c.h.b16 %v2182
        %v2287 = vunpack.c.l.b16 %v2183
        %v2288 = vunpack.c.h.b16 %v2183
        %v2289 = vunpack.c.l.b16 %v2184
        %v2290 = vunpack.c.h.b16 %v2184
        %v2291 = vunpack.c.l.b16 %v2185
        %v2292 = vunpack.c.h.b16 %v2185
        %v2293 = vunpack.c.l.b16 %v2186
        %v2294 = vunpack.c.h.b16 %v2186
        %v2295 = vunpack.c.l.b16 %v2187
        %v2296 = vunpack.c.h.b16 %v2187
        %v2297 = vunpack.c.l.b16 %v2188
        %v2298 = vunpack.c.h.b16 %v2188
        %v2299 = vunpack.c.l.b16 %v2189
        %v2300 = vunpack.c.h.b16 %v2189
        %v2301 = vunpack.c.l.b16 %v2190
        %v2302 = vunpack.c.h.b16 %v2190
        %v2303 = vunpack.c.l.b16 %v2191
        %v2304 = vunpack.c.h.b16 %v2191
        %v2305 = vunpack.c.l.b16 %v2192
        %v2306 = vunpack.c.h.b16 %v2192
        %v2307 = vunpack.c.l.b16 %v2193
        %v2308 = vunpack.c.h.b16 %v2193
        %v2309 = vunpack.c.l.b16 %v2194
        %v2310 = vunpack.c.h.b16 %v2194
        %v2311 = vunpack.c.l.b16 %v2195
        %v2312 = vunpack.c.h.b16 %v2195
        %v2313 = vunpack.c.l.b16 %v2196
        %v2314 = vunpack.c.h.b16 %v2196
        %v2315 = vpack.c.b16 %v2255, %v2251
        %v2316 = vpack.c.b16 %v2256, %v2252
        %v2317 = vpack.c.b16 %v2257, %v2253
        %v2318 = vpack.c.b16 %v2258, %v2254
        %v2319 = vpack.c.b16 %v2263, %v2259
        %v2320 = vpack.c.b16 %v2264, %v2260
        %v2321 = vpack.c.b16 %v2265, %v2261
        %v2322 = vpack.c.b16 %v2266, %v2262
        %v2323 = vpack.c.b16 %v2271, %v2267
        %v2324 = vpack.c.b16 %v2272, %v2268
        %v2325 = vpack.c.b16 %v2273, %v2269
        %v2326 = vpack.c.b16 %v2274, %v2270
        %v2327 = vpack.c.b16 %v2279, %v2275
        %v2328 = vpack.c.b16 %v2280, %v2276
        %v2329 = vpack.c.b16 %v2281, %v2277
        %v2330 = vpack.c.b16 %v2282, %v2278
        %v2331 = vpack.c.b16 %v2287, %v2283
        %v2332 = vpack.c.b16 %v2288, %v2284
        %v2333 = vpack.c.b16 %v2289, %v2285
        %v2334 = vpack.c.b16 %v2290, %v2286
        %v2335 = vpack.c.b16 %v2295, %v2291
        %v2336 = vpack.c.b16 %v2296, %v2292
        %v2337 = vpack.c.b16 %v2297, %v2293
        %v2338 = vpack.c.b16 %v2298, %v2294
        %v2339 = vpack.c.b16 %v2303, %v2299
        %v2340 = vpack.c.b16 %v2304, %v2300
        %v2341 = vpack.c.b16 %v2305, %v2301
        %v2342 = vpack.c.b16 %v2306, %v2302
        %v2343 = vpack.c.b16 %v2311, %v2307
        %v2344 = vpack.c.b16 %v2312, %v2308
        %v2345 = vpack.c.b16 %v2313, %v2309
        %v2346 = vpack.c.b16 %v2314, %v2310
        %2379 = vmatprep.subr.bf16.mxu0 %v2316
        %2380 = vmatpush1.bf16.msra.mxu0 %v2315
        %2381 = vmatprep.subr.bf16.mxu0 %v2320
        %2382 = vmatpush1.bf16.msra.mxu0 %v2319
        %2383 = vmatprep.subr.bf16.mxu0 %v2324
        %2384 = vmatpush1.bf16.msra.mxu0 %v2323
        %2385 = vmatprep.subr.bf16.mxu0 %v2328
        %2386 = vmatpush1.bf16.msra.mxu0 %v2327
        %2387 = vmatprep.subr.bf16.mxu0 %v2332
        %2388 = vmatpush1.bf16.msra.mxu0 %v2331
        %2389 = vmatprep.subr.bf16.mxu0 %v2336
        %2390 = vmatpush1.bf16.msra.mxu0 %v2335
        %2391 = vmatprep.subr.bf16.mxu0 %v2340
        %2392 = vmatpush1.bf16.msra.mxu0 %v2339
        %2393 = vmatprep.subr.bf16.mxu0 %v2344
        %2394 = vmatpush1.bf16.msra.mxu0 %v2343
        %2395 = vmatprep.subr.bf16.mxu0 0
        %2396 = vmatpush1.bf16.msra.mxu0 0
        %2397 = vmatprep.subr.bf16.mxu0 0
        %2398 = vmatpush1.bf16.msra.mxu0 0
        %2399 = vmatprep.subr.bf16.mxu0 0
        %2400 = vmatpush1.bf16.msra.mxu0 0
        %2401 = vmatprep.subr.bf16.mxu0 0
        %2402 = vmatpush1.bf16.msra.mxu0 0
        %2403 = vmatprep.subr.bf16.mxu0 0
        %2404 = vmatpush1.bf16.msra.mxu0 0
        %2405 = vmatprep.subr.bf16.mxu0 0
        %2406 = vmatpush1.bf16.msra.mxu0 0
        %2407 = vmatprep.subr.bf16.mxu0 0
        %2408 = vmatpush1.bf16.msra.mxu0 0
        %2409 = vmatprep.subr.bf16.mxu0 0
        %2410 = vmatpush1.bf16.msra.mxu0 0
        %2411 = vmatprep.mubr.bf16.mxu0 0
        %2412 = vmatmul.mubr.bf16.gmra.mrb[0].mxu0 %v2157
        %v2413 = vpop.f32.mrb[0].mxu0
        %v2414 = vadd.f32 %v2202, %v2413
        %v2415 = vpop.f32.mrb[0].mxu0
        %v2416 = vadd.f32 %v2206, %v2415
        %v2417 = vpop.f32.mrb[0].mxu0
        %v2418 = vadd.f32 %v2202, %v2417
        %v2419 = vpop.f32.mrb[0].mxu0
        %v2420 = vadd.f32 %v2206, %v2419
        %2421 = vmatprep.mubr.bf16.mxu0 0
        %2422 = vmatmul.mubr.bf16.gmra.mrb[0].mxu0 %v2158
        %v2423 = vpop.f32.mrb[0].mxu0
        %v2424 = vadd.f32 %v2202, %v2423
        %v2425 = vpop.f32.mrb[0].mxu0
        %v2426 = vadd.f32 %v2206, %v2425
        %v2427 = vpop.f32.mrb[0].mxu0
        %v2428 = vadd.f32 %v2202, %v2427
        %v2429 = vpop.f32.mrb[0].mxu0
        %v2430 = vadd.f32 %v2206, %v2429
        %2431 = vmatprep.mubr.bf16.mxu0 0
        %2432 = vmatmul.mubr.bf16.gmra.mrb[0].mxu0 %v2159
        %v2433 = vpop.f32.mrb[0].mxu0
        %v2434 = vadd.f32 %v2202, %v2433
        %v2435 = vpop.f32.mrb[0].mxu0
        %v2436 = vadd.f32 %v2206, %v2435
        %v2437 = vpop.f32.mrb[0].mxu0
        %v2438 = vadd.f32 %v2202, %v2437
        %v2439 = vpop.f32.mrb[0].mxu0
        %v2440 = vadd.f32 %v2206, %v2439
        %2441 = vmatprep.mubr.bf16.mxu0 0
        %2442 = vmatmul.mubr.bf16.gmra.mrb[0].mxu0 %v2160
        %v2443 = vpop.f32.mrb[0].mxu0
        %v2444 = vadd.f32 %v2202, %v2443
        %v2445 = vpop.f32.mrb[0].mxu0
        %v2446 = vadd.f32 %v2206, %v2445
        %v2447 = vpop.f32.mrb[0].mxu0
        %v2448 = vadd.f32 %v2202, %v2447
        %v2449 = vpop.f32.mrb[0].mxu0
        %v2450 = vadd.f32 %v2206, %v2449
        %2451 = vmatprep.mubr.bf16.mxu0 0
        %2452 = vmatmul.mubr.bf16.gmra.mrb[0].mxu0 %v2161
        %v2453 = vpop.f32.mrb[0].mxu0
        %v2454 = vadd.f32 %v2202, %v2453
        %v2455 = vpop.f32.mrb[0].mxu0
        %v2456 = vadd.f32 %v2206, %v2455
        %v2457 = vpop.f32.mrb[0].mxu0
        %v2458 = vadd.f32 %v2202, %v2457
        %v2459 = vpop.f32.mrb[0].mxu0
        %v2460 = vadd.f32 %v2206, %v2459
        %2461 = vmatprep.mubr.bf16.mxu0 0
        %2462 = vmatmul.mubr.bf16.gmra.mrb[0].mxu0 %v2162
        %v2463 = vpop.f32.mrb[0].mxu0
        %v2464 = vadd.f32 %v2202, %v2463
        %v2465 = vpop.f32.mrb[0].mxu0
        %v2466 = vadd.f32 %v2206, %v2465
        %v2467 = vpop.f32.mrb[0].mxu0
        %v2468 = vadd.f32 %v2202, %v2467
        %v2469 = vpop.f32.mrb[0].mxu0
        %v2470 = vadd.f32 %v2206, %v2469
        %2471 = vmatprep.mubr.bf16.mxu0 0
        %2472 = vmatmul.mubr.bf16.gmra.mrb[0].mxu0 %v2163
        %v2473 = vpop.f32.mrb[0].mxu0
        %v2474 = vadd.f32 %v2202, %v2473
        %v2475 = vpop.f32.mrb[0].mxu0
        %v2476 = vadd.f32 %v2206, %v2475
        %v2477 = vpop.f32.mrb[0].mxu0
        %v2478 = vadd.f32 %v2202, %v2477
        %v2479 = vpop.f32.mrb[0].mxu0
        %v2480 = vadd.f32 %v2206, %v2479
        %2481 = vmatprep.mubr.bf16.mxu0 0
        %2482 = vmatmul.mubr.bf16.gmra.mrb[0].mxu0 %v2164
        %v2483 = vpop.f32.mrb[0].mxu0
        %v2484 = vadd.f32 %v2202, %v2483
        %v2485 = vpop.f32.mrb[0].mxu0
        %v2486 = vadd.f32 %v2206, %v2485
        %v2487 = vpop.f32.mrb[0].mxu0
        %v2488 = vadd.f32 %v2202, %v2487
        %v2489 = vpop.f32.mrb[0].mxu0
        %v2490 = vadd.f32 %v2206, %v2489
        %2491 = vdwg.mxu0
        %2492 = vmatprep.subr.bf16.mxu0 %v2318
        %2493 = vmatpush1.bf16.msra.mxu0 %v2317
        %2494 = vmatprep.subr.bf16.mxu0 %v2322
        %2495 = vmatpush1.bf16.msra.mxu0 %v2321
        %2496 = vmatprep.subr.bf16.mxu0 %v2326
        %2497 = vmatpush1.bf16.msra.mxu0 %v2325
        %2498 = vmatprep.subr.bf16.mxu0 %v2330
        %2499 = vmatpush1.bf16.msra.mxu0 %v2329
        %2500 = vmatprep.subr.bf16.mxu0 %v2334
        %2501 = vmatpush1.bf16.msra.mxu0 %v2333
        %2502 = vmatprep.subr.bf16.mxu0 %v2338
        %2503 = vmatpush1.bf16.msra.mxu0 %v2337
        %2504 = vmatprep.subr.bf16.mxu0 %v2342
        %2505 = vmatpush1.bf16.msra.mxu0 %v2341
        %2506 = vmatprep.subr.bf16.mxu0 %v2346
        %2507 = vmatpush1.bf16.msra.mxu0 %v2345
        %2508 = vmatprep.subr.bf16.mxu0 0
        %2509 = vmatpush1.bf16.msra.mxu0 0
        %2510 = vmatprep.subr.bf16.mxu0 0
        %2511 = vmatpush1.bf16.msra.mxu0 0
        %2512 = vmatprep.subr.bf16.mxu0 0
        %2513 = vmatpush1.bf16.msra.mxu0 0
        %2514 = vmatprep.subr.bf16.mxu0 0
        %2515 = vmatpush1.bf16.msra.mxu0 0
        %2516 = vmatprep.subr.bf16.mxu0 0
        %2517 = vmatpush1.bf16.msra.mxu0 0
        %2518 = vmatprep.subr.bf16.mxu0 0
        %2519 = vmatpush1.bf16.msra.mxu0 0
        %2520 = vmatprep.subr.bf16.mxu0 0
        %2521 = vmatpush1.bf16.msra.mxu0 0
        %2522 = vmatprep.subr.bf16.mxu0 0
        %2523 = vmatpush1.bf16.msra.mxu0 0
        %2524 = vmatprep.mubr.bf16.mxu0 0
        %2525 = vmatmul.mubr.bf16.gmra.mrb[0].mxu0 %v2157
        %v2526 = vpop.f32.mrb[0].mxu0
        %v2527 = vadd.f32 %v2210, %v2526
        %v2528 = vpop.f32.mrb[0].mxu0
        %v2529 = vadd.f32 %v2214, %v2528
        %v2530 = vpop.f32.mrb[0].mxu0
        %v2531 = vadd.f32 %v2210, %v2530
        %v2532 = vpop.f32.mrb[0].mxu0
        %v2533 = vadd.f32 %v2214, %v2532
        %2534 = vmatprep.mubr.bf16.mxu0 0
        %2535 = vmatmul.mubr.bf16.gmra.mrb[0].mxu0 %v2158
        %v2536 = vpop.f32.mrb[0].mxu0
        %v2537 = vadd.f32 %v2210, %v2536
        %v2538 = vpop.f32.mrb[0].mxu0
        %v2539 = vadd.f32 %v2214, %v2538
        %v2540 = vpop.f32.mrb[0].mxu0
        %v2541 = vadd.f32 %v2210, %v2540
        %v2542 = vpop.f32.mrb[0].mxu0
        %v2543 = vadd.f32 %v2214, %v2542
        %2544 = vmatprep.mubr.bf16.mxu0 0
        %2545 = vmatmul.mubr.bf16.gmra.mrb[0].mxu0 %v2159
        %v2546 = vpop.f32.mrb[0].mxu0
        %v2547 = vadd.f32 %v2210, %v2546
        %v2548 = vpop.f32.mrb[0].mxu0
        %v2549 = vadd.f32 %v2214, %v2548
        %v2550 = vpop.f32.mrb[0].mxu0
        %v2551 = vadd.f32 %v2210, %v2550
        %v2552 = vpop.f32.mrb[0].mxu0
        %v2553 = vadd.f32 %v2214, %v2552
        %2554 = vmatprep.mubr.bf16.mxu0 0
        %2555 = vmatmul.mubr.bf16.gmra.mrb[0].mxu0 %v2160
        %v2556 = vpop.f32.mrb[0].mxu0
        %v2557 = vadd.f32 %v2210, %v2556
        %v2558 = vpop.f32.mrb[0].mxu0
        %v2559 = vadd.f32 %v2214, %v2558
        %v2560 = vpop.f32.mrb[0].mxu0
        %v2561 = vadd.f32 %v2210, %v2560
        %v2562 = vpop.f32.mrb[0].mxu0
        %v2563 = vadd.f32 %v2214, %v2562
        %2564 = vmatprep.mubr.bf16.mxu0 0
        %2565 = vmatmul.mubr.bf16.gmra.mrb[0].mxu0 %v2161
        %v2566 = vpop.f32.mrb[0].mxu0
        %v2567 = vadd.f32 %v2210, %v2566
        %v2568 = vpop.f32.mrb[0].mxu0
        %v2569 = vadd.f32 %v2214, %v2568
        %v2570 = vpop.f32.mrb[0].mxu0
        %v2571 = vadd.f32 %v2210, %v2570
        %v2572 = vpop.f32.mrb[0].mxu0
        %v2573 = vadd.f32 %v2214, %v2572
        %2574 = vmatprep.mubr.bf16.mxu0 0
        %2575 = vmatmul.mubr.bf16.gmra.mrb[0].mxu0 %v2162
        %v2576 = vpop.f32.mrb[0].mxu0
        %v2577 = vadd.f32 %v2210, %v2576
        %v2578 = vpop.f32.mrb[0].mxu0
        %v2579 = vadd.f32 %v2214, %v2578
        %v2580 = vpop.f32.mrb[0].mxu0
        %v2581 = vadd.f32 %v2210, %v2580
        %v2582 = vpop.f32.mrb[0].mxu0
        %v2583 = vadd.f32 %v2214, %v2582
        %2584 = vmatprep.mubr.bf16.mxu0 0
        %2585 = vmatmul.mubr.bf16.gmra.mrb[0].mxu0 %v2163
        %v2586 = vpop.f32.mrb[0].mxu0
        %v2587 = vadd.f32 %v2210, %v2586
        %v2588 = vpop.f32.mrb[0].mxu0
        %v2589 = vadd.f32 %v2214, %v2588
        %v2590 = vpop.f32.mrb[0].mxu0
        %v2591 = vadd.f32 %v2210, %v2590
        %v2592 = vpop.f32.mrb[0].mxu0
        %v2593 = vadd.f32 %v2214, %v2592
        %2594 = vmatprep.mubr.bf16.mxu0 0
        %2595 = vmatmul.mubr.bf16.gmra.mrb[0].mxu0 %v2164
        %v2596 = vpop.f32.mrb[0].mxu0
        %v2597 = vadd.f32 %v2210, %v2596
        %v2598 = vpop.f32.mrb[0].mxu0
        %v2599 = vadd.f32 %v2214, %v2598
        %v2600 = vpop.f32.mrb[0].mxu0
        %v2601 = vadd.f32 %v2210, %v2600
        %v2602 = vpop.f32.mrb[0].mxu0
        %v2603 = vadd.f32 %v2214, %v2602
        %2604 = vdwg.mxu0
        %v2605 = vmul.f32 %v2414, %v2414
        %v2606 = vmul.f32 %v2416, %v2416
        %v2607 = vmul.f32 %v2527, %v2527
        %v2608 = vmul.f32 %v2529, %v2529
        %v2609 = vmul.f32 %v2418, %v2418
        %v2610 = vmul.f32 %v2420, %v2420
        %v2611 = vmul.f32 %v2531, %v2531
        %v2612 = vmul.f32 %v2533, %v2533
        %v2613 = vmul.f32 %v2424, %v2424
        %v2614 = vmul.f32 %v2426, %v2426
        %v2615 = vmul.f32 %v2537, %v2537
        %v2616 = vmul.f32 %v2539, %v2539
        %v2617 = vmul.f32 %v2428, %v2428
        %v2618 = vmul.f32 %v2430, %v2430
        %v2619 = vmul.f32 %v2541, %v2541
        %v2620 = vmul.f32 %v2543, %v2543
        %v2621 = vmul.f32 %v2434, %v2434
        %v2622 = vmul.f32 %v2436, %v2436
        %v2623 = vmul.f32 %v2547, %v2547
        %v2624 = vmul.f32 %v2549, %v2549
        %v2625 = vmul.f32 %v2438, %v2438
        %v2626 = vmul.f32 %v2440, %v2440
        %v2627 = vmul.f32 %v2551, %v2551
        %v2628 = vmul.f32 %v2553, %v2553
        %v2629 = vmul.f32 %v2444, %v2444
        %v2630 = vmul.f32 %v2446, %v2446
        %v2631 = vmul.f32 %v2557, %v2557
        %v2632 = vmul.f32 %v2559, %v2559
        %v2633 = vmul.f32 %v2448, %v2448
        %v2634 = vmul.f32 %v2450, %v2450
        %v2635 = vmul.f32 %v2561, %v2561
        %v2636 = vmul.f32 %v2563, %v2563
        %v2637 = vmul.f32 %v2454, %v2454
        %v2638 = vmul.f32 %v2456, %v2456
        %v2639 = vmul.f32 %v2567, %v2567
        %v2640 = vmul.f32 %v2569, %v2569
        %v2641 = vmul.f32 %v2458, %v2458
        %v2642 = vmul.f32 %v2460, %v2460
        %v2643 = vmul.f32 %v2571, %v2571
        %v2644 = vmul.f32 %v2573, %v2573
        %v2645 = vmul.f32 %v2464, %v2464
        %v2646 = vmul.f32 %v2466, %v2466
        %v2647 = vmul.f32 %v2577, %v2577
        %v2648 = vmul.f32 %v2579, %v2579
        %v2649 = vmul.f32 %v2468, %v2468
        %v2650 = vmul.f32 %v2470, %v2470
        %v2651 = vmul.f32 %v2581, %v2581
        %v2652 = vmul.f32 %v2583, %v2583
        %v2653 = vmul.f32 %v2474, %v2474
        %v2654 = vmul.f32 %v2476, %v2476
        %v2655 = vmul.f32 %v2587, %v2587
        %v2656 = vmul.f32 %v2589, %v2589
        %v2657 = vmul.f32 %v2478, %v2478
        %v2658 = vmul.f32 %v2480, %v2480
        %v2659 = vmul.f32 %v2591, %v2591
        %v2660 = vmul.f32 %v2593, %v2593
        %v2661 = vmul.f32 %v2484, %v2484
        %v2662 = vmul.f32 %v2486, %v2486
        %v2663 = vmul.f32 %v2597, %v2597
        %v2664 = vmul.f32 %v2599, %v2599
        %v2665 = vmul.f32 %v2488, %v2488
        %v2666 = vmul.f32 %v2490, %v2490
        %v2667 = vmul.f32 %v2601, %v2601
        %v2668 = vmul.f32 %v2603, %v2603
        %v2669 = vmul.f32 %v2414, %v2605
        %v2670 = vmul.f32 %v2416, %v2606
        %v2671 = vmul.f32 %v2527, %v2607
        %v2672 = vmul.f32 %v2529, %v2608
        %v2673 = vmul.f32 %v2418, %v2609
        %v2674 = vmul.f32 %v2420, %v2610
        %v2675 = vmul.f32 %v2531, %v2611
        %v2676 = vmul.f32 %v2533, %v2612
        %v2677 = vmul.f32 %v2424, %v2613
        %v2678 = vmul.f32 %v2426, %v2614
        %v2679 = vmul.f32 %v2537, %v2615
        %v2680 = vmul.f32 %v2539, %v2616
        %v2681 = vmul.f32 %v2428, %v2617
        %v2682 = vmul.f32 %v2430, %v2618
        %v2683 = vmul.f32 %v2541, %v2619
        %v2684 = vmul.f32 %v2543, %v2620
        %v2685 = vmul.f32 %v2434, %v2621
        %v2686 = vmul.f32 %v2436, %v2622
        %v2687 = vmul.f32 %v2547, %v2623
        %v2688 = vmul.f32 %v2549, %v2624
        %v2689 = vmul.f32 %v2438, %v2625
        %v2690 = vmul.f32 %v2440, %v2626
        %v2691 = vmul.f32 %v2551, %v2627
        %v2692 = vmul.f32 %v2553, %v2628
        %v2693 = vmul.f32 %v2444, %v2629
        %v2694 = vmul.f32 %v2446, %v2630
        %v2695 = vmul.f32 %v2557, %v2631
        %v2696 = vmul.f32 %v2559, %v2632
        %v2697 = vmul.f32 %v2448, %v2633
        %v2698 = vmul.f32 %v2450, %v2634
        %v2699 = vmul.f32 %v2561, %v2635
        %v2700 = vmul.f32 %v2563, %v2636
        %v2701 = vmul.f32 %v2454, %v2637
        %v2702 = vmul.f32 %v2456, %v2638
        %v2703 = vmul.f32 %v2567, %v2639
        %v2704 = vmul.f32 %v2569, %v2640
        %v2705 = vmul.f32 %v2458, %v2641
        %v2706 = vmul.f32 %v2460, %v2642
        %v2707 = vmul.f32 %v2571, %v2643
        %v2708 = vmul.f32 %v2573, %v2644
        %v2709 = vmul.f32 %v2464, %v2645
        %v2710 = vmul.f32 %v2466, %v2646
        %v2711 = vmul.f32 %v2577, %v2647
        %v2712 = vmul.f32 %v2579, %v2648
        %v2713 = vmul.f32 %v2468, %v2649
        %v2714 = vmul.f32 %v2470, %v2650
        %v2715 = vmul.f32 %v2581, %v2651
        %v2716 = vmul.f32 %v2583, %v2652
        %v2717 = vmul.f32 %v2474, %v2653
        %v2718 = vmul.f32 %v2476, %v2654
        %v2719 = vmul.f32 %v2587, %v2655
        %v2720 = vmul.f32 %v2589, %v2656
        %v2721 = vmul.f32 %v2478, %v2657
        %v2722 = vmul.f32 %v2480, %v2658
        %v2723 = vmul.f32 %v2591, %v2659
        %v2724 = vmul.f32 %v2593, %v2660
        %v2725 = vmul.f32 %v2484, %v2661
        %v2726 = vmul.f32 %v2486, %v2662
        %v2727 = vmul.f32 %v2597, %v2663
        %v2728 = vmul.f32 %v2599, %v2664
        %v2729 = vmul.f32 %v2488, %v2665
        %v2730 = vmul.f32 %v2490, %v2666
        %v2731 = vmul.f32 %v2601, %v2667
        %v2732 = vmul.f32 %v2603, %v2668
        %v2733 = vmul.f32 %v2669, 0.044715
        %v2734 = vmul.f32 %v2670, 0.044715
        %v2735 = vmul.f32 %v2671, 0.044715
        %v2736 = vmul.f32 %v2672, 0.044715
        %v2737 = vmul.f32 %v2673, 0.044715
        %v2738 = vmul.f32 %v2674, 0.044715
        %v2739 = vmul.f32 %v2675, 0.044715
        %v2740 = vmul.f32 %v2676, 0.044715
        %v2741 = vmul.f32 %v2677, 0.044715
        %v2742 = vmul.f32 %v2678, 0.044715
        %v2743 = vmul.f32 %v2679, 0.044715
        %v2744 = vmul.f32 %v2680, 0.044715
        %v2745 = vmul.f32 %v2681, 0.044715
        %v2746 = vmul.f32 %v2682, 0.044715
        %v2747 = vmul.f32 %v2683, 0.044715
        %v2748 = vmul.f32 %v2684, 0.044715
        %v2749 = vmul.f32 %v2685, 0.044715
        %v2750 = vmul.f32 %v2686, 0.044715
        %v2751 = vmul.f32 %v2687, 0.044715
        %v2752 = vmul.f32 %v2688, 0.044715
        %v2753 = vmul.f32 %v2689, 0.044715
        %v2754 = vmul.f32 %v2690, 0.044715
        %v2755 = vmul.f32 %v2691, 0.044715
        %v2756 = vmul.f32 %v2692, 0.044715
        %v2757 = vmul.f32 %v2693, 0.044715
        %v2758 = vmul.f32 %v2694, 0.044715
        %v2759 = vmul.f32 %v2695, 0.044715
        %v2760 = vmul.f32 %v2696, 0.044715
        %v2761 = vmul.f32 %v2697, 0.044715
        %v2762 = vmul.f32 %v2698, 0.044715
        %v2763 = vmul.f32 %v2699, 0.044715
        %v2764 = vmul.f32 %v2700, 0.044715
        %v2765 = vmul.f32 %v2701, 0.044715
        %v2766 = vmul.f32 %v2702, 0.044715
        %v2767 = vmul.f32 %v2703, 0.044715
        %v2768 = vmul.f32 %v2704, 0.044715
        %v2769 = vmul.f32 %v2705, 0.044715
        %v2770 = vmul.f32 %v2706, 0.044715
        %v2771 = vmul.f32 %v2707, 0.044715
        %v2772 = vmul.f32 %v2708, 0.044715
        %v2773 = vmul.f32 %v2709, 0.044715
        %v2774 = vmul.f32 %v2710, 0.044715
        %v2775 = vmul.f32 %v2711, 0.044715
        %v2776 = vmul.f32 %v2712, 0.044715
        %v2777 = vmul.f32 %v2713, 0.044715
        %v2778 = vmul.f32 %v2714, 0.044715
        %v2779 = vmul.f32 %v2715, 0.044715
        %v2780 = vmul.f32 %v2716, 0.044715
        %v2781 = vmul.f32 %v2717, 0.044715
        %v2782 = vmul.f32 %v2718, 0.044715
        %v2783 = vmul.f32 %v2719, 0.044715
        %v2784 = vmul.f32 %v2720, 0.044715
        %v2785 = vmul.f32 %v2721, 0.044715
        %v2786 = vmul.f32 %v2722, 0.044715
        %v2787 = vmul.f32 %v2723, 0.044715
        %v2788 = vmul.f32 %v2724, 0.044715
        %v2789 = vmul.f32 %v2725, 0.044715
        %v2790 = vmul.f32 %v2726, 0.044715
        %v2791 = vmul.f32 %v2727, 0.044715
        %v2792 = vmul.f32 %v2728, 0.044715
        %v2793 = vmul.f32 %v2729, 0.044715
        %v2794 = vmul.f32 %v2730, 0.044715
        %v2795 = vmul.f32 %v2731, 0.044715
        %v2796 = vmul.f32 %v2732, 0.044715
        %v2797 = vadd.f32 %v2414, %v2733
        %v2798 = vadd.f32 %v2416, %v2734
        %v2799 = vadd.f32 %v2527, %v2735
        %v2800 = vadd.f32 %v2529, %v2736
        %v2801 = vadd.f32 %v2418, %v2737
        %v2802 = vadd.f32 %v2420, %v2738
        %v2803 = vadd.f32 %v2531, %v2739
        %v2804 = vadd.f32 %v2533, %v2740
        %v2805 = vadd.f32 %v2424, %v2741
        %v2806 = vadd.f32 %v2426, %v2742
        %v2807 = vadd.f32 %v2537, %v2743
        %v2808 = vadd.f32 %v2539, %v2744
        %v2809 = vadd.f32 %v2428, %v2745
        %v2810 = vadd.f32 %v2430, %v2746
        %v2811 = vadd.f32 %v2541, %v2747
        %v2812 = vadd.f32 %v2543, %v2748
        %v2813 = vadd.f32 %v2434, %v2749
        %v2814 = vadd.f32 %v2436, %v2750
        %v2815 = vadd.f32 %v2547, %v2751
        %v2816 = vadd.f32 %v2549, %v2752
        %v2817 = vadd.f32 %v2438, %v2753
        %v2818 = vadd.f32 %v2440, %v2754
        %v2819 = vadd.f32 %v2551, %v2755
        %v2820 = vadd.f32 %v2553, %v2756
        %v2821 = vadd.f32 %v2444, %v2757
        %v2822 = vadd.f32 %v2446, %v2758
        %v2823 = vadd.f32 %v2557, %v2759
        %v2824 = vadd.f32 %v2559, %v2760
        %v2825 = vadd.f32 %v2448, %v2761
        %v2826 = vadd.f32 %v2450, %v2762
        %v2827 = vadd.f32 %v2561, %v2763
        %v2828 = vadd.f32 %v2563, %v2764
        %v2829 = vadd.f32 %v2454, %v2765
        %v2830 = vadd.f32 %v2456, %v2766
        %v2831 = vadd.f32 %v2567, %v2767
        %v2832 = vadd.f32 %v2569, %v2768
        %v2833 = vadd.f32 %v2458, %v2769
        %v2834 = vadd.f32 %v2460, %v2770
        %v2835 = vadd.f32 %v2571, %v2771
        %v2836 = vadd.f32 %v2573, %v2772
        %v2837 = vadd.f32 %v2464, %v2773
        %v2838 = vadd.f32 %v2466, %v2774
        %v2839 = vadd.f32 %v2577, %v2775
        %v2840 = vadd.f32 %v2579, %v2776
        %v2841 = vadd.f32 %v2468, %v2777
        %v2842 = vadd.f32 %v2470, %v2778
        %v2843 = vadd.f32 %v2581, %v2779
        %v2844 = vadd.f32 %v2583, %v2780
        %v2845 = vadd.f32 %v2474, %v2781
        %v2846 = vadd.f32 %v2476, %v2782
        %v2847 = vadd.f32 %v2587, %v2783
        %v2848 = vadd.f32 %v2589, %v2784
        %v2849 = vadd.f32 %v2478, %v2785
        %v2850 = vadd.f32 %v2480, %v2786
        %v2851 = vadd.f32 %v2591, %v2787
        %v2852 = vadd.f32 %v2593, %v2788
        %v2853 = vadd.f32 %v2484, %v2789
        %v2854 = vadd.f32 %v2486, %v2790
        %v2855 = vadd.f32 %v2597, %v2791
        %v2856 = vadd.f32 %v2599, %v2792
        %v2857 = vadd.f32 %v2488, %v2793
        %v2858 = vadd.f32 %v2490, %v2794
        %v2859 = vadd.f32 %v2601, %v2795
        %v2860 = vadd.f32 %v2603, %v2796
        %v2861 = vmul.f32 %v2797, 0.7978846
        %v2862 = vmul.f32 %v2798, 0.7978846
        %v2863 = vmul.f32 %v2799, 0.7978846
        %v2864 = vmul.f32 %v2800, 0.7978846
        %v2865 = vmul.f32 %v2801, 0.7978846
        %v2866 = vmul.f32 %v2802, 0.7978846
        %v2867 = vmul.f32 %v2803, 0.7978846
        %v2868 = vmul.f32 %v2804, 0.7978846
        %v2869 = vmul.f32 %v2805, 0.7978846
        %v2870 = vmul.f32 %v2806, 0.7978846
        %v2871 = vmul.f32 %v2807, 0.7978846
        %v2872 = vmul.f32 %v2808, 0.7978846
        %v2873 = vmul.f32 %v2809, 0.7978846
        %v2874 = vmul.f32 %v2810, 0.7978846
        %v2875 = vmul.f32 %v2811, 0.7978846
        %v2876 = vmul.f32 %v2812, 0.7978846
        %v2877 = vmul.f32 %v2813, 0.7978846
        %v2878 = vmul.f32 %v2814, 0.7978846
        %v2879 = vmul.f32 %v2815, 0.7978846
        %v2880 = vmul.f32 %v2816, 0.7978846
        %v2881 = vmul.f32 %v2817, 0.7978846
        %v2882 = vmul.f32 %v2818, 0.7978846
        %v2883 = vmul.f32 %v2819, 0.7978846
        %v2884 = vmul.f32 %v2820, 0.7978846
        %v2885 = vmul.f32 %v2821, 0.7978846
        %v2886 = vmul.f32 %v2822, 0.7978846
        %v2887 = vmul.f32 %v2823, 0.7978846
        %v2888 = vmul.f32 %v2824, 0.7978846
        %v2889 = vmul.f32 %v2825, 0.7978846
        %v2890 = vmul.f32 %v2826, 0.7978846
        %v2891 = vmul.f32 %v2827, 0.7978846
        %v2892 = vmul.f32 %v2828, 0.7978846
        %v2893 = vmul.f32 %v2829, 0.7978846
        %v2894 = vmul.f32 %v2830, 0.7978846
        %v2895 = vmul.f32 %v2831, 0.7978846
        %v2896 = vmul.f32 %v2832, 0.7978846
        %v2897 = vmul.f32 %v2833, 0.7978846
        %v2898 = vmul.f32 %v2834, 0.7978846
        %v2899 = vmul.f32 %v2835, 0.7978846
        %v2900 = vmul.f32 %v2836, 0.7978846
        %v2901 = vmul.f32 %v2837, 0.7978846
        %v2902 = vmul.f32 %v2838, 0.7978846
        %v2903 = vmul.f32 %v2839, 0.7978846
        %v2904 = vmul.f32 %v2840, 0.7978846
        %v2905 = vmul.f32 %v2841, 0.7978846
        %v2906 = vmul.f32 %v2842, 0.7978846
        %v2907 = vmul.f32 %v2843, 0.7978846
        %v2908 = vmul.f32 %v2844, 0.7978846
        %v2909 = vmul.f32 %v2845, 0.7978846
        %v2910 = vmul.f32 %v2846, 0.7978846
        %v2911 = vmul.f32 %v2847, 0.7978846
        %v2912 = vmul.f32 %v2848, 0.7978846
        %v2913 = vmul.f32 %v2849, 0.7978846
        %v2914 = vmul.f32 %v2850, 0.7978846
        %v2915 = vmul.f32 %v2851, 0.7978846
        %v2916 = vmul.f32 %v2852, 0.7978846
        %v2917 = vmul.f32 %v2853, 0.7978846
        %v2918 = vmul.f32 %v2854, 0.7978846
        %v2919 = vmul.f32 %v2855, 0.7978846
        %v2920 = vmul.f32 %v2856, 0.7978846
        %v2921 = vmul.f32 %v2857, 0.7978846
        %v2922 = vmul.f32 %v2858, 0.7978846
        %v2923 = vmul.f32 %v2859, 0.7978846
        %v2924 = vmul.f32 %v2860, 0.7978846
        %v2925 = vtanh.pop %v2861
        %v2926 = vtanh.pop %v2862
        %v2927 = vtanh.pop %v2863
        %v2928 = vtanh.pop %v2864
        %v2929 = vtanh.pop %v2865
        %v2930 = vtanh.pop %v2866
        %v2931 = vtanh.pop %v2867
        %v2932 = vtanh.pop %v2868
        %v2933 = vtanh.pop %v2869
        %v2934 = vtanh.pop %v2870
        %v2935 = vtanh.pop %v2871
        %v2936 = vtanh.pop %v2872
        %v2937 = vtanh.pop %v2873
        %v2938 = vtanh.pop %v2874
        %v2939 = vtanh.pop %v2875
        %v2940 = vtanh.pop %v2876
        %v2941 = vtanh.pop %v2877
        %v2942 = vtanh.pop %v2878
        %v2943 = vtanh.pop %v2879
        %v2944 = vtanh.pop %v2880
        %v2945 = vtanh.pop %v2881
        %v2946 = vtanh.pop %v2882
        %v2947 = vtanh.pop %v2883
        %v2948 = vtanh.pop %v2884
        %v2949 = vtanh.pop %v2885
        %v2950 = vtanh.pop %v2886
        %v2951 = vtanh.pop %v2887
        %v2952 = vtanh.pop %v2888
        %v2953 = vtanh.pop %v2889
        %v2954 = vtanh.pop %v2890
        %v2955 = vtanh.pop %v2891
        %v2956 = vtanh.pop %v2892
        %v2957 = vtanh.pop %v2893
        %v2958 = vtanh.pop %v2894
        %v2959 = vtanh.pop %v2895
        %v2960 = vtanh.pop %v2896
        %v2961 = vtanh.pop %v2897
        %v2962 = vtanh.pop %v2898
        %v2963 = vtanh.pop %v2899
        %v2964 = vtanh.pop %v2900
        %v2965 = vtanh.pop %v2901
        %v2966 = vtanh.pop %v2902
        %v2967 = vtanh.pop %v2903
        %v2968 = vtanh.pop %v2904
        %v2969 = vtanh.pop %v2905
        %v2970 = vtanh.pop %v2906
        %v2971 = vtanh.pop %v2907
        %v2972 = vtanh.pop %v2908
        %v2973 = vtanh.pop %v2909
        %v2974 = vtanh.pop %v2910
        %v2975 = vtanh.pop %v2911
        %v2976 = vtanh.pop %v2912
        %v2977 = vtanh.pop %v2913
        %v2978 = vtanh.pop %v2914
        %v2979 = vtanh.pop %v2915
        %v2980 = vtanh.pop %v2916
        %v2981 = vtanh.pop %v2917
        %v2982 = vtanh.pop %v2918
        %v2983 = vtanh.pop %v2919
        %v2984 = vtanh.pop %v2920
        %v2985 = vtanh.pop %v2921
        %v2986 = vtanh.pop %v2922
        %v2987 = vtanh.pop %v2923
        %v2988 = vtanh.pop %v2924
        %v2989 = vadd.f32 %v2925, 1.0
        %v2990 = vadd.f32 %v2926, 1.0
        %v2991 = vadd.f32 %v2927, 1.0
        %v2992 = vadd.f32 %v2928, 1.0
        %v2993 = vadd.f32 %v2929, 1.0
        %v2994 = vadd.f32 %v2930, 1.0
        %v2995 = vadd.f32 %v2931, 1.0
        %v2996 = vadd.f32 %v2932, 1.0
        %v2997 = vadd.f32 %v2933, 1.0
        %v2998 = vadd.f32 %v2934, 1.0
        %v2999 = vadd.f32 %v2935, 1.0
        %v3000 = vadd.f32 %v2936, 1.0
        %v3001 = vadd.f32 %v2937, 1.0
        %v3002 = vadd.f32 %v2938, 1.0
        %v3003 = vadd.f32 %v2939, 1.0
        %v3004 = vadd.f32 %v2940, 1.0
        %v3005 = vadd.f32 %v2941, 1.0
        %v3006 = vadd.f32 %v2942, 1.0
        %v3007 = vadd.f32 %v2943, 1.0
        %v3008 = vadd.f32 %v2944, 1.0
        %v3009 = vadd.f32 %v2945, 1.0
        %v3010 = vadd.f32 %v2946, 1.0
        %v3011 = vadd.f32 %v2947, 1.0
        %v3012 = vadd.f32 %v2948, 1.0
        %v3013 = vadd.f32 %v2949, 1.0
        %v3014 = vadd.f32 %v2950, 1.0
        %v3015 = vadd.f32 %v2951, 1.0
        %v3016 = vadd.f32 %v2952, 1.0
        %v3017 = vadd.f32 %v2953, 1.0
        %v3018 = vadd.f32 %v2954, 1.0
        %v3019 = vadd.f32 %v2955, 1.0
        %v3020 = vadd.f32 %v2956, 1.0
        %v3021 = vadd.f32 %v2957, 1.0
        %v3022 = vadd.f32 %v2958, 1.0
        %v3023 = vadd.f32 %v2959, 1.0
        %v3024 = vadd.f32 %v2960, 1.0
        %v3025 = vadd.f32 %v2961, 1.0
        %v3026 = vadd.f32 %v2962, 1.0
        %v3027 = vadd.f32 %v2963, 1.0
        %v3028 = vadd.f32 %v2964, 1.0
        %v3029 = vadd.f32 %v2965, 1.0
        %v3030 = vadd.f32 %v2966, 1.0
        %v3031 = vadd.f32 %v2967, 1.0
        %v3032 = vadd.f32 %v2968, 1.0
        %v3033 = vadd.f32 %v2969, 1.0
        %v3034 = vadd.f32 %v2970, 1.0
        %v3035 = vadd.f32 %v2971, 1.0
        %v3036 = vadd.f32 %v2972, 1.0
        %v3037 = vadd.f32 %v2973, 1.0
        %v3038 = vadd.f32 %v2974, 1.0
        %v3039 = vadd.f32 %v2975, 1.0
        %v3040 = vadd.f32 %v2976, 1.0
        %v3041 = vadd.f32 %v2977, 1.0
        %v3042 = vadd.f32 %v2978, 1.0
        %v3043 = vadd.f32 %v2979, 1.0
        %v3044 = vadd.f32 %v2980, 1.0
        %v3045 = vadd.f32 %v2981, 1.0
        %v3046 = vadd.f32 %v2982, 1.0
        %v3047 = vadd.f32 %v2983, 1.0
        %v3048 = vadd.f32 %v2984, 1.0
        %v3049 = vadd.f32 %v2985, 1.0
        %v3050 = vadd.f32 %v2986, 1.0
        %v3051 = vadd.f32 %v2987, 1.0
        %v3052 = vadd.f32 %v2988, 1.0
        %v3053 = vmul.f32 %v2989, 0.5
        %v3054 = vmul.f32 %v2990, 0.5
        %v3055 = vmul.f32 %v2991, 0.5
        %v3056 = vmul.f32 %v2992, 0.5
        %v3057 = vmul.f32 %v2993, 0.5
        %v3058 = vmul.f32 %v2994, 0.5
        %v3059 = vmul.f32 %v2995, 0.5
        %v3060 = vmul.f32 %v2996, 0.5
        %v3061 = vmul.f32 %v2997, 0.5
        %v3062 = vmul.f32 %v2998, 0.5
        %v3063 = vmul.f32 %v2999, 0.5
        %v3064 = vmul.f32 %v3000, 0.5
        %v3065 = vmul.f32 %v3001, 0.5
        %v3066 = vmul.f32 %v3002, 0.5
        %v3067 = vmul.f32 %v3003, 0.5
        %v3068 = vmul.f32 %v3004, 0.5
        %v3069 = vmul.f32 %v3005, 0.5
        %v3070 = vmul.f32 %v3006, 0.5
        %v3071 = vmul.f32 %v3007, 0.5
        %v3072 = vmul.f32 %v3008, 0.5
        %v3073 = vmul.f32 %v3009, 0.5
        %v3074 = vmul.f32 %v3010, 0.5
        %v3075 = vmul.f32 %v3011, 0.5
        %v3076 = vmul.f32 %v3012, 0.5
        %v3077 = vmul.f32 %v3013, 0.5
        %v3078 = vmul.f32 %v3014, 0.5
        %v3079 = vmul.f32 %v3015, 0.5
        %v3080 = vmul.f32 %v3016, 0.5
        %v3081 = vmul.f32 %v3017, 0.5
        %v3082 = vmul.f32 %v3018, 0.5
        %v3083 = vmul.f32 %v3019, 0.5
        %v3084 = vmul.f32 %v3020, 0.5
        %v3085 = vmul.f32 %v3021, 0.5
        %v3086 = vmul.f32 %v3022, 0.5
        %v3087 = vmul.f32 %v3023, 0.5
        %v3088 = vmul.f32 %v3024, 0.5
        %v3089 = vmul.f32 %v3025, 0.5
        %v3090 = vmul.f32 %v3026, 0.5
        %v3091 = vmul.f32 %v3027, 0.5
        %v3092 = vmul.f32 %v3028, 0.5
        %v3093 = vmul.f32 %v3029, 0.5
        %v3094 = vmul.f32 %v3030, 0.5
        %v3095 = vmul.f32 %v3031, 0.5
        %v3096 = vmul.f32 %v3032, 0.5
        %v3097 = vmul.f32 %v3033, 0.5
        %v3098 = vmul.f32 %v3034, 0.5
        %v3099 = vmul.f32 %v3035, 0.5
        %v3100 = vmul.f32 %v3036, 0.5
        %v3101 = vmul.f32 %v3037, 0.5
        %v3102 = vmul.f32 %v3038, 0.5
        %v3103 = vmul.f32 %v3039, 0.5
        %v3104 = vmul.f32 %v3040, 0.5
        %v3105 = vmul.f32 %v3041, 0.5
        %v3106 = vmul.f32 %v3042, 0.5
        %v3107 = vmul.f32 %v3043, 0.5
        %v3108 = vmul.f32 %v3044, 0.5
        %v3109 = vmul.f32 %v3045, 0.5
        %v3110 = vmul.f32 %v3046, 0.5
        %v3111 = vmul.f32 %v3047, 0.5
        %v3112 = vmul.f32 %v3048, 0.5
        %v3113 = vmul.f32 %v3049, 0.5
        %v3114 = vmul.f32 %v3050, 0.5
        %v3115 = vmul.f32 %v3051, 0.5
        %v3116 = vmul.f32 %v3052, 0.5
        %v3117 = vmul.f32 %v2414, %v3053
        %v3118 = vmul.f32 %v2416, %v3054
        %v3119 = vmul.f32 %v2527, %v3055
        %v3120 = vmul.f32 %v2529, %v3056
        %v3121 = vmul.f32 %v2418, %v3057
        %v3122 = vmul.f32 %v2420, %v3058
        %v3123 = vmul.f32 %v2531, %v3059
        %v3124 = vmul.f32 %v2533, %v3060
        %v3125 = vmul.f32 %v2424, %v3061
        %v3126 = vmul.f32 %v2426, %v3062
        %v3127 = vmul.f32 %v2537, %v3063
        %v3128 = vmul.f32 %v2539, %v3064
        %v3129 = vmul.f32 %v2428, %v3065
        %v3130 = vmul.f32 %v2430, %v3066
        %v3131 = vmul.f32 %v2541, %v3067
        %v3132 = vmul.f32 %v2543, %v3068
        %v3133 = vmul.f32 %v2434, %v3069
        %v3134 = vmul.f32 %v2436, %v3070
        %v3135 = vmul.f32 %v2547, %v3071
        %v3136 = vmul.f32 %v2549, %v3072
        %v3137 = vmul.f32 %v2438, %v3073
        %v3138 = vmul.f32 %v2440, %v3074
        %v3139 = vmul.f32 %v2551, %v3075
        %v3140 = vmul.f32 %v2553, %v3076
        %v3141 = vmul.f32 %v2444, %v3077
        %v3142 = vmul.f32 %v2446, %v3078
        %v3143 = vmul.f32 %v2557, %v3079
        %v3144 = vmul.f32 %v2559, %v3080
        %v3145 = vmul.f32 %v2448, %v3081
        %v3146 = vmul.f32 %v2450, %v3082
        %v3147 = vmul.f32 %v2561, %v3083
        %v3148 = vmul.f32 %v2563, %v3084
        %v3149 = vmul.f32 %v2454, %v3085
        %v3150 = vmul.f32 %v2456, %v3086
        %v3151 = vmul.f32 %v2567, %v3087
        %v3152 = vmul.f32 %v2569, %v3088
        %v3153 = vmul.f32 %v2458, %v3089
        %v3154 = vmul.f32 %v2460, %v3090
        %v3155 = vmul.f32 %v2571, %v3091
        %v3156 = vmul.f32 %v2573, %v3092
        %v3157 = vmul.f32 %v2464, %v3093
        %v3158 = vmul.f32 %v2466, %v3094
        %v3159 = vmul.f32 %v2577, %v3095
        %v3160 = vmul.f32 %v2579, %v3096
        %v3161 = vmul.f32 %v2468, %v3097
        %v3162 = vmul.f32 %v2470, %v3098
        %v3163 = vmul.f32 %v2581, %v3099
        %v3164 = vmul.f32 %v2583, %v3100
        %v3165 = vmul.f32 %v2474, %v3101
        %v3166 = vmul.f32 %v2476, %v3102
        %v3167 = vmul.f32 %v2587, %v3103
        %v3168 = vmul.f32 %v2589, %v3104
        %v3169 = vmul.f32 %v2478, %v3105
        %v3170 = vmul.f32 %v2480, %v3106
        %v3171 = vmul.f32 %v2591, %v3107
        %v3172 = vmul.f32 %v2593, %v3108
        %v3173 = vmul.f32 %v2484, %v3109
        %v3174 = vmul.f32 %v2486, %v3110
        %v3175 = vmul.f32 %v2597, %v3111
        %v3176 = vmul.f32 %v2599, %v3112
        %v3177 = vmul.f32 %v2488, %v3113
        %v3178 = vmul.f32 %v2490, %v3114
        %v3179 = vmul.f32 %v2601, %v3115
        %v3180 = vmul.f32 %v2603, %v3116
        %v3181 = vpack.c.bf16 %v3121, %v3117
        %v3182 = vpack.c.bf16 %v3122, %v3118
        %v3183 = vpack.c.bf16 %v3123, %v3119
        %v3184 = vpack.c.bf16 %v3124, %v3120
        %v3185 = vpack.c.bf16 %v3129, %v3125
        %v3186 = vpack.c.bf16 %v3130, %v3126
        %v3187 = vpack.c.bf16 %v3131, %v3127
        %v3188 = vpack.c.bf16 %v3132, %v3128
        %v3189 = vpack.c.bf16 %v3137, %v3133
        %v3190 = vpack.c.bf16 %v3138, %v3134
        %v3191 = vpack.c.bf16 %v3139, %v3135
        %v3192 = vpack.c.bf16 %v3140, %v3136
        %v3193 = vpack.c.bf16 %v3145, %v3141
        %v3194 = vpack.c.bf16 %v3146, %v3142
        %v3195 = vpack.c.bf16 %v3147, %v3143
        %v3196 = vpack.c.bf16 %v3148, %v3144
        %v3197 = vpack.c.bf16 %v3153, %v3149
        %v3198 = vpack.c.bf16 %v3154, %v3150
        %v3199 = vpack.c.bf16 %v3155, %v3151
        %v3200 = vpack.c.bf16 %v3156, %v3152
        %v3201 = vpack.c.bf16 %v3161, %v3157
        %v3202 = vpack.c.bf16 %v3162, %v3158
        %v3203 = vpack.c.bf16 %v3163, %v3159
        %v3204 = vpack.c.bf16 %v3164, %v3160
        %v3205 = vpack.c.bf16 %v3169, %v3165
        %v3206 = vpack.c.bf16 %v3170, %v3166
        %v3207 = vpack.c.bf16 %v3171, %v3167
        %v3208 = vpack.c.bf16 %v3172, %v3168
        %v3209 = vpack.c.bf16 %v3177, %v3173
        %v3210 = vpack.c.bf16 %v3178, %v3174
        %v3211 = vpack.c.bf16 %v3179, %v3175
        %v3212 = vpack.c.bf16 %v3180, %v3176
        %v3213 = vld [vmem:[#allocation10] sm:$0xf]
        %v3214 = vld [vmem:[#allocation10 + $0x4] sm:$0xf]
        %v3215 = vld [vmem:[#allocation10 + $0x8] sm:$0xf]
        %v3216 = vld [vmem:[#allocation10 + $0xc] sm:$0xf]
        %v3217 = vld [vmem:[#allocation10 + $0x10] sm:$0xf]
        %v3218 = vld [vmem:[#allocation10 + $0x14] sm:$0xf]
        %v3219 = vld [vmem:[#allocation10 + $0x18] sm:$0xf]
        %v3220 = vld [vmem:[#allocation10 + $0x1c] sm:$0xf]
        %v3221 = vld [vmem:[#allocation10 + $0x20] sm:$0xf]
        %v3222 = vld [vmem:[#allocation10 + $0x24] sm:$0xf]
        %v3223 = vld [vmem:[#allocation10 + $0x28] sm:$0xf]
        %v3224 = vld [vmem:[#allocation10 + $0x2c] sm:$0xf]
        %v3225 = vld [vmem:[#allocation10 + $0x30] sm:$0xf]
        %v3226 = vld [vmem:[#allocation10 + $0x34] sm:$0xf]
        %v3227 = vld [vmem:[#allocation10 + $0x38] sm:$0xf]
        %v3228 = vld [vmem:[#allocation10 + $0x3c] sm:$0xf]
        %v3229 = vld [vmem:[#allocation10 + $0x40] sm:$0xf]
        %v3230 = vld [vmem:[#allocation10 + $0x44] sm:$0xf]
        %v3231 = vld [vmem:[#allocation10 + $0x48] sm:$0xf]
        %v3232 = vld [vmem:[#allocation10 + $0x4c] sm:$0xf]
        %v3233 = vld [vmem:[#allocation10 + $0x50] sm:$0xf]
        %v3234 = vld [vmem:[#allocation10 + $0x54] sm:$0xf]
        %v3235 = vld [vmem:[#allocation10 + $0x58] sm:$0xf]
        %v3236 = vld [vmem:[#allocation10 + $0x5c] sm:$0xf]
        %v3237 = vld [vmem:[#allocation10 + $0x60] sm:$0xf]
        %v3238 = vld [vmem:[#allocation10 + $0x64] sm:$0xf]
        %v3239 = vld [vmem:[#allocation10 + $0x68] sm:$0xf]
        %v3240 = vld [vmem:[#allocation10 + $0x6c] sm:$0xf]
        %v3241 = vld [vmem:[#allocation10 + $0x70] sm:$0xf]
        %v3242 = vld [vmem:[#allocation10 + $0x74] sm:$0xf]
        %v3243 = vld [vmem:[#allocation10 + $0x78] sm:$0xf]
        %v3244 = vld [vmem:[#allocation10 + $0x7c] sm:$0xf]
        %v3245 = vld [vmem:[#allocation10 + $0x80] sm:$0xf]
        %v3246 = vld [vmem:[#allocation10 + $0x84] sm:$0xf]
        %v3247 = vld [vmem:[#allocation10 + $0x88] sm:$0xf]
        %v3248 = vld [vmem:[#allocation10 + $0x8c] sm:$0xf]
        %v3249 = vld [vmem:[#allocation10 + $0x90] sm:$0xf]
        %v3250 = vld [vmem:[#allocation10 + $0x94] sm:$0xf]
        %v3251 = vld [vmem:[#allocation10 + $0x98] sm:$0xf]
        %v3252 = vld [vmem:[#allocation10 + $0x9c] sm:$0xf]
        %v3253 = vld [vmem:[#allocation10 + $0xa0] sm:$0xf]
        %v3254 = vld [vmem:[#allocation10 + $0xa4] sm:$0xf]
        %v3255 = vld [vmem:[#allocation10 + $0xa8] sm:$0xf]
        %v3256 = vld [vmem:[#allocation10 + $0xac] sm:$0xf]
        %v3257 = vld [vmem:[#allocation10 + $0xb0] sm:$0xf]
        %v3258 = vld [vmem:[#allocation10 + $0xb4] sm:$0xf]
        %v3259 = vld [vmem:[#allocation10 + $0xb8] sm:$0xf]
        %v3260 = vld [vmem:[#allocation10 + $0xbc] sm:$0xf]
        %v3261 = vld [vmem:[#allocation10 + $0xc0] sm:$0xf]
        %v3262 = vld [vmem:[#allocation10 + $0xc4] sm:$0xf]
        %v3263 = vld [vmem:[#allocation10 + $0xc8] sm:$0xf]
        %v3264 = vld [vmem:[#allocation10 + $0xcc] sm:$0xf]
        %v3265 = vld [vmem:[#allocation10 + $0xd0] sm:$0xf]
        %v3266 = vld [vmem:[#allocation10 + $0xd4] sm:$0xf]
        %v3267 = vld [vmem:[#allocation10 + $0xd8] sm:$0xf]
        %v3268 = vld [vmem:[#allocation10 + $0xdc] sm:$0xf]
        %v3269 = vld [vmem:[#allocation10 + $0xe0] sm:$0xf]
        %v3270 = vld [vmem:[#allocation10 + $0xe4] sm:$0xf]
        %v3271 = vld [vmem:[#allocation10 + $0xe8] sm:$0xf]
        %v3272 = vld [vmem:[#allocation10 + $0xec] sm:$0xf]
        %v3273 = vld [vmem:[#allocation10 + $0xf0] sm:$0xf]
        %v3274 = vld [vmem:[#allocation10 + $0xf4] sm:$0xf]
        %v3275 = vld [vmem:[#allocation10 + $0xf8] sm:$0xf]
        %v3276 = vld [vmem:[#allocation10 + $0xfc] sm:$0xf]
        %v3277 = vld [vmem:[%s8] sm:$0x1]
        %v3279 = vlaneseq
        %v3280 = vshrl.u32 %v3279, 7
        %v3281 = vsub.s32 0, %v3280
        %v3282 = vrot.slane %v3277, %v3281
        %v3348 = vunpack.c.l.b16 %v3213
        %v3349 = vunpack.c.l.b16 %v3214
        %v3350 = vunpack.c.l.b16 %v3215
        %v3351 = vunpack.c.l.b16 %v3216
        %v3352 = vunpack.c.l.b16 %v3217
        %v3353 = vunpack.c.l.b16 %v3218
        %v3354 = vunpack.c.l.b16 %v3219
        %v3355 = vunpack.c.l.b16 %v3220
        %v3356 = vunpack.c.l.b16 %v3221
        %v3357 = vunpack.c.l.b16 %v3222
        %v3358 = vunpack.c.l.b16 %v3223
        %v3359 = vunpack.c.l.b16 %v3224
        %v3360 = vunpack.c.l.b16 %v3225
        %v3361 = vunpack.c.l.b16 %v3226
        %v3362 = vunpack.c.l.b16 %v3227
        %v3363 = vunpack.c.l.b16 %v3228
        %v3364 = vunpack.c.l.b16 %v3229
        %v3365 = vunpack.c.l.b16 %v3230
        %v3366 = vunpack.c.l.b16 %v3231
        %v3367 = vunpack.c.l.b16 %v3232
        %v3368 = vunpack.c.l.b16 %v3233
        %v3369 = vunpack.c.l.b16 %v3234
        %v3370 = vunpack.c.l.b16 %v3235
        %v3371 = vunpack.c.l.b16 %v3236
        %v3372 = vunpack.c.l.b16 %v3237
        %v3373 = vunpack.c.l.b16 %v3238
        %v3374 = vunpack.c.l.b16 %v3239
        %v3375 = vunpack.c.l.b16 %v3240
        %v3376 = vunpack.c.l.b16 %v3241
        %v3377 = vunpack.c.l.b16 %v3242
        %v3378 = vunpack.c.l.b16 %v3243
        %v3379 = vunpack.c.l.b16 %v3244
        %v3380 = vunpack.c.l.b16 %v3245
        %v3381 = vunpack.c.l.b16 %v3246
        %v3382 = vunpack.c.l.b16 %v3247
        %v3383 = vunpack.c.l.b16 %v3248
        %v3384 = vunpack.c.l.b16 %v3249
        %v3385 = vunpack.c.l.b16 %v3250
        %v3386 = vunpack.c.l.b16 %v3251
        %v3387 = vunpack.c.l.b16 %v3252
        %v3388 = vunpack.c.l.b16 %v3253
        %v3389 = vunpack.c.l.b16 %v3254
        %v3390 = vunpack.c.l.b16 %v3255
        %v3391 = vunpack.c.l.b16 %v3256
        %v3392 = vunpack.c.l.b16 %v3257
        %v3393 = vunpack.c.l.b16 %v3258
        %v3394 = vunpack.c.l.b16 %v3259
        %v3395 = vunpack.c.l.b16 %v3260
        %v3396 = vunpack.c.l.b16 %v3261
        %v3397 = vunpack.c.l.b16 %v3262
        %v3398 = vunpack.c.l.b16 %v3263
        %v3399 = vunpack.c.l.b16 %v3264
        %v3400 = vunpack.c.l.b16 %v3265
        %v3401 = vunpack.c.l.b16 %v3266
        %v3402 = vunpack.c.l.b16 %v3267
        %v3403 = vunpack.c.l.b16 %v3268
        %v3404 = vunpack.c.l.b16 %v3269
        %v3405 = vunpack.c.l.b16 %v3270
        %v3406 = vunpack.c.l.b16 %v3271
        %v3407 = vunpack.c.l.b16 %v3272
        %v3408 = vunpack.c.l.b16 %v3273
        %v3409 = vunpack.c.l.b16 %v3274
        %v3410 = vunpack.c.l.b16 %v3275
        %v3411 = vunpack.c.l.b16 %v3276
        %v3412 = vpack.c.b16 %v3349, %v3348
        %v3413 = vpack.c.b16 %v3351, %v3350
        %v3414 = vpack.c.b16 %v3353, %v3352
        %v3415 = vpack.c.b16 %v3355, %v3354
        %v3416 = vpack.c.b16 %v3357, %v3356
        %v3417 = vpack.c.b16 %v3359, %v3358
        %v3418 = vpack.c.b16 %v3361, %v3360
        %v3419 = vpack.c.b16 %v3363, %v3362
        %v3420 = vpack.c.b16 %v3365, %v3364
        %v3421 = vpack.c.b16 %v3367, %v3366
        %v3422 = vpack.c.b16 %v3369, %v3368
        %v3423 = vpack.c.b16 %v3371, %v3370
        %v3424 = vpack.c.b16 %v3373, %v3372
        %v3425 = vpack.c.b16 %v3375, %v3374
        %v3426 = vpack.c.b16 %v3377, %v3376
        %v3427 = vpack.c.b16 %v3379, %v3378
        %v3428 = vpack.c.b16 %v3381, %v3380
        %v3429 = vpack.c.b16 %v3383, %v3382
        %v3430 = vpack.c.b16 %v3385, %v3384
        %v3431 = vpack.c.b16 %v3387, %v3386
        %v3432 = vpack.c.b16 %v3389, %v3388
        %v3433 = vpack.c.b16 %v3391, %v3390
        %v3434 = vpack.c.b16 %v3393, %v3392
        %v3435 = vpack.c.b16 %v3395, %v3394
        %v3436 = vpack.c.b16 %v3397, %v3396
        %v3437 = vpack.c.b16 %v3399, %v3398
        %v3438 = vpack.c.b16 %v3401, %v3400
        %v3439 = vpack.c.b16 %v3403, %v3402
        %v3440 = vpack.c.b16 %v3405, %v3404
        %v3441 = vpack.c.b16 %v3407, %v3406
        %v3442 = vpack.c.b16 %v3409, %v3408
        %v3443 = vpack.c.b16 %v3411, %v3410
        %3476 = vmatprep.subr.bf16.mxu0 0
        %3477 = vmatpush1.bf16.msra.mxu0 %v3412
        %3478 = vmatprep.subr.bf16.mxu0 0
        %3479 = vmatpush1.bf16.msra.mxu0 %v3413
        %3480 = vmatprep.subr.bf16.mxu0 0
        %3481 = vmatpush1.bf16.msra.mxu0 %v3414
        %3482 = vmatprep.subr.bf16.mxu0 0
        %3483 = vmatpush1.bf16.msra.mxu0 %v3415
        %3484 = vmatprep.subr.bf16.mxu0 0
        %3485 = vmatpush1.bf16.msra.mxu0 %v3416
        %3486 = vmatprep.subr.bf16.mxu0 0
        %3487 = vmatpush1.bf16.msra.mxu0 %v3417
        %3488 = vmatprep.subr.bf16.mxu0 0
        %3489 = vmatpush1.bf16.msra.mxu0 %v3418
        %3490 = vmatprep.subr.bf16.mxu0 0
        %3491 = vmatpush1.bf16.msra.mxu0 %v3419
        %3492 = vmatprep.subr.bf16.mxu0 0
        %3493 = vmatpush1.bf16.msra.mxu0 %v3420
        %3494 = vmatprep.subr.bf16.mxu0 0
        %3495 = vmatpush1.bf16.msra.mxu0 %v3421
        %3496 = vmatprep.subr.bf16.mxu0 0
        %3497 = vmatpush1.bf16.msra.mxu0 %v3422
        %3498 = vmatprep.subr.bf16.mxu0 0
        %3499 = vmatpush1.bf16.msra.mxu0 %v3423
        %3500 = vmatprep.subr.bf16.mxu0 0
        %3501 = vmatpush1.bf16.msra.mxu0 %v3424
        %3502 = vmatprep.subr.bf16.mxu0 0
        %3503 = vmatpush1.bf16.msra.mxu0 %v3425
        %3504 = vmatprep.subr.bf16.mxu0 0
        %3505 = vmatpush1.bf16.msra.mxu0 %v3426
        %3506 = vmatprep.subr.bf16.mxu0 0
        %3507 = vmatpush1.bf16.msra.mxu0 %v3427
        %3508 = vmatprep.mubr.bf16.mxu0 %v3182
        %3509 = vmatmul.mubr.bf16.gmra.mrb[0].mxu0 %v3181
        %v3510 = vpop.f32.mrb[0].mxu0
        %v3511 = vadd.f32 %v3282, %v3510
        %v3512 = vpop.f32.mrb[0].mxu0
        %v3513 = vpop.f32.mrb[0].mxu0
        %v3514 = vpop.f32.mrb[0].mxu0
        %3515 = vmatprep.mubr.bf16.mxu0 %v3186
        %3516 = vmatmul.mubr.bf16.gmra.mrb[0].mxu0 %v3185
        %v3517 = vpop.f32.mrb[0].mxu0
        %v3518 = vadd.f32 %v3282, %v3517
        %v3519 = vpop.f32.mrb[0].mxu0
        %v3520 = vpop.f32.mrb[0].mxu0
        %v3521 = vpop.f32.mrb[0].mxu0
        %3522 = vmatprep.mubr.bf16.mxu0 %v3190
        %3523 = vmatmul.mubr.bf16.gmra.mrb[0].mxu0 %v3189
        %v3524 = vpop.f32.mrb[0].mxu0
        %v3525 = vadd.f32 %v3282, %v3524
        %v3526 = vpop.f32.mrb[0].mxu0
        %v3527 = vpop.f32.mrb[0].mxu0
        %v3528 = vpop.f32.mrb[0].mxu0
        %3529 = vmatprep.mubr.bf16.mxu0 %v3194
        %3530 = vmatmul.mubr.bf16.gmra.mrb[0].mxu0 %v3193
        %v3531 = vpop.f32.mrb[0].mxu0
        %v3532 = vadd.f32 %v3282, %v3531
        %v3533 = vpop.f32.mrb[0].mxu0
        %v3534 = vpop.f32.mrb[0].mxu0
        %v3535 = vpop.f32.mrb[0].mxu0
        %3536 = vmatprep.mubr.bf16.mxu0 %v3198
        %3537 = vmatmul.mubr.bf16.gmra.mrb[0].mxu0 %v3197
        %v3538 = vpop.f32.mrb[0].mxu0
        %v3539 = vadd.f32 %v3282, %v3538
        %v3540 = vpop.f32.mrb[0].mxu0
        %v3541 = vpop.f32.mrb[0].mxu0
        %v3542 = vpop.f32.mrb[0].mxu0
        %3543 = vmatprep.mubr.bf16.mxu0 %v3202
        %3544 = vmatmul.mubr.bf16.gmra.mrb[0].mxu0 %v3201
        %v3545 = vpop.f32.mrb[0].mxu0
        %v3546 = vadd.f32 %v3282, %v3545
        %v3547 = vpop.f32.mrb[0].mxu0
        %v3548 = vpop.f32.mrb[0].mxu0
        %v3549 = vpop.f32.mrb[0].mxu0
        %3550 = vmatprep.mubr.bf16.mxu0 %v3206
        %3551 = vmatmul.mubr.bf16.gmra.mrb[0].mxu0 %v3205
        %v3552 = vpop.f32.mrb[0].mxu0
        %v3553 = vadd.f32 %v3282, %v3552
        %v3554 = vpop.f32.mrb[0].mxu0
        %v3555 = vpop.f32.mrb[0].mxu0
        %v3556 = vpop.f32.mrb[0].mxu0
        %3557 = vmatprep.mubr.bf16.mxu0 %v3210
        %3558 = vmatmul.mubr.bf16.gmra.mrb[0].mxu0 %v3209
        %v3559 = vpop.f32.mrb[0].mxu0
        %v3560 = vadd.f32 %v3282, %v3559
        %v3561 = vpop.f32.mrb[0].mxu0
        %v3562 = vpop.f32.mrb[0].mxu0
        %v3563 = vpop.f32.mrb[0].mxu0
        %3564 = vdwg.mxu0
        %3565 = vmatprep.subr.bf16.mxu0 0
        %3566 = vmatpush1.bf16.msra.mxu0 %v3428
        %3567 = vmatprep.subr.bf16.mxu0 0
        %3568 = vmatpush1.bf16.msra.mxu0 %v3429
        %3569 = vmatprep.subr.bf16.mxu0 0
        %3570 = vmatpush1.bf16.msra.mxu0 %v3430
        %3571 = vmatprep.subr.bf16.mxu0 0
        %3572 = vmatpush1.bf16.msra.mxu0 %v3431
        %3573 = vmatprep.subr.bf16.mxu0 0
        %3574 = vmatpush1.bf16.msra.mxu0 %v3432
        %3575 = vmatprep.subr.bf16.mxu0 0
        %3576 = vmatpush1.bf16.msra.mxu0 %v3433
        %3577 = vmatprep.subr.bf16.mxu0 0
        %3578 = vmatpush1.bf16.msra.mxu0 %v3434
        %3579 = vmatprep.subr.bf16.mxu0 0
        %3580 = vmatpush1.bf16.msra.mxu0 %v3435
        %3581 = vmatprep.subr.bf16.mxu0 0
        %3582 = vmatpush1.bf16.msra.mxu0 %v3436
        %3583 = vmatprep.subr.bf16.mxu0 0
        %3584 = vmatpush1.bf16.msra.mxu0 %v3437
        %3585 = vmatprep.subr.bf16.mxu0 0
        %3586 = vmatpush1.bf16.msra.mxu0 %v3438
        %3587 = vmatprep.subr.bf16.mxu0 0
        %3588 = vmatpush1.bf16.msra.mxu0 %v3439
        %3589 = vmatprep.subr.bf16.mxu0 0
        %3590 = vmatpush1.bf16.msra.mxu0 %v3440
        %3591 = vmatprep.subr.bf16.mxu0 0
        %3592 = vmatpush1.bf16.msra.mxu0 %v3441
        %3593 = vmatprep.subr.bf16.mxu0 0
        %3594 = vmatpush1.bf16.msra.mxu0 %v3442
        %3595 = vmatprep.subr.bf16.mxu0 0
        %3596 = vmatpush1.bf16.msra.mxu0 %v3443
        %3597 = vmatprep.mubr.bf16.mxu0 %v3184
        %3598 = vmatmul.mubr.bf16.gmra.mrb[0].mxu0 %v3183
        %v3599 = vpop.f32.mrb[0].mxu0
        %v3600 = vadd.f32 %v3511, %v3599
        %v3601 = vpop.f32.mrb[0].mxu0
        %v3602 = vpop.f32.mrb[0].mxu0
        %v3603 = vpop.f32.mrb[0].mxu0
        %3604 = vmatprep.mubr.bf16.mxu0 %v3188
        %3605 = vmatmul.mubr.bf16.gmra.mrb[0].mxu0 %v3187
        %v3606 = vpop.f32.mrb[0].mxu0
        %v3607 = vadd.f32 %v3518, %v3606
        %v3608 = vpop.f32.mrb[0].mxu0
        %v3609 = vpop.f32.mrb[0].mxu0
        %v3610 = vpop.f32.mrb[0].mxu0
        %3611 = vmatprep.mubr.bf16.mxu0 %v3192
        %3612 = vmatmul.mubr.bf16.gmra.mrb[0].mxu0 %v3191
        %v3613 = vpop.f32.mrb[0].mxu0
        %v3614 = vadd.f32 %v3525, %v3613
        %v3615 = vpop.f32.mrb[0].mxu0
        %v3616 = vpop.f32.mrb[0].mxu0
        %v3617 = vpop.f32.mrb[0].mxu0
        %3618 = vmatprep.mubr.bf16.mxu0 %v3196
        %3619 = vmatmul.mubr.bf16.gmra.mrb[0].mxu0 %v3195
        %v3620 = vpop.f32.mrb[0].mxu0
        %v3621 = vadd.f32 %v3532, %v3620
        %v3622 = vpop.f32.mrb[0].mxu0
        %v3623 = vpop.f32.mrb[0].mxu0
        %v3624 = vpop.f32.mrb[0].mxu0
        %3625 = vmatprep.mubr.bf16.mxu0 %v3200
        %3626 = vmatmul.mubr.bf16.gmra.mrb[0].mxu0 %v3199
        %v3627 = vpop.f32.mrb[0].mxu0
        %v3628 = vadd.f32 %v3539, %v3627
        %v3629 = vpop.f32.mrb[0].mxu0
        %v3630 = vpop.f32.mrb[0].mxu0
        %v3631 = vpop.f32.mrb[0].mxu0
        %3632 = vmatprep.mubr.bf16.mxu0 %v3204
        %3633 = vmatmul.mubr.bf16.gmra.mrb[0].mxu0 %v3203
        %v3634 = vpop.f32.mrb[0].mxu0
        %v3635 = vadd.f32 %v3546, %v3634
        %v3636 = vpop.f32.mrb[0].mxu0
        %v3637 = vpop.f32.mrb[0].mxu0
        %v3638 = vpop.f32.mrb[0].mxu0
        %3639 = vmatprep.mubr.bf16.mxu0 %v3208
        %3640 = vmatmul.mubr.bf16.gmra.mrb[0].mxu0 %v3207
        %v3641 = vpop.f32.mrb[0].mxu0
        %v3642 = vadd.f32 %v3553, %v3641
        %v3643 = vpop.f32.mrb[0].mxu0
        %v3644 = vpop.f32.mrb[0].mxu0
        %v3645 = vpop.f32.mrb[0].mxu0
        %3646 = vmatprep.mubr.bf16.mxu0 %v3212
        %3647 = vmatmul.mubr.bf16.gmra.mrb[0].mxu0 %v3211
        %v3648 = vpop.f32.mrb[0].mxu0
        %v3649 = vadd.f32 %v3560, %v3648
        %v3650 = vpop.f32.mrb[0].mxu0
        %v3651 = vpop.f32.mrb[0].mxu0
        %v3652 = vpop.f32.mrb[0].mxu0
        %3653 = vdwg.mxu0
        %v3654 = vadd.f32 %v2141, %v3600
        %v3655 = vadd.f32 %v2143, %v3607
        %v3656 = vadd.f32 %v2145, %v3614
        %v3657 = vadd.f32 %v2147, %v3621
        %v3658 = vadd.f32 %v2149, %v3628
        %v3659 = vadd.f32 %v2151, %v3635
        %v3660 = vadd.f32 %v2153, %v3642
        %v3661 = vadd.f32 %v2155, %v3649
        %v3662 = vld [vmem:[%s9] sm:$0x1]
        %v3663 = vld [vmem:[%s10] sm:$0x1]
        %3664 = vadd.xlane.f32.xlu0 %v3654
        %v3665 = vpop.xlane.xlu0 %3664
        %3666 = vadd.xlane.f32.xlu0 %v3655
        %v3667 = vpop.xlane.xlu0 %3666
        %3668 = vadd.xlane.f32.xlu0 %v3656
        %v3669 = vpop.xlane.xlu0 %3668
        %3670 = vadd.xlane.f32.xlu0 %v3657
        %v3671 = vpop.xlane.xlu0 %3670
        %3672 = vadd.xlane.f32.xlu0 %v3658
        %v3673 = vpop.xlane.xlu0 %3672
        %3674 = vadd.xlane.f32.xlu0 %v3659
        %v3675 = vpop.xlane.xlu0 %3674
        %3676 = vadd.xlane.f32.xlu0 %v3660
        %v3677 = vpop.xlane.xlu0 %3676
        %3678 = vadd.xlane.f32.xlu0 %v3661
        %v3679 = vpop.xlane.xlu0 %3678
        %v3680 = vmul.f32 %v3665, %v1968
        %v3681 = vmul.f32 %v3667, %v1968
        %v3682 = vmul.f32 %v3669, %v1968
        %v3683 = vmul.f32 %v3671, %v1968
        %v3684 = vmul.f32 %v3673, %v1968
        %v3685 = vmul.f32 %v3675, %v1968
        %v3686 = vmul.f32 %v3677, %v1968
        %v3687 = vmul.f32 %v3679, %v1968
        %v3688 = vsub.f32 %v3654, %v3680
        %v3689 = vsub.f32 %v3655, %v3681
        %v3690 = vsub.f32 %v3656, %v3682
        %v3691 = vsub.f32 %v3657, %v3683
        %v3692 = vsub.f32 %v3658, %v3684
        %v3693 = vsub.f32 %v3659, %v3685
        %v3694 = vsub.f32 %v3660, %v3686
        %v3695 = vsub.f32 %v3661, %v3687
        %v3696 = vmul.f32 %v3688, %v3688
        %v3697 = vmul.f32 %v3689, %v3689
        %v3698 = vmul.f32 %v3690, %v3690
        %v3699 = vmul.f32 %v3691, %v3691
        %v3700 = vmul.f32 %v3692, %v3692
        %v3701 = vmul.f32 %v3693, %v3693
        %v3702 = vmul.f32 %v3694, %v3694
        %v3703 = vmul.f32 %v3695, %v3695
        %3704 = vadd.xlane.f32.xlu0 %v3696
        %v3705 = vpop.xlane.xlu0 %3704
        %3706 = vadd.xlane.f32.xlu0 %v3697
        %v3707 = vpop.xlane.xlu0 %3706
        %3708 = vadd.xlane.f32.xlu0 %v3698
        %v3709 = vpop.xlane.xlu0 %3708
        %3710 = vadd.xlane.f32.xlu0 %v3699
        %v3711 = vpop.xlane.xlu0 %3710
        %3712 = vadd.xlane.f32.xlu0 %v3700
        %v3713 = vpop.xlane.xlu0 %3712
        %3714 = vadd.xlane.f32.xlu0 %v3701
        %v3715 = vpop.xlane.xlu0 %3714
        %3716 = vadd.xlane.f32.xlu0 %v3702
        %v3717 = vpop.xlane.xlu0 %3716
        %3718 = vadd.xlane.f32.xlu0 %v3703
        %v3719 = vpop.xlane.xlu0 %3718
        %v3720 = vmul.f32 %v3705, %v1968
        %v3721 = vmul.f32 %v3707, %v1968
        %v3722 = vmul.f32 %v3709, %v1968
        %v3723 = vmul.f32 %v3711, %v1968
        %v3724 = vmul.f32 %v3713, %v1968
        %v3725 = vmul.f32 %v3715, %v1968
        %v3726 = vmul.f32 %v3717, %v1968
        %v3727 = vmul.f32 %v3719, %v1968
        %v3728 = vadd.f32 %v3720, 1e-12
        %v3729 = vadd.f32 %v3721, 1e-12
        %v3730 = vadd.f32 %v3722, 1e-12
        %v3731 = vadd.f32 %v3723, 1e-12
        %v3732 = vadd.f32 %v3724, 1e-12
        %v3733 = vadd.f32 %v3725, 1e-12
        %v3734 = vadd.f32 %v3726, 1e-12
        %v3735 = vadd.f32 %v3727, 1e-12
        %v3736 = vrsqrt.pop %v3728
        %v3737 = vrsqrt.pop %v3729
        %v3738 = vrsqrt.pop %v3730
        %v3739 = vrsqrt.pop %v3731
        %v3740 = vrsqrt.pop %v3732
        %v3741 = vrsqrt.pop %v3733
        %v3742 = vrsqrt.pop %v3734
        %v3743 = vrsqrt.pop %v3735
        %v3744 = vmul.f32 %v3688, %v3736
        %v3745 = vmul.f32 %v3689, %v3737
        %v3746 = vmul.f32 %v3690, %v3738
        %v3747 = vmul.f32 %v3691, %v3739
        %v3748 = vmul.f32 %v3692, %v3740
        %v3749 = vmul.f32 %v3693, %v3741
        %v3750 = vmul.f32 %v3694, %v3742
        %v3751 = vmul.f32 %v3695, %v3743
        %v3753 = vlaneseq
        %v3754 = vshrl.u32 %v3753, 7
        %v3755 = vsub.s32 0, %v3754
        %v3756 = vrot.slane %v3662, %v3755
        %v3758 = vmul.f32 %v3744, %v3756
        %v3759 = vmul.f32 %v3745, %v3756
        %v3760 = vmul.f32 %v3746, %v3756
        %v3761 = vmul.f32 %v3747, %v3756
        %v3762 = vmul.f32 %v3748, %v3756
        %v3763 = vmul.f32 %v3749, %v3756
        %v3764 = vmul.f32 %v3750, %v3756
        %v3765 = vmul.f32 %v3751, %v3756
        %v3767 = vlaneseq
        %v3768 = vshrl.u32 %v3767, 7
        %v3769 = vsub.s32 0, %v3768
        %v3770 = vrot.slane %v3663, %v3769
        %v3772 = vadd.f32 %v3758, %v3770
        %v3773 = vadd.f32 %v3759, %v3770
        %v3774 = vadd.f32 %v3760, %v3770
        %v3775 = vadd.f32 %v3761, %v3770
        %v3776 = vadd.f32 %v3762, %v3770
        %v3777 = vadd.f32 %v3763, %v3770
        %v3778 = vadd.f32 %v3764, %v3770
        %v3779 = vadd.f32 %v3765, %v3770
        %v3788 = vrot.slane %v3773, 7
        %vm3789 = vcmask 1041409
        %v3790 = vsel %vm3789, %v3788, %v3772
        %v3791 = vrot.slane %v3774, 6
        %vm3792 = vcmask 1042434
        %v3793 = vsel %vm3792, %v3791, %v3790
        %v3794 = vrot.slane %v3775, 5
        %vm3795 = vcmask 1043459
        %v3796 = vsel %vm3795, %v3794, %v3793
        %v3797 = vrot.slane %v3776, 4
        %vm3798 = vcmask 1044484
        %v3799 = vsel %vm3798, %v3797, %v3796
        %v3800 = vrot.slane %v3777, 3
        %vm3801 = vcmask 1045509
        %v3802 = vsel %vm3801, %v3800, %v3799
        %v3803 = vrot.slane %v3778, 2
        %vm3804 = vcmask 1046534
        %v3805 = vsel %vm3804, %v3803, %v3802
        %v3806 = vrot.slane %v3779, 1
        %vm3807 = vcmask 1047559
        %v3808 = vsel %vm3807, %v3806, %v3805
        %3810 = vst [vmem:[%s463] sm:$0xff] %v3808
        %s3811 = sand.u32 %s274, 1
        %s3812 = scalar_lea.sflag [#allocation4], %s3811
        %s3813 = sand.u32 %s274, 1
        %s3814 = smul.addr %s3813, 8
        %s3815 = scalar_lea.vmem [#allocation11], %s3814
        // Predicated region
        $region85: #{tpu_custom_call.1} parent=63 // pred_check
          %p3816 = pneg %p284
        $region86: #{tpu_custom_call.1} parent=63 // pred_check_branch
          %3818 = sbr.rel (%p3816) target = $region88
        $region87: #{tpu_custom_call.1} parent=63 // pred_region
          %s3820 = ssub.s32 128, 128
          %3821 = vsyncadd %s3812, %s3820
          %s3822 = smul.addr %s30, 128
          %s3823 = scalar_lea.hbm %s11, %s3822
          %s3825 = sshll.u32 %s3815, 4
          %s3826 = int_to_ptr.vmem [resolvable:$true] %s3825
          %3828 = dma.vmem_to_hbm [thread:$0]  %s3826, 128, %s3823, %s3812
        $region88: #{tpu_custom_call.1} parent=63 // pred_fallthru
          _
      $region64: #{tpu_custom_call.1} parent=5 // pred_fallthru
        _
      %p3829 = scmp.le.s32.totalorder 2, %s25
      // Predicated region
      $region89: #{tpu_custom_call.1} parent=5 // pred_check
        %p3830 = pneg %p3829
      $region90: #{tpu_custom_call.1} parent=5 // pred_check_branch
        %3832 = sbr.rel (%p3830) target = $region92
      $region91: #{tpu_custom_call.1} parent=5 // pred_region
        %s3833 = ssub.s32 %s25, 2
        // Predicated region
        $region93: #{tpu_custom_call.1} parent=91 // pred_check
          %p3834 = pneg %p290
        $region94: #{tpu_custom_call.1} parent=91 // pred_check_branch
          %3836 = sbr.rel (%p3834) target = $region96
        $region95: #{tpu_custom_call.1} parent=91 // pred_region
          %s3837 = sand.u32 %s275, 1
          %s3838 = scalar_lea.sflag [#allocation4], %s3837
          %s3839 = sand.u32 %s275, 1
          %s3840 = smul.addr %s3839, 8
          %s3841 = scalar_lea.vmem [#allocation11], %s3840
          %3842 = dma.done %s3838, 128
        $region96: #{tpu_custom_call.1} parent=91 // pred_fallthru
          _
      $region92: #{tpu_custom_call.1} parent=5 // pred_fallthru
        _
    $region6: #{tpu_custom_call.1} parent=1 // loop_footer
      %s29 = sadd.s32 1, %s25
    $region7: #{tpu_custom_call.1} parent=1 // loop_footer_branch
      %24 = sbr.rel target = $region3
    $region8: #{tpu_custom_call.1} parent=1 // loop_exit
      _
    %3843 = vsyncpa [#allocation3], 1
    %s3844 = scalar_lea.sflag [#allocation3], 1
    %3845 = vsyncpa %s3844, 1
    %3846 = vsyncpa [#allocation6], 1
    %3847 = vsyncpa [#allocation9], 1
    %3848 = vsyncpa [#allocation4], 1
    %s3849 = scalar_lea.sflag [#allocation4], 1
    %3850 = vsyncpa %s3849, 1

</llo_original>
